<compile_context>
chip_gen: v7x
topology: tpu7x:2x2x1
jax: 0.10.0
libtpu: 0.0.40
codegen_flags: <defaults>
</compile_context>

<pallas_src>
import numpy as np
import jax
import jax.numpy as jnp
from jax.experimental import pallas as pl
from jax.experimental.pallas import tpu as pltpu

# ----------------------------- config (matches the module) ----------------------
B = 2             # batch
SEQ_LEN = 16      # configs.seq_len
PRED_LEN = 8      # configs.pred_len
NUM_EXPERTS = 4   # configs.num_experts
ENC_IN = 4        # configs.enc_in  (last channel = glucose)
TIME_FEAT = 4     # configs.freq endswith 'h' -> 4 time features
KERNEL_SIZE = 25  # series_decomp moving-average window
NUM_COV_COLS = 3  # numerical covariate columns for the tabular encoder
COV_CH = 32       # ExampleTransformer channels / out_channels
COV_HEADS = 8
COV_LAYERS = 2
COV_FFN = 64

WEAR_LEN = (ENC_IN - 1) * SEQ_LEN            # 48
DATA_COLS = SEQ_LEN + WEAR_LEN + TIME_FEAT   # 68 lanes of "data" per sample

VMEM_SPEC = pl.BlockSpec(memory_space=pltpu.MemorySpace.VMEM)


def _layernorm(v, g, b, eps=1e-5):
    mu = jnp.mean(v, axis=-1, keepdims=True)
    var = jnp.mean((v - mu) ** 2, axis=-1, keepdims=True)
    return (v - mu) * jax.lax.rsqrt(var + eps) * g + b


# ------------------------- parameter slab layout (static) -----------------------
def _round_up(n, m):
    return ((n + m - 1) // m) * m


def _slab_spec(batch):
    """Ordered (name, (rows, cols)) chunks packed into one [R, 128] slab."""
    N = batch * NUM_COV_COLS
    D, FF, H = COV_CH, COV_FFN, COV_HEADS
    E, P, L = NUM_EXPERTS, PRED_LEN, SEQ_LEN
    spec = [
        ('head_mask', (H * N, D)),      # 0/1 head column selector
        ('attn_bias', (H * N, N)),      # block-diagonal sample mask (additive)
        ('pool_mean', (batch, N)),      # mean over covariate columns
        ('expand', (E, P * E)),         # MoE gate broadcast
        ('pool', (P * E, P)),           # MoE expert-sum
        ('w_glu', (L, P * E)),          # decomposition + edge-pad folded in
        ('b_glu', (1, P * E)),
        ('cov_wenc_t', (N, D)),         # per-column linear encoder (tiled to B)
        ('cov_benc_t', (N, D)),
    ]
    for l in range(COV_LAYERS):
        spec += [
            (f'ln1g_{l}', (1, D)), (f'ln1b_{l}', (1, D)),
            (f'wqkv_{l}', (D, 3 * D)), (f'bqkv_{l}', (1, 3 * D)),
            (f'wo_{l}', (D, D)), (f'bo_{l}', (1, D)),
            (f'ln2g_{l}', (1, D)), (f'ln2b_{l}', (1, D)),
            (f'wf1_{l}', (D, FF)), (f'bf1_{l}', (1, FF)),
            (f'wf2_{l}', (FF, D)), (f'bf2_{l}', (1, D)),
        ]
    spec += [
        ('cov_wd', (D, D)), ('cov_bd', (1, D)),
        ('ww1', (WEAR_LEN, 32)), ('bw1', (1, 32)),
        ('lng', (1, 32)), ('lnb', (1, 32)),
        ('ww2', (32, 32)), ('bw2', (1, 32)),
        ('wm1', (TIME_FEAT + 32 + D, E)),   # [wm_mark; wm_wear; wm_cov] fused
        ('bm1', (1, E)),
        ('wm2', (E, E)), ('bm2', (1, E)),
    ]
    return spec


def _build_layout(spec):
    """Dense 2-D shelf packing of all chunks into one [rows, 128] slab.

    Returns {name: (row_off, col_off, rows, cols)}, total_rows.
    Tall chunks are placed first; shorter / one-row chunks share shelves by
    packing along lanes, so biases no longer waste whole 8-row tiles.
    """
    order = sorted(range(len(spec)),
                   key=lambda i: (-spec[i][1][0], -spec[i][1][1], i))
    shelves = []            # [row_off, height, used_cols]
    layout = {}
    cursor = 0
    for i in order:
        name, (r, c) = spec[i]
        assert c <= 128
        placed = False
        for sh in shelves:
            if sh[1] >= r and 128 - sh[2] >= c:
                layout[name] = (sh[0], sh[2], r, c)
                sh[2] = _round_up(sh[2] + c, 8)
                placed = True
                break
        if not placed:
            layout[name] = (cursor, 0, r, c)
            shelves.append([cursor, r, _round_up(c, 8)])
            cursor += r
    return layout, _round_up(cursor, 16)   # bf16 sublane tile = 16


def pack_params(params, batch):
    """Host-side, one-time packing of all params + derived constants.

    All folds are done in f32; only the final slab is cast to bf16.
    """
    spec = _slab_spec(batch)
    layout, total = _build_layout(spec)
    slab = np.zeros((total, 128), np.float32)
    p = {k: np.asarray(v, np.float32) for k, v in params.items()}

    N = batch * NUM_COV_COLS
    H, D, hd = COV_HEADS, COV_CH, COV_CH // COV_HEADS
    E, P, L, K = NUM_EXPERTS, PRED_LEN, SEQ_LEN, KERNEL_SIZE
    Lp = L + K - 1
    half = (K - 1) // 2

    vals = {}
    # --- attention constants (head selection, block-diagonal sample mask) ---
    hm = np.zeros((H * N, D), np.float32)
    for h in range(H):
        hm[h * N:(h + 1) * N, h * hd:(h + 1) * hd] = 1.0
    vals['head_mask'] = hm
    same = (np.arange(N)[:, None] // NUM_COV_COLS
            == np.arange(N)[None, :] // NUM_COV_COLS)
    vals['attn_bias'] = np.tile(np.where(same, 0.0, -1e9).astype(np.float32),
                                (H, 1))
    pm = np.zeros((batch, N), np.float32)
    for b in range(batch):
        pm[b, b * NUM_COV_COLS:(b + 1) * NUM_COV_COLS] = 1.0 / NUM_COV_COLS
    vals['pool_mean'] = pm
    # --- MoE mixture constants ---
    je = np.arange(P * E)
    vals['expand'] = (je[None, :] % E == np.arange(E)[:, None]).astype(np.float32)
    vals['pool'] = (je[:, None] // E == np.arange(P)[None, :]).astype(np.float32)
    # --- fold series_decomp (box filter) AND edge-replication pad into w_glu ---
    A = np.zeros((Lp, L), np.float32)            # trend = x_pad @ A
    for j in range(L):
        A[j:j + K, j] = 1.0 / K
    Epad = np.zeros((L, Lp), np.float32)         # x_pad = x_g @ Epad
    src = np.clip(np.arange(Lp) - half, 0, L - 1)
    Epad[src, np.arange(Lp)] = 1.0
    vals['w_glu'] = p['ws'] + (Epad @ A) @ (p['wt'] - p['ws'])   # [L, P*E]
    vals['b_glu'] = p['bs'] + p['bt']
    # --- covariate encoder ---
    vals['cov_wenc_t'] = np.tile(p['cov_wenc'], (batch, 1))
    vals['cov_benc_t'] = np.tile(p['cov_benc'], (batch, 1))
    for l in range(COV_LAYERS):
        vals[f'ln1g_{l}'] = p['cov_ln1g'][l]
        vals[f'ln1b_{l}'] = p['cov_ln1b'][l]
        vals[f'wqkv_{l}'] = np.concatenate(
            [p['cov_wq'][l], p['cov_wk'][l], p['cov_wv'][l]], axis=1)
        vals[f'bqkv_{l}'] = np.concatenate(
            [p['cov_bq'][l], p['cov_bk'][l], p['cov_bv'][l]], axis=1)
        vals[f'wo_{l}'] = p['cov_wo'][l]
        vals[f'bo_{l}'] = p['cov_bo'][l]
        vals[f'ln2g_{l}'] = p['cov_ln2g'][l]
        vals[f'ln2b_{l}'] = p['cov_ln2b'][l]
        vals[f'wf1_{l}'] = p['cov_wf1'][l]
        vals[f'bf1_{l}'] = p['cov_bf1'][l]
        vals[f'wf2_{l}'] = p['cov_wf2'][l]
        vals[f'bf2_{l}'] = p['cov_bf2'][l]
    vals['cov_wd'] = p['cov_wd']
    vals['cov_bd'] = p['cov_bd']
    # --- wearable branch + fused gating head ---
    for name in ('ww1', 'bw1', 'lng', 'lnb', 'ww2', 'bw2', 'bm1', 'wm2', 'bm2'):
        vals[name] = p[name]
    vals['wm1'] = np.concatenate([p['wm_mark'], p['wm_wear'], p['wm_cov']],
                                 axis=0)                          # [68, E]

    for name, (r, c) in spec:
        r0, c0, _, _ = layout[name]
        v = vals[name]
        assert v.shape == (r, c), (name, v.shape, (r, c))
        slab[r0:r0 + r, c0:c0 + c] = v
    # bf16 halves the (un-overlapped) parameter DMA; kernel math stays f32.
    return jnp.asarray(slab).astype(jnp.bfloat16)


# ----------------------------------- fused kernel --------------------------------
def _make_kernel(layout, batch):
    D = COV_CH
    H = COV_HEADS
    N = batch * NUM_COV_COLS
    scale = 1.0 / float(np.sqrt(D // H))
    L, WL, F = SEQ_LEN, WEAR_LEN, TIME_FEAT

    def kernel(inp_ref, slab_ref, out_ref):
        def ld(name):                       # bf16 slab -> f32 value
            r0, c0, r, c = layout[name]
            return slab_ref[r0:r0 + r, c0:c0 + c].astype(jnp.float32)

        # ---------------- covariate encoder (flat [B*NC, D] layout) ------------
        cov = inp_ref[batch:batch + N, 0:1]                               # [N, 1]
        x = cov * ld('cov_wenc_t') + ld('cov_benc_t')                     # [N, D]
        head_mask = ld('head_mask')                                       # [H*N,D]
        attn_bias = ld('attn_bias')                                       # [H*N,N]
        for l in range(COV_LAYERS):
            h = _layernorm(x, ld(f'ln1g_{l}'), ld(f'ln1b_{l}'))
            qkv = jnp.dot(h, ld(f'wqkv_{l}'),
                          preferred_element_type=jnp.float32) + ld(f'bqkv_{l}')
            q = qkv[:, 0:D]
            k = qkv[:, D:2 * D]
            v = qkv[:, 2 * D:3 * D]
            # per-head replication via pure data movement (no MXU "copy" dot)
            q_heads = jnp.concatenate([q] * H, axis=0) * head_mask        # [H*N,D]
            s = jax.lax.dot_general(q_heads, k, (((1,), (1,)), ((), ())),
                                    preferred_element_type=jnp.float32)
            s = s * scale + attn_bias                                     # [H*N,N]
            # explicit softmax; divide on the EUP via approx reciprocal
            s = jnp.exp(s - jnp.max(s, axis=-1, keepdims=True))
            pa = s * pl.reciprocal(jnp.sum(s, axis=-1, keepdims=True),
                                   approx=True)
            ctx = jnp.dot(pa, v,
                          preferred_element_type=jnp.float32) * head_mask  # [H*N,D]
            # combine heads: VPU sum of the 8 masked [N, D] blocks (no MXU dot)
            ctx_sum = ctx[0:N, :]
            for hh in range(1, H):
                ctx_sum = ctx_sum + ctx[hh * N:(hh + 1) * N, :]
            x = x + jnp.dot(ctx_sum, ld(f'wo_{l}'),
                            preferred_element_type=jnp.float32) + ld(f'bo_{l}')
            h2 = _layernorm(x, ld(f'ln2g_{l}'), ld(f'ln2b_{l}'))
            ff = jax.nn.gelu(jnp.dot(h2, ld(f'wf1_{l}'),
                                     preferred_element_type=jnp.float32)
                             + ld(f'bf1_{l}'))
            ff = jnp.dot(ff, ld(f'wf2_{l}'),
                         preferred_element_type=jnp.float32) + ld(f'bf2_{l}')
            x = x + ff
        pooled = jnp.dot(ld('pool_mean'), x,
                         preferred_element_type=jnp.float32)               # [B, D]
        cov_emb = jnp.dot(pooled, ld('cov_wd'),
                          preferred_element_type=jnp.float32) + ld('cov_bd')

        # ---------------- DLinear (decomp + edge-pad folded) + MoE gating ------
        xg = inp_ref[0:batch, 0:L]                                         # [B, L]
        xw = inp_ref[0:batch, L:L + WL]                                    # [B, WL]
        xm = inp_ref[0:batch, L + WL:L + WL + F]                           # [B, F]
        x_glu = jnp.dot(xg, ld('w_glu'),
                        preferred_element_type=jnp.float32) + ld('b_glu')  # [B,P*E]
        hw = jnp.maximum(jnp.dot(xw, ld('ww1'),
                                 preferred_element_type=jnp.float32)
                         + ld('bw1'), 0.0)
        hw = _layernorm(hw, ld('lng'), ld('lnb'))
        wear = jnp.dot(hw, ld('ww2'),
                       preferred_element_type=jnp.float32) + ld('bw2')     # [B, 32]
        # Linear_Temporal on concat([x_mark[:,0], wearable, cov_emb]) with the
        # three projections fused host-side into one [68, E] matrix.
        feat = jnp.concatenate([xm, wear, cov_emb], axis=1)                # [B, 68]
        g = jnp.maximum(jnp.dot(feat, ld('wm1'),
                                preferred_element_type=jnp.float32)
                        + ld('bm1'), 0.0)
        g = jnp.dot(g, ld('wm2'), preferred_element_type=jnp.float32) + ld('bm2')
        # HeadDropout is identity at inference time; explicit softmax + EUP div.
        g = jnp.exp(g - jnp.max(g, axis=-1, keepdims=True))
        g = g * pl.reciprocal(jnp.sum(g, axis=-1, keepdims=True), approx=True)
        g_full = jnp.dot(g, ld('expand'),
                         preferred_element_type=jnp.float32)               # [B,P*E]
        out_ref[...] = jnp.dot(x_glu * g_full, ld('pool'),
                               preferred_element_type=jnp.float32)         # [B, P]

    return kernel


# --------------------------------- wrapper (Pallas) -------------------------------
@jax.jit
def model_forward(x_enc, x_mark_enc, x_dec, x_mark_dec, covariates, param_slab):
    del x_dec, x_mark_dec                      # unused by the reference forward
    B_, L, C = x_enc.shape
    N = B_ * NUM_COV_COLS
    layout, _ = _build_layout(_slab_spec(B_))

    # one merged [B + B*NC, 128] input tile: data rows + covariate rows
    x_g = x_enc[:, :, -1]                                                 # [B, L]
    x_wear = x_enc[:, :, :-1].reshape(B_, L * (C - 1))                    # [B, 48]
    x_mark0 = x_mark_enc[:, 0]                                            # [B, F]
    data = jnp.concatenate([x_g, x_wear, x_mark0], axis=1).astype(jnp.float32)
    data = jnp.pad(data, ((0, 0), (0, 128 - data.shape[1])))              # [B, 128]
    covr = jnp.pad(covariates.reshape(N, 1).astype(jnp.float32),
                   ((0, 0), (0, 127)))                                    # [N, 128]
    inp = jnp.concatenate([data, covr], axis=0)                           # [B+N,128]

    slab_bytes = int(np.prod(param_slab.shape)) * param_slab.dtype.itemsize
    cost = pl.CostEstimate(
        flops=350_000,
        transcendentals=2_000,
        bytes_accessed=int(slab_bytes + inp.size * 4 + B_ * PRED_LEN * 4),
    )

    out = pl.pallas_call(
        _make_kernel(layout, B_),
        out_shape=jax.ShapeDtypeStruct((B_, PRED_LEN), jnp.float32),
        in_specs=[VMEM_SPEC, VMEM_SPEC],
        out_specs=VMEM_SPEC,
        cost_estimate=cost,
    )(inp, param_slab)

    # == .reshape(-1, 1, pred_len).permute(0, 2, 1)
    return out[:, :, None]                                                # [B, P, 1]


# ------------------------------ pure-JAX naive reference --------------------------
def _cov_forward_ref(cov, p):
    x = cov[:, :, None] * p['cov_wenc'][None] + p['cov_benc'][None]       # [B,NC,D]
    Bc, NC, D = x.shape
    hd = D // COV_HEADS
    scale = 1.0 / np.sqrt(hd)
    for l in range(COV_LAYERS):
        h = _layernorm(x, p['cov_ln1g'][l], p['cov_ln1b'][l])
        q = jnp.einsum('bnd,de->bne', h, p['cov_wq'][l]) + p['cov_bq'][l]
        k = jnp.einsum('bnd,de->bne', h, p['cov_wk'][l]) + p['cov_bk'][l]
        v = jnp.einsum('bnd,de->bne', h, p['cov_wv'][l]) + p['cov_bv'][l]
        qh = q.reshape(Bc, NC, COV_HEADS, hd)
        kh = k.reshape(Bc, NC, COV_HEADS, hd)
        vh = v.reshape(Bc, NC, COV_HEADS, hd)
        s = jnp.einsum('bnhd,bmhd->bhnm', qh, kh) * scale
        a = jax.nn.softmax(s, axis=-1)
        ctx = jnp.einsum('bhnm,bmhd->bnhd', a, vh).reshape(Bc, NC, D)
        x = x + jnp.einsum('bnd,de->bne', ctx, p['cov_wo'][l]) + p['cov_bo'][l]
        h2 = _layernorm(x, p['cov_ln2g'][l], p['cov_ln2b'][l])
        ff = jax.nn.gelu(jnp.einsum('bnd,df->bnf', h2, p['cov_wf1'][l])
                         + p['cov_bf1'][l])
        ff = jnp.einsum('bnf,fd->bnd', ff, p['cov_wf2'][l]) + p['cov_bf2'][l]
        x = x + ff
    pooled = x.mean(axis=1)
    return pooled @ p['cov_wd'] + p['cov_bd']


def model_forward_ref(x_enc, x_mark_enc, covariates, p):
    B_, L, C = x_enc.shape
    cov_emb = _cov_forward_ref(covariates, p)
    xg = x_enc[:, :, -1]
    half = (KERNEL_SIZE - 1) // 2
    xgpad = jnp.concatenate(
        [jnp.repeat(xg[:, :1], half, axis=1), xg,
         jnp.repeat(xg[:, -1:], half, axis=1)], axis=1)
    trend = jnp.stack([xgpad[:, j:j + KERNEL_SIZE].mean(axis=1)
                       for j in range(L)], axis=1)
    seasonal = xg - trend
    x_glu = seasonal @ p['ws'] + p['bs'] + trend @ p['wt'] + p['bt']
    xw = x_enc[:, :, :-1].reshape(B_, L * (C - 1))
    hw = jnp.maximum(xw @ p['ww1'] + p['bw1'], 0.0)
    hw = _layernorm(hw, p['lng'], p['lnb'])
    wear = hw @ p['ww2'] + p['bw2']
    xcat = jnp.concatenate([x_mark_enc[:, 0], wear, cov_emb], axis=1)
    wm1 = jnp.concatenate([p['wm_mark'], p['wm_wear'], p['wm_cov']], axis=0)
    g = jnp.maximum(xcat @ wm1 + p['bm1'], 0.0)
    g = g @ p['wm2'] + p['bm2']
    g = jax.nn.softmax(g, axis=-1)
    x_raw = x_glu.reshape(B_, PRED_LEN, NUM_EXPERTS)
    out = jnp.einsum('bpe,be->bp', x_raw, g)
    return out[:, :, None]


# ------------------------------------ parameters ----------------------------------
def init_params(key):
    keys = jax.random.split(key, 64)
    ki = iter(keys)

    def lin(shape, fan_in):
        lim = 1.0 / np.sqrt(fan_in)
        return jax.random.uniform(next(ki), shape, jnp.float32, -lim, lim)

    D, FF, Lyr, NC = COV_CH, COV_FFN, COV_LAYERS, NUM_COV_COLS
    L, P, E, C, F = SEQ_LEN, PRED_LEN, NUM_EXPERTS, ENC_IN, TIME_FEAT
    p = {}
    # ---- ExampleTransformer-style covariate encoder ----
    p['cov_wenc'] = lin((NC, D), 1)
    p['cov_benc'] = lin((NC, D), 1)
    p['cov_ln1g'] = jnp.ones((Lyr, 1, D), jnp.float32)
    p['cov_ln1b'] = jnp.zeros((Lyr, 1, D), jnp.float32)
    for name in ('wq', 'wk', 'wv', 'wo'):
        p['cov_' + name] = lin((Lyr, D, D), D)
        p['cov_b' + name[1]] = lin((Lyr, 1, D), D)
    p['cov_ln2g'] = jnp.ones((Lyr, 1, D), jnp.float32)
    p['cov_ln2b'] = jnp.zeros((Lyr, 1, D), jnp.float32)
    p['cov_wf1'] = lin((Lyr, D, FF), D)
    p['cov_bf1'] = lin((Lyr, 1, FF), D)
    p['cov_wf2'] = lin((Lyr, FF, D), FF)
    p['cov_bf2'] = lin((Lyr, 1, D), FF)
    p['cov_wd'] = lin((D, D), D)
    p['cov_bd'] = lin((1, D), D)
    # ---- DLinear / MoE head ----
    p['ws'] = lin((L, P * E), L)
    p['bs'] = lin((1, P * E), L)
    p['wt'] = lin((L, P * E), L)
    p['bt'] = lin((1, P * E), L)
    wl = (C - 1) * L
    p['ww1'] = lin((wl, 32), wl)
    p['bw1'] = lin((1, 32), wl)
    p['lng'] = jnp.ones((1, 32), jnp.float32)
    p['lnb'] = jnp.zeros((1, 32), jnp.float32)
    p['ww2'] = lin((32, 32), 32)
    p['bw2'] = lin((1, 32), 32)
    fan = F + 32 + 32
    p['wm_mark'] = lin((F, E), fan)
    p['wm_wear'] = lin((32, E), fan)
    p['wm_cov'] = lin((32, E), fan)
    p['bm1'] = lin((1, E), fan)
    p['wm2'] = lin((E, E), E)
    p['bm2'] = lin((1, E), E)
    return p


# --------------------------------------- main -------------------------------------
if __name__ == "__main__":
    key = jax.random.PRNGKey(0)
    kx, km, kc, kp = jax.random.split(key, 4)
    x_enc = jax.random.normal(kx, (B, SEQ_LEN, ENC_IN), jnp.float32)
    x_mark_enc = jax.random.normal(km, (B, SEQ_LEN, TIME_FEAT), jnp.float32)
    x_dec = jnp.zeros((B, PRED_LEN, ENC_IN), jnp.float32)          # unused
    x_mark_dec = jnp.zeros((B, PRED_LEN, TIME_FEAT), jnp.float32)  # unused
    covariates = jax.random.normal(kc, (B, NUM_COV_COLS), jnp.float32)
    params = init_params(kp)

    param_slab = pack_params(params, B)     # one-time host-side packing (bf16)

    out = model_forward(x_enc, x_mark_enc, x_dec, x_mark_dec,
                        covariates, param_slab)
    out = jax.block_until_ready(out)
    assert out.shape == (B, PRED_LEN, 1), out.shape
    assert bool(jnp.all(jnp.isfinite(out)))

    ref = model_forward_ref(x_enc, x_mark_enc, covariates, params)
    err = float(jnp.max(jnp.abs(out - ref)))
    # 2e-2 tolerance: parameters are stored in bf16 and the softmax divides use
    # the EUP approx reciprocal (both deliberate perf trade-offs); the f32
    # reference uses exact weights / exact division.
    assert err < 2e-2, f"kernel/reference mismatch: max abs err = {err}"

    print("KERNEL_OK")
</pallas_src>

<mosaic_0001>
module attributes {stable_mosaic.version = 11 : i64} {
  func.func @kernel(%arg0: memref<8x128xf32, #tpu.memory_space<vmem>>, %arg1: memref<240x128xbf16, #tpu.memory_space<vmem>>, %arg2: memref<2x8xf32, #tpu.memory_space<vmem>>) attributes {dimension_semantics = [], scalar_prefetch = 0 : i64, scratch_operands = 0 : i64, tpu.core_type = #tpu.core_type<tc>} {
    %c2 = arith.constant 2 : index
    %c0 = arith.constant 0 : index
    %0 = vector.load %arg0[%c2, %c0] : memref<8x128xf32, #tpu.memory_space<vmem>>, vector<6x1xf32>
    %c212 = arith.constant 212 : index
    %c0_0 = arith.constant 0 : index
    %1 = vector.load %arg1[%c212, %c0_0] : memref<240x128xbf16, #tpu.memory_space<vmem>>, vector<6x32xbf16>
    %2 = arith.extf %1 : vector<6x32xbf16> to vector<6x32xf32>
    %3 = vector.broadcast %0 : vector<6x1xf32> to vector<6x32xf32>
    %4 = arith.mulf %3, %2 : vector<6x32xf32>
    %c212_1 = arith.constant 212 : index
    %c32 = arith.constant 32 : index
    %5 = vector.load %arg1[%c212_1, %c32] : memref<240x128xbf16, #tpu.memory_space<vmem>>, vector<6x32xbf16>
    %6 = arith.extf %5 : vector<6x32xbf16> to vector<6x32xf32>
    %7 = arith.addf %4, %6 : vector<6x32xf32>
    %c0_2 = arith.constant 0 : index
    %c72 = arith.constant 72 : index
    %8 = vector.load %arg1[%c0_2, %c72] : memref<240x128xbf16, #tpu.memory_space<vmem>>, vector<48x32xbf16>
    %9 = arith.extf %8 : vector<48x32xbf16> to vector<48x32xf32>
    %c0_3 = arith.constant 0 : index
    %c104 = arith.constant 104 : index
    %10 = vector.load %arg1[%c0_3, %c104] : memref<240x128xbf16, #tpu.memory_space<vmem>>, vector<48x6xbf16>
    %11 = arith.extf %10 : vector<48x6xbf16> to vector<48x6xf32>
    %c219 = arith.constant 219 : index
    %c96 = arith.constant 96 : index
    %12 = vector.load %arg1[%c219, %c96] : memref<240x128xbf16, #tpu.memory_space<vmem>>, vector<1x32xbf16>
    %13 = arith.extf %12 : vector<1x32xbf16> to vector<1x32xf32>
    %c221 = arith.constant 221 : index
    %c0_4 = arith.constant 0 : index
    %14 = vector.load %arg1[%c221, %c0_4] : memref<240x128xbf16, #tpu.memory_space<vmem>>, vector<1x32xbf16>
    %15 = arith.extf %14 : vector<1x32xbf16> to vector<1x32xf32>
    %cst = arith.constant dense<0.000000e+00> : vector<6xf32>
    %16 = vector.multi_reduction <add>, %7, %cst [1] : vector<6x32xf32> to vector<6xf32>
    %17 = vector.shape_cast %16 : vector<6xf32> to vector<6x1xf32>
    %cst_5 = arith.constant 3.200000e+01 : f32
    %18 = vector.broadcast %cst_5 : f32 to vector<6x1xf32>
    %19 = arith.divf %17, %18 : vector<6x1xf32>
    %20 = vector.broadcast %19 : vector<6x1xf32> to vector<6x32xf32>
    %21 = arith.subf %7, %20 : vector<6x32xf32>
    %22 = arith.mulf %21, %21 : vector<6x32xf32>
    %cst_6 = arith.constant dense<0.000000e+00> : vector<6xf32>
    %23 = vector.multi_reduction <add>, %22, %cst_6 [1] : vector<6x32xf32> to vector<6xf32>
    %24 = vector.shape_cast %23 : vector<6xf32> to vector<6x1xf32>
    %cst_7 = arith.constant 3.200000e+01 : f32
    %25 = vector.broadcast %cst_7 : f32 to vector<6x1xf32>
    %26 = arith.divf %24, %25 : vector<6x1xf32>
    %27 = vector.broadcast %19 : vector<6x1xf32> to vector<6x32xf32>
    %28 = arith.subf %7, %27 : vector<6x32xf32>
    %cst_8 = arith.constant 9.99999974E-6 : f32
    %29 = vector.broadcast %cst_8 : f32 to vector<6x1xf32>
    %30 = arith.addf %26, %29 : vector<6x1xf32>
    %31 = math.rsqrt %30 : vector<6x1xf32>
    %32 = vector.broadcast %31 : vector<6x1xf32> to vector<6x32xf32>
    %33 = arith.mulf %28, %32 : vector<6x32xf32>
    %34 = vector.broadcast %13 : vector<1x32xf32> to vector<6x32xf32>
    %35 = arith.mulf %33, %34 : vector<6x32xf32>
    %36 = vector.broadcast %15 : vector<1x32xf32> to vector<6x32xf32>
    %37 = arith.addf %35, %36 : vector<6x32xf32>
    %c68 = arith.constant 68 : index
    %c32_9 = arith.constant 32 : index
    %38 = vector.load %arg1[%c68, %c32_9] : memref<240x128xbf16, #tpu.memory_space<vmem>>, vector<32x96xbf16>
    %39 = arith.extf %38 : vector<32x96xbf16> to vector<32x96xf32>
    %cst_10 = arith.constant dense<0.000000e+00> : vector<6x96xf32>
    %40 = tpu.matmul %37, %39, %cst_10 {dimension_numbers = #tpu.dot_dimension_numbers<[1], [0], [0], [1], [0, 0, 1, 1], [], []>} : vector<6x32xf32>, vector<32x96xf32>, vector<6x96xf32> -> vector<6x96xf32>
    %c218 = arith.constant 218 : index
    %c0_11 = arith.constant 0 : index
    %41 = vector.load %arg1[%c218, %c0_11] : memref<240x128xbf16, #tpu.memory_space<vmem>>, vector<1x96xbf16>
    %42 = arith.extf %41 : vector<1x96xbf16> to vector<1x96xf32>
    %43 = vector.broadcast %42 : vector<1x96xf32> to vector<6x96xf32>
    %44 = arith.addf %40, %43 : vector<6x96xf32>
    %45 = vector.extract_strided_slice %44 {offsets = [0, 0], sizes = [6, 32], strides = [1, 1]} : vector<6x96xf32> to vector<6x32xf32>
    %46 = vector.extract_strided_slice %44 {offsets = [0, 32], sizes = [6, 32], strides = [1, 1]} : vector<6x96xf32> to vector<6x32xf32>
    %47 = vector.extract_strided_slice %44 {offsets = [0, 64], sizes = [6, 32], strides = [1, 1]} : vector<6x96xf32> to vector<6x32xf32>
    %48 = tpu.concatenate %45, %45, %45, %45, %45, %45, %45, %45 in 0 : vector<6x32xf32>, vector<6x32xf32>, vector<6x32xf32>, vector<6x32xf32>, vector<6x32xf32>, vector<6x32xf32>, vector<6x32xf32>, vector<6x32xf32> -> vector<48x32xf32>
    %49 = arith.mulf %48, %9 : vector<48x32xf32>
    %cst_12 = arith.constant dense<0.000000e+00> : vector<48x6xf32>
    %50 = tpu.matmul %49, %46, %cst_12 {dimension_numbers = #tpu.dot_dimension_numbers<[1], [1], [0], [0], [0, 0, 1, 0], [], []>} : vector<48x32xf32>, vector<6x32xf32>, vector<48x6xf32> -> vector<48x6xf32>
    %cst_13 = arith.constant 5.000000e-01 : f32
    %51 = vector.broadcast %cst_13 : f32 to vector<48x6xf32>
    %52 = arith.mulf %50, %51 : vector<48x6xf32>
    %53 = arith.addf %52, %11 : vector<48x6xf32>
    %cst_14 = arith.constant dense<0xFF800000> : vector<48xf32>
    %54 = vector.multi_reduction <maximumf>, %53, %cst_14 [1] : vector<48x6xf32> to vector<48xf32>
    %55 = vector.shape_cast %54 : vector<48xf32> to vector<48x1xf32>
    %56 = vector.broadcast %55 : vector<48x1xf32> to vector<48x6xf32>
    %57 = arith.subf %53, %56 : vector<48x6xf32>
    %58 = math.exp %57 : vector<48x6xf32>
    %cst_15 = arith.constant dense<0.000000e+00> : vector<48xf32>
    %59 = vector.multi_reduction <add>, %58, %cst_15 [1] : vector<48x6xf32> to vector<48xf32>
    %60 = vector.shape_cast %59 : vector<48xf32> to vector<48x1xf32>
    %61 = tpu.reciprocal %60 {approx = true} : vector<48x1xf32> -> vector<48x1xf32>
    %62 = vector.broadcast %61 : vector<48x1xf32> to vector<48x6xf32>
    %63 = arith.mulf %58, %62 : vector<48x6xf32>
    %cst_16 = arith.constant dense<0.000000e+00> : vector<48x32xf32>
    %64 = tpu.matmul %63, %47, %cst_16 {dimension_numbers = #tpu.dot_dimension_numbers<[1], [0], [0], [1], [0, 0, 1, 1], [], []>} : vector<48x6xf32>, vector<6x32xf32>, vector<48x32xf32> -> vector<48x32xf32>
    %65 = arith.mulf %64, %9 : vector<48x32xf32>
    %66 = vector.extract_strided_slice %65 {offsets = [0, 0], sizes = [6, 32], strides = [1, 1]} : vector<48x32xf32> to vector<6x32xf32>
    %67 = vector.extract_strided_slice %65 {offsets = [6, 0], sizes = [6, 32], strides = [1, 1]} : vector<48x32xf32> to vector<6x32xf32>
    %68 = arith.addf %66, %67 : vector<6x32xf32>
    %69 = vector.extract_strided_slice %65 {offsets = [12, 0], sizes = [6, 32], strides = [1, 1]} : vector<48x32xf32> to vector<6x32xf32>
    %70 = arith.addf %68, %69 : vector<6x32xf32>
    %71 = vector.extract_strided_slice %65 {offsets = [18, 0], sizes = [6, 32], strides = [1, 1]} : vector<48x32xf32> to vector<6x32xf32>
    %72 = arith.addf %70, %71 : vector<6x32xf32>
    %73 = vector.extract_strided_slice %65 {offsets = [24, 0], sizes = [6, 32], strides = [1, 1]} : vector<48x32xf32> to vector<6x32xf32>
    %74 = arith.addf %72, %73 : vector<6x32xf32>
    %75 = vector.extract_strided_slice %65 {offsets = [30, 0], sizes = [6, 32], strides = [1, 1]} : vector<48x32xf32> to vector<6x32xf32>
    %76 = arith.addf %74, %75 : vector<6x32xf32>
    %77 = vector.extract_strided_slice %65 {offsets = [36, 0], sizes = [6, 32], strides = [1, 1]} : vector<48x32xf32> to vector<6x32xf32>
    %78 = arith.addf %76, %77 : vector<6x32xf32>
    %79 = vector.extract_strided_slice %65 {offsets = [42, 0], sizes = [6, 32], strides = [1, 1]} : vector<48x32xf32> to vector<6x32xf32>
    %80 = arith.addf %78, %79 : vector<6x32xf32>
    %c116 = arith.constant 116 : index
    %c96_17 = arith.constant 96 : index
    %81 = vector.load %arg1[%c116, %c96_17] : memref<240x128xbf16, #tpu.memory_space<vmem>>, vector<32x32xbf16>
    %82 = arith.extf %81 : vector<32x32xbf16> to vector<32x32xf32>
    %cst_18 = arith.constant dense<0.000000e+00> : vector<6x32xf32>
    %83 = tpu.matmul %80, %82, %cst_18 {dimension_numbers = #tpu.dot_dimension_numbers<[1], [0], [0], [1], [0, 0, 1, 1], [], []>} : vector<6x32xf32>, vector<32x32xf32>, vector<6x32xf32> -> vector<6x32xf32>
    %84 = arith.addf %7, %83 : vector<6x32xf32>
    %c221_19 = arith.constant 221 : index
    %c32_20 = arith.constant 32 : index
    %85 = vector.load %arg1[%c221_19, %c32_20] : memref<240x128xbf16, #tpu.memory_space<vmem>>, vector<1x32xbf16>
    %86 = arith.extf %85 : vector<1x32xbf16> to vector<1x32xf32>
    %87 = vector.broadcast %86 : vector<1x32xf32> to vector<6x32xf32>
    %88 = arith.addf %84, %87 : vector<6x32xf32>
    %c221_21 = arith.constant 221 : index
    %c64 = arith.constant 64 : index
    %89 = vector.load %arg1[%c221_21, %c64] : memref<240x128xbf16, #tpu.memory_space<vmem>>, vector<1x32xbf16>
    %90 = arith.extf %89 : vector<1x32xbf16> to vector<1x32xf32>
    %c221_22 = arith.constant 221 : index
    %c96_23 = arith.constant 96 : index
    %91 = vector.load %arg1[%c221_22, %c96_23] : memref<240x128xbf16, #tpu.memory_space<vmem>>, vector<1x32xbf16>
    %92 = arith.extf %91 : vector<1x32xbf16> to vector<1x32xf32>
    %cst_24 = arith.constant dense<0.000000e+00> : vector<6xf32>
    %93 = vector.multi_reduction <add>, %88, %cst_24 [1] : vector<6x32xf32> to vector<6xf32>
    %94 = vector.shape_cast %93 : vector<6xf32> to vector<6x1xf32>
    %cst_25 = arith.constant 3.200000e+01 : f32
    %95 = vector.broadcast %cst_25 : f32 to vector<6x1xf32>
    %96 = arith.divf %94, %95 : vector<6x1xf32>
    %97 = vector.broadcast %96 : vector<6x1xf32> to vector<6x32xf32>
    %98 = arith.subf %88, %97 : vector<6x32xf32>
    %99 = arith.mulf %98, %98 : vector<6x32xf32>
    %cst_26 = arith.constant dense<0.000000e+00> : vector<6xf32>
    %100 = vector.multi_reduction <add>, %99, %cst_26 [1] : vector<6x32xf32> to vector<6xf32>
    %101 = vector.shape_cast %100 : vector<6xf32> to vector<6x1xf32>
    %cst_27 = arith.constant 3.200000e+01 : f32
    %102 = vector.broadcast %cst_27 : f32 to vector<6x1xf32>
    %103 = arith.divf %101, %102 : vector<6x1xf32>
    %104 = vector.broadcast %96 : vector<6x1xf32> to vector<6x32xf32>
    %105 = arith.subf %88, %104 : vector<6x32xf32>
    %cst_28 = arith.constant 9.99999974E-6 : f32
    %106 = vector.broadcast %cst_28 : f32 to vector<6x1xf32>
    %107 = arith.addf %103, %106 : vector<6x1xf32>
    %108 = math.rsqrt %107 : vector<6x1xf32>
    %109 = vector.broadcast %108 : vector<6x1xf32> to vector<6x32xf32>
    %110 = arith.mulf %105, %109 : vector<6x32xf32>
    %111 = vector.broadcast %90 : vector<1x32xf32> to vector<6x32xf32>
    %112 = arith.mulf %110, %111 : vector<6x32xf32>
    %113 = vector.broadcast %92 : vector<1x32xf32> to vector<6x32xf32>
    %114 = arith.addf %112, %113 : vector<6x32xf32>
    %c148 = arith.constant 148 : index
    %c0_29 = arith.constant 0 : index
    %115 = vector.load %arg1[%c148, %c0_29] : memref<240x128xbf16, #tpu.memory_space<vmem>>, vector<32x64xbf16>
    %116 = arith.extf %115 : vector<32x64xbf16> to vector<32x64xf32>
    %cst_30 = arith.constant dense<0.000000e+00> : vector<6x64xf32>
    %117 = tpu.matmul %114, %116, %cst_30 {dimension_numbers = #tpu.dot_dimension_numbers<[1], [0], [0], [1], [0, 0, 1, 1], [], []>} : vector<6x32xf32>, vector<32x64xf32>, vector<6x64xf32> -> vector<6x64xf32>
    %c220 = arith.constant 220 : index
    %c0_31 = arith.constant 0 : index
    %118 = vector.load %arg1[%c220, %c0_31] : memref<240x128xbf16, #tpu.memory_space<vmem>>, vector<1x64xbf16>
    %119 = arith.extf %118 : vector<1x64xbf16> to vector<1x64xf32>
    %120 = vector.broadcast %119 : vector<1x64xf32> to vector<6x64xf32>
    %121 = arith.addf %117, %120 : vector<6x64xf32>
    %122 = arith.mulf %121, %121 : vector<6x64xf32>
    %123 = arith.mulf %121, %122 : vector<6x64xf32>
    %cst_32 = arith.constant 4.471500e-02 : f32
    %124 = vector.broadcast %cst_32 : f32 to vector<6x64xf32>
    %125 = arith.mulf %124, %123 : vector<6x64xf32>
    %126 = arith.addf %121, %125 : vector<6x64xf32>
    %cst_33 = arith.constant 0.797884583 : f32
    %127 = vector.broadcast %cst_33 : f32 to vector<6x64xf32>
    %128 = arith.mulf %127, %126 : vector<6x64xf32>
    %129 = math.tanh %128 : vector<6x64xf32>
    %cst_34 = arith.constant 1.000000e+00 : f32
    %130 = vector.broadcast %cst_34 : f32 to vector<6x64xf32>
    %131 = arith.addf %130, %129 : vector<6x64xf32>
    %cst_35 = arith.constant 5.000000e-01 : f32
    %132 = vector.broadcast %cst_35 : f32 to vector<6x64xf32>
    %133 = arith.mulf %132, %131 : vector<6x64xf32>
    %134 = arith.mulf %121, %133 : vector<6x64xf32>
    %c0_36 = arith.constant 0 : index
    %c8 = arith.constant 8 : index
    %135 = vector.load %arg1[%c0_36, %c8] : memref<240x128xbf16, #tpu.memory_space<vmem>>, vector<64x32xbf16>
    %136 = arith.extf %135 : vector<64x32xbf16> to vector<64x32xf32>
    %cst_37 = arith.constant dense<0.000000e+00> : vector<6x32xf32>
    %137 = tpu.matmul %134, %136, %cst_37 {dimension_numbers = #tpu.dot_dimension_numbers<[1], [0], [0], [1], [0, 0, 1, 1], [], []>} : vector<6x64xf32>, vector<64x32xf32>, vector<6x32xf32> -> vector<6x32xf32>
    %c222 = arith.constant 222 : index
    %c0_38 = arith.constant 0 : index
    %138 = vector.load %arg1[%c222, %c0_38] : memref<240x128xbf16, #tpu.memory_space<vmem>>, vector<1x32xbf16>
    %139 = arith.extf %138 : vector<1x32xbf16> to vector<1x32xf32>
    %140 = vector.broadcast %139 : vector<1x32xf32> to vector<6x32xf32>
    %141 = arith.addf %137, %140 : vector<6x32xf32>
    %142 = arith.addf %88, %141 : vector<6x32xf32>
    %c222_39 = arith.constant 222 : index
    %c32_40 = arith.constant 32 : index
    %143 = vector.load %arg1[%c222_39, %c32_40] : memref<240x128xbf16, #tpu.memory_space<vmem>>, vector<1x32xbf16>
    %144 = arith.extf %143 : vector<1x32xbf16> to vector<1x32xf32>
    %c222_41 = arith.constant 222 : index
    %c64_42 = arith.constant 64 : index
    %145 = vector.load %arg1[%c222_41, %c64_42] : memref<240x128xbf16, #tpu.memory_space<vmem>>, vector<1x32xbf16>
    %146 = arith.extf %145 : vector<1x32xbf16> to vector<1x32xf32>
    %cst_43 = arith.constant dense<0.000000e+00> : vector<6xf32>
    %147 = vector.multi_reduction <add>, %142, %cst_43 [1] : vector<6x32xf32> to vector<6xf32>
    %148 = vector.shape_cast %147 : vector<6xf32> to vector<6x1xf32>
    %cst_44 = arith.constant 3.200000e+01 : f32
    %149 = vector.broadcast %cst_44 : f32 to vector<6x1xf32>
    %150 = arith.divf %148, %149 : vector<6x1xf32>
    %151 = vector.broadcast %150 : vector<6x1xf32> to vector<6x32xf32>
    %152 = arith.subf %142, %151 : vector<6x32xf32>
    %153 = arith.mulf %152, %152 : vector<6x32xf32>
    %cst_45 = arith.constant dense<0.000000e+00> : vector<6xf32>
    %154 = vector.multi_reduction <add>, %153, %cst_45 [1] : vector<6x32xf32> to vector<6xf32>
    %155 = vector.shape_cast %154 : vector<6xf32> to vector<6x1xf32>
    %cst_46 = arith.constant 3.200000e+01 : f32
    %156 = vector.broadcast %cst_46 : f32 to vector<6x1xf32>
    %157 = arith.divf %155, %156 : vector<6x1xf32>
    %158 = vector.broadcast %150 : vector<6x1xf32> to vector<6x32xf32>
    %159 = arith.subf %142, %158 : vector<6x32xf32>
    %cst_47 = arith.constant 9.99999974E-6 : f32
    %160 = vector.broadcast %cst_47 : f32 to vector<6x1xf32>
    %161 = arith.addf %157, %160 : vector<6x1xf32>
    %162 = math.rsqrt %161 : vector<6x1xf32>
    %163 = vector.broadcast %162 : vector<6x1xf32> to vector<6x32xf32>
    %164 = arith.mulf %159, %163 : vector<6x32xf32>
    %165 = vector.broadcast %144 : vector<1x32xf32> to vector<6x32xf32>
    %166 = arith.mulf %164, %165 : vector<6x32xf32>
    %167 = vector.broadcast %146 : vector<1x32xf32> to vector<6x32xf32>
    %168 = arith.addf %166, %167 : vector<6x32xf32>
    %c116_48 = arith.constant 116 : index
    %c0_49 = arith.constant 0 : index
    %169 = vector.load %arg1[%c116_48, %c0_49] : memref<240x128xbf16, #tpu.memory_space<vmem>>, vector<32x96xbf16>
    %170 = arith.extf %169 : vector<32x96xbf16> to vector<32x96xf32>
    %cst_50 = arith.constant dense<0.000000e+00> : vector<6x96xf32>
    %171 = tpu.matmul %168, %170, %cst_50 {dimension_numbers = #tpu.dot_dimension_numbers<[1], [0], [0], [1], [0, 0, 1, 1], [], []>} : vector<6x32xf32>, vector<32x96xf32>, vector<6x96xf32> -> vector<6x96xf32>
    %c219_51 = arith.constant 219 : index
    %c0_52 = arith.constant 0 : index
    %172 = vector.load %arg1[%c219_51, %c0_52] : memref<240x128xbf16, #tpu.memory_space<vmem>>, vector<1x96xbf16>
    %173 = arith.extf %172 : vector<1x96xbf16> to vector<1x96xf32>
    %174 = vector.broadcast %173 : vector<1x96xf32> to vector<6x96xf32>
    %175 = arith.addf %171, %174 : vector<6x96xf32>
    %176 = vector.extract_strided_slice %175 {offsets = [0, 0], sizes = [6, 32], strides = [1, 1]} : vector<6x96xf32> to vector<6x32xf32>
    %177 = vector.extract_strided_slice %175 {offsets = [0, 32], sizes = [6, 32], strides = [1, 1]} : vector<6x96xf32> to vector<6x32xf32>
    %178 = vector.extract_strided_slice %175 {offsets = [0, 64], sizes = [6, 32], strides = [1, 1]} : vector<6x96xf32> to vector<6x32xf32>
    %179 = tpu.concatenate %176, %176, %176, %176, %176, %176, %176, %176 in 0 : vector<6x32xf32>, vector<6x32xf32>, vector<6x32xf32>, vector<6x32xf32>, vector<6x32xf32>, vector<6x32xf32>, vector<6x32xf32>, vector<6x32xf32> -> vector<48x32xf32>
    %180 = arith.mulf %179, %9 : vector<48x32xf32>
    %cst_53 = arith.constant dense<0.000000e+00> : vector<48x6xf32>
    %181 = tpu.matmul %180, %177, %cst_53 {dimension_numbers = #tpu.dot_dimension_numbers<[1], [1], [0], [0], [0, 0, 1, 0], [], []>} : vector<48x32xf32>, vector<6x32xf32>, vector<48x6xf32> -> vector<48x6xf32>
    %cst_54 = arith.constant 5.000000e-01 : f32
    %182 = vector.broadcast %cst_54 : f32 to vector<48x6xf32>
    %183 = arith.mulf %181, %182 : vector<48x6xf32>
    %184 = arith.addf %183, %11 : vector<48x6xf32>
    %cst_55 = arith.constant dense<0xFF800000> : vector<48xf32>
    %185 = vector.multi_reduction <maximumf>, %184, %cst_55 [1] : vector<48x6xf32> to vector<48xf32>
    %186 = vector.shape_cast %185 : vector<48xf32> to vector<48x1xf32>
    %187 = vector.broadcast %186 : vector<48x1xf32> to vector<48x6xf32>
    %188 = arith.subf %184, %187 : vector<48x6xf32>
    %189 = math.exp %188 : vector<48x6xf32>
    %cst_56 = arith.constant dense<0.000000e+00> : vector<48xf32>
    %190 = vector.multi_reduction <add>, %189, %cst_56 [1] : vector<48x6xf32> to vector<48xf32>
    %191 = vector.shape_cast %190 : vector<48xf32> to vector<48x1xf32>
    %192 = tpu.reciprocal %191 {approx = true} : vector<48x1xf32> -> vector<48x1xf32>
    %193 = vector.broadcast %192 : vector<48x1xf32> to vector<48x6xf32>
    %194 = arith.mulf %189, %193 : vector<48x6xf32>
    %cst_57 = arith.constant dense<0.000000e+00> : vector<48x32xf32>
    %195 = tpu.matmul %194, %178, %cst_57 {dimension_numbers = #tpu.dot_dimension_numbers<[1], [0], [0], [1], [0, 0, 1, 1], [], []>} : vector<48x6xf32>, vector<6x32xf32>, vector<48x32xf32> -> vector<48x32xf32>
    %196 = arith.mulf %195, %9 : vector<48x32xf32>
    %197 = vector.extract_strided_slice %196 {offsets = [0, 0], sizes = [6, 32], strides = [1, 1]} : vector<48x32xf32> to vector<6x32xf32>
    %198 = vector.extract_strided_slice %196 {offsets = [6, 0], sizes = [6, 32], strides = [1, 1]} : vector<48x32xf32> to vector<6x32xf32>
    %199 = arith.addf %197, %198 : vector<6x32xf32>
    %200 = vector.extract_strided_slice %196 {offsets = [12, 0], sizes = [6, 32], strides = [1, 1]} : vector<48x32xf32> to vector<6x32xf32>
    %201 = arith.addf %199, %200 : vector<6x32xf32>
    %202 = vector.extract_strided_slice %196 {offsets = [18, 0], sizes = [6, 32], strides = [1, 1]} : vector<48x32xf32> to vector<6x32xf32>
    %203 = arith.addf %201, %202 : vector<6x32xf32>
    %204 = vector.extract_strided_slice %196 {offsets = [24, 0], sizes = [6, 32], strides = [1, 1]} : vector<48x32xf32> to vector<6x32xf32>
    %205 = arith.addf %203, %204 : vector<6x32xf32>
    %206 = vector.extract_strided_slice %196 {offsets = [30, 0], sizes = [6, 32], strides = [1, 1]} : vector<48x32xf32> to vector<6x32xf32>
    %207 = arith.addf %205, %206 : vector<6x32xf32>
    %208 = vector.extract_strided_slice %196 {offsets = [36, 0], sizes = [6, 32], strides = [1, 1]} : vector<48x32xf32> to vector<6x32xf32>
    %209 = arith.addf %207, %208 : vector<6x32xf32>
    %210 = vector.extract_strided_slice %196 {offsets = [42, 0], sizes = [6, 32], strides = [1, 1]} : vector<48x32xf32> to vector<6x32xf32>
    %211 = arith.addf %209, %210 : vector<6x32xf32>
    %c180 = arith.constant 180 : index
    %c0_58 = arith.constant 0 : index
    %212 = vector.load %arg1[%c180, %c0_58] : memref<240x128xbf16, #tpu.memory_space<vmem>>, vector<32x32xbf16>
    %213 = arith.extf %212 : vector<32x32xbf16> to vector<32x32xf32>
    %cst_59 = arith.constant dense<0.000000e+00> : vector<6x32xf32>
    %214 = tpu.matmul %211, %213, %cst_59 {dimension_numbers = #tpu.dot_dimension_numbers<[1], [0], [0], [1], [0, 0, 1, 1], [], []>} : vector<6x32xf32>, vector<32x32xf32>, vector<6x32xf32> -> vector<6x32xf32>
    %215 = arith.addf %142, %214 : vector<6x32xf32>
    %c222_60 = arith.constant 222 : index
    %c96_61 = arith.constant 96 : index
    %216 = vector.load %arg1[%c222_60, %c96_61] : memref<240x128xbf16, #tpu.memory_space<vmem>>, vector<1x32xbf16>
    %217 = arith.extf %216 : vector<1x32xbf16> to vector<1x32xf32>
    %218 = vector.broadcast %217 : vector<1x32xf32> to vector<6x32xf32>
    %219 = arith.addf %215, %218 : vector<6x32xf32>
    %c223 = arith.constant 223 : index
    %c0_62 = arith.constant 0 : index
    %220 = vector.load %arg1[%c223, %c0_62] : memref<240x128xbf16, #tpu.memory_space<vmem>>, vector<1x32xbf16>
    %221 = arith.extf %220 : vector<1x32xbf16> to vector<1x32xf32>
    %c223_63 = arith.constant 223 : index
    %c32_64 = arith.constant 32 : index
    %222 = vector.load %arg1[%c223_63, %c32_64] : memref<240x128xbf16, #tpu.memory_space<vmem>>, vector<1x32xbf16>
    %223 = arith.extf %222 : vector<1x32xbf16> to vector<1x32xf32>
    %cst_65 = arith.constant dense<0.000000e+00> : vector<6xf32>
    %224 = vector.multi_reduction <add>, %219, %cst_65 [1] : vector<6x32xf32> to vector<6xf32>
    %225 = vector.shape_cast %224 : vector<6xf32> to vector<6x1xf32>
    %cst_66 = arith.constant 3.200000e+01 : f32
    %226 = vector.broadcast %cst_66 : f32 to vector<6x1xf32>
    %227 = arith.divf %225, %226 : vector<6x1xf32>
    %228 = vector.broadcast %227 : vector<6x1xf32> to vector<6x32xf32>
    %229 = arith.subf %219, %228 : vector<6x32xf32>
    %230 = arith.mulf %229, %229 : vector<6x32xf32>
    %cst_67 = arith.constant dense<0.000000e+00> : vector<6xf32>
    %231 = vector.multi_reduction <add>, %230, %cst_67 [1] : vector<6x32xf32> to vector<6xf32>
    %232 = vector.shape_cast %231 : vector<6xf32> to vector<6x1xf32>
    %cst_68 = arith.constant 3.200000e+01 : f32
    %233 = vector.broadcast %cst_68 : f32 to vector<6x1xf32>
    %234 = arith.divf %232, %233 : vector<6x1xf32>
    %235 = vector.broadcast %227 : vector<6x1xf32> to vector<6x32xf32>
    %236 = arith.subf %219, %235 : vector<6x32xf32>
    %cst_69 = arith.constant 9.99999974E-6 : f32
    %237 = vector.broadcast %cst_69 : f32 to vector<6x1xf32>
    %238 = arith.addf %234, %237 : vector<6x1xf32>
    %239 = math.rsqrt %238 : vector<6x1xf32>
    %240 = vector.broadcast %239 : vector<6x1xf32> to vector<6x32xf32>
    %241 = arith.mulf %236, %240 : vector<6x32xf32>
    %242 = vector.broadcast %221 : vector<1x32xf32> to vector<6x32xf32>
    %243 = arith.mulf %241, %242 : vector<6x32xf32>
    %244 = vector.broadcast %223 : vector<1x32xf32> to vector<6x32xf32>
    %245 = arith.addf %243, %244 : vector<6x32xf32>
    %c148_70 = arith.constant 148 : index
    %c64_71 = arith.constant 64 : index
    %246 = vector.load %arg1[%c148_70, %c64_71] : memref<240x128xbf16, #tpu.memory_space<vmem>>, vector<32x64xbf16>
    %247 = arith.extf %246 : vector<32x64xbf16> to vector<32x64xf32>
    %cst_72 = arith.constant dense<0.000000e+00> : vector<6x64xf32>
    %248 = tpu.matmul %245, %247, %cst_72 {dimension_numbers = #tpu.dot_dimension_numbers<[1], [0], [0], [1], [0, 0, 1, 1], [], []>} : vector<6x32xf32>, vector<32x64xf32>, vector<6x64xf32> -> vector<6x64xf32>
    %c220_73 = arith.constant 220 : index
    %c64_74 = arith.constant 64 : index
    %249 = vector.load %arg1[%c220_73, %c64_74] : memref<240x128xbf16, #tpu.memory_space<vmem>>, vector<1x64xbf16>
    %250 = arith.extf %249 : vector<1x64xbf16> to vector<1x64xf32>
    %251 = vector.broadcast %250 : vector<1x64xf32> to vector<6x64xf32>
    %252 = arith.addf %248, %251 : vector<6x64xf32>
    %253 = arith.mulf %252, %252 : vector<6x64xf32>
    %254 = arith.mulf %252, %253 : vector<6x64xf32>
    %cst_75 = arith.constant 4.471500e-02 : f32
    %255 = vector.broadcast %cst_75 : f32 to vector<6x64xf32>
    %256 = arith.mulf %255, %254 : vector<6x64xf32>
    %257 = arith.addf %252, %256 : vector<6x64xf32>
    %cst_76 = arith.constant 0.797884583 : f32
    %258 = vector.broadcast %cst_76 : f32 to vector<6x64xf32>
    %259 = arith.mulf %258, %257 : vector<6x64xf32>
    %260 = math.tanh %259 : vector<6x64xf32>
    %cst_77 = arith.constant 1.000000e+00 : f32
    %261 = vector.broadcast %cst_77 : f32 to vector<6x64xf32>
    %262 = arith.addf %261, %260 : vector<6x64xf32>
    %cst_78 = arith.constant 5.000000e-01 : f32
    %263 = vector.broadcast %cst_78 : f32 to vector<6x64xf32>
    %264 = arith.mulf %263, %262 : vector<6x64xf32>
    %265 = arith.mulf %252, %264 : vector<6x64xf32>
    %c0_79 = arith.constant 0 : index
    %c40 = arith.constant 40 : index
    %266 = vector.load %arg1[%c0_79, %c40] : memref<240x128xbf16, #tpu.memory_space<vmem>>, vector<64x32xbf16>
    %267 = arith.extf %266 : vector<64x32xbf16> to vector<64x32xf32>
    %cst_80 = arith.constant dense<0.000000e+00> : vector<6x32xf32>
    %268 = tpu.matmul %265, %267, %cst_80 {dimension_numbers = #tpu.dot_dimension_numbers<[1], [0], [0], [1], [0, 0, 1, 1], [], []>} : vector<6x64xf32>, vector<64x32xf32>, vector<6x32xf32> -> vector<6x32xf32>
    %c223_81 = arith.constant 223 : index
    %c64_82 = arith.constant 64 : index
    %269 = vector.load %arg1[%c223_81, %c64_82] : memref<240x128xbf16, #tpu.memory_space<vmem>>, vector<1x32xbf16>
    %270 = arith.extf %269 : vector<1x32xbf16> to vector<1x32xf32>
    %271 = vector.broadcast %270 : vector<1x32xf32> to vector<6x32xf32>
    %272 = arith.addf %268, %271 : vector<6x32xf32>
    %273 = arith.addf %219, %272 : vector<6x32xf32>
    %c212_83 = arith.constant 212 : index
    %c96_84 = arith.constant 96 : index
    %274 = vector.load %arg1[%c212_83, %c96_84] : memref<240x128xbf16, #tpu.memory_space<vmem>>, vector<2x6xbf16>
    %275 = arith.extf %274 : vector<2x6xbf16> to vector<2x6xf32>
    %cst_85 = arith.constant dense<0.000000e+00> : vector<2x32xf32>
    %276 = tpu.matmul %275, %273, %cst_85 {dimension_numbers = #tpu.dot_dimension_numbers<[1], [0], [0], [1], [0, 0, 1, 1], [], []>} : vector<2x6xf32>, vector<6x32xf32>, vector<2x32xf32> -> vector<2x32xf32>
    %c180_86 = arith.constant 180 : index
    %c32_87 = arith.constant 32 : index
    %277 = vector.load %arg1[%c180_86, %c32_87] : memref<240x128xbf16, #tpu.memory_space<vmem>>, vector<32x32xbf16>
    %278 = arith.extf %277 : vector<32x32xbf16> to vector<32x32xf32>
    %cst_88 = arith.constant dense<0.000000e+00> : vector<2x32xf32>
    %279 = tpu.matmul %276, %278, %cst_88 {dimension_numbers = #tpu.dot_dimension_numbers<[1], [0], [0], [1], [0, 0, 1, 1], [], []>} : vector<2x32xf32>, vector<32x32xf32>, vector<2x32xf32> -> vector<2x32xf32>
    %c223_89 = arith.constant 223 : index
    %c96_90 = arith.constant 96 : index
    %280 = vector.load %arg1[%c223_89, %c96_90] : memref<240x128xbf16, #tpu.memory_space<vmem>>, vector<1x32xbf16>
    %281 = arith.extf %280 : vector<1x32xbf16> to vector<1x32xf32>
    %282 = vector.broadcast %281 : vector<1x32xf32> to vector<2x32xf32>
    %283 = arith.addf %279, %282 : vector<2x32xf32>
    %c0_91 = arith.constant 0 : index
    %c0_92 = arith.constant 0 : index
    %284 = vector.load %arg0[%c0_91, %c0_92] : memref<8x128xf32, #tpu.memory_space<vmem>>, vector<2x16xf32>
    %c0_93 = arith.constant 0 : index
    %c16 = arith.constant 16 : index
    %285 = vector.load %arg0[%c0_93, %c16] : memref<8x128xf32, #tpu.memory_space<vmem>>, vector<2x48xf32>
    %c0_94 = arith.constant 0 : index
    %c64_95 = arith.constant 64 : index
    %286 = vector.load %arg0[%c0_94, %c64_95] : memref<8x128xf32, #tpu.memory_space<vmem>>, vector<2x4xf32>
    %c180_96 = arith.constant 180 : index
    %c96_97 = arith.constant 96 : index
    %287 = vector.load %arg1[%c180_96, %c96_97] : memref<240x128xbf16, #tpu.memory_space<vmem>>, vector<16x32xbf16>
    %288 = arith.extf %287 : vector<16x32xbf16> to vector<16x32xf32>
    %cst_98 = arith.constant dense<0.000000e+00> : vector<2x32xf32>
    %289 = tpu.matmul %284, %288, %cst_98 {dimension_numbers = #tpu.dot_dimension_numbers<[1], [0], [0], [1], [0, 0, 1, 1], [], []>} : vector<2x16xf32>, vector<16x32xf32>, vector<2x32xf32> -> vector<2x32xf32>
    %c218_99 = arith.constant 218 : index
    %c96_100 = arith.constant 96 : index
    %290 = vector.load %arg1[%c218_99, %c96_100] : memref<240x128xbf16, #tpu.memory_space<vmem>>, vector<1x32xbf16>
    %291 = arith.extf %290 : vector<1x32xbf16> to vector<1x32xf32>
    %292 = vector.broadcast %291 : vector<1x32xf32> to vector<2x32xf32>
    %293 = arith.addf %289, %292 : vector<2x32xf32>
    %c68_101 = arith.constant 68 : index
    %c0_102 = arith.constant 0 : index
    %294 = vector.load %arg1[%c68_101, %c0_102] : memref<240x128xbf16, #tpu.memory_space<vmem>>, vector<48x32xbf16>
    %295 = arith.extf %294 : vector<48x32xbf16> to vector<48x32xf32>
    %cst_103 = arith.constant dense<0.000000e+00> : vector<2x32xf32>
    %296 = tpu.matmul %285, %295, %cst_103 {dimension_numbers = #tpu.dot_dimension_numbers<[1], [0], [0], [1], [0, 0, 1, 1], [], []>} : vector<2x48xf32>, vector<48x32xf32>, vector<2x32xf32> -> vector<2x32xf32>
    %c224 = arith.constant 224 : index
    %c0_104 = arith.constant 0 : index
    %297 = vector.load %arg1[%c224, %c0_104] : memref<240x128xbf16, #tpu.memory_space<vmem>>, vector<1x32xbf16>
    %298 = arith.extf %297 : vector<1x32xbf16> to vector<1x32xf32>
    %299 = vector.broadcast %298 : vector<1x32xf32> to vector<2x32xf32>
    %300 = arith.addf %296, %299 : vector<2x32xf32>
    %cst_105 = arith.constant 0.000000e+00 : f32
    %301 = vector.broadcast %cst_105 : f32 to vector<2x32xf32>
    %302 = arith.maximumf %300, %301 : vector<2x32xf32>
    %c224_106 = arith.constant 224 : index
    %c32_107 = arith.constant 32 : index
    %303 = vector.load %arg1[%c224_106, %c32_107] : memref<240x128xbf16, #tpu.memory_space<vmem>>, vector<1x32xbf16>
    %304 = arith.extf %303 : vector<1x32xbf16> to vector<1x32xf32>
    %c224_108 = arith.constant 224 : index
    %c64_109 = arith.constant 64 : index
    %305 = vector.load %arg1[%c224_108, %c64_109] : memref<240x128xbf16, #tpu.memory_space<vmem>>, vector<1x32xbf16>
    %306 = arith.extf %305 : vector<1x32xbf16> to vector<1x32xf32>
    %cst_110 = arith.constant dense<0.000000e+00> : vector<2xf32>
    %307 = vector.multi_reduction <add>, %302, %cst_110 [1] : vector<2x32xf32> to vector<2xf32>
    %308 = vector.shape_cast %307 : vector<2xf32> to vector<2x1xf32>
    %cst_111 = arith.constant 3.200000e+01 : f32
    %309 = vector.broadcast %cst_111 : f32 to vector<2x1xf32>
    %310 = arith.divf %308, %309 : vector<2x1xf32>
    %311 = vector.broadcast %310 : vector<2x1xf32> to vector<2x32xf32>
    %312 = arith.subf %302, %311 : vector<2x32xf32>
    %313 = arith.mulf %312, %312 : vector<2x32xf32>
    %cst_112 = arith.constant dense<0.000000e+00> : vector<2xf32>
    %314 = vector.multi_reduction <add>, %313, %cst_112 [1] : vector<2x32xf32> to vector<2xf32>
    %315 = vector.shape_cast %314 : vector<2xf32> to vector<2x1xf32>
    %cst_113 = arith.constant 3.200000e+01 : f32
    %316 = vector.broadcast %cst_113 : f32 to vector<2x1xf32>
    %317 = arith.divf %315, %316 : vector<2x1xf32>
    %318 = vector.broadcast %310 : vector<2x1xf32> to vector<2x32xf32>
    %319 = arith.subf %302, %318 : vector<2x32xf32>
    %cst_114 = arith.constant 9.99999974E-6 : f32
    %320 = vector.broadcast %cst_114 : f32 to vector<2x1xf32>
    %321 = arith.addf %317, %320 : vector<2x1xf32>
    %322 = math.rsqrt %321 : vector<2x1xf32>
    %323 = vector.broadcast %322 : vector<2x1xf32> to vector<2x32xf32>
    %324 = arith.mulf %319, %323 : vector<2x32xf32>
    %325 = vector.broadcast %304 : vector<1x32xf32> to vector<2x32xf32>
    %326 = arith.mulf %324, %325 : vector<2x32xf32>
    %327 = vector.broadcast %306 : vector<1x32xf32> to vector<2x32xf32>
    %328 = arith.addf %326, %327 : vector<2x32xf32>
    %c180_115 = arith.constant 180 : index
    %c64_116 = arith.constant 64 : index
    %329 = vector.load %arg1[%c180_115, %c64_116] : memref<240x128xbf16, #tpu.memory_space<vmem>>, vector<32x32xbf16>
    %330 = arith.extf %329 : vector<32x32xbf16> to vector<32x32xf32>
    %cst_117 = arith.constant dense<0.000000e+00> : vector<2x32xf32>
    %331 = tpu.matmul %328, %330, %cst_117 {dimension_numbers = #tpu.dot_dimension_numbers<[1], [0], [0], [1], [0, 0, 1, 1], [], []>} : vector<2x32xf32>, vector<32x32xf32>, vector<2x32xf32> -> vector<2x32xf32>
    %c224_118 = arith.constant 224 : index
    %c96_119 = arith.constant 96 : index
    %332 = vector.load %arg1[%c224_118, %c96_119] : memref<240x128xbf16, #tpu.memory_space<vmem>>, vector<1x32xbf16>
    %333 = arith.extf %332 : vector<1x32xbf16> to vector<1x32xf32>
    %334 = vector.broadcast %333 : vector<1x32xf32> to vector<2x32xf32>
    %335 = arith.addf %331, %334 : vector<2x32xf32>
    %336 = tpu.concatenate %286, %335, %283 in 1 : vector<2x4xf32>, vector<2x32xf32>, vector<2x32xf32> -> vector<2x68xf32>
    %c0_120 = arith.constant 0 : index
    %c0_121 = arith.constant 0 : index
    %337 = vector.load %arg1[%c0_120, %c0_121] : memref<240x128xbf16, #tpu.memory_space<vmem>>, vector<68x4xbf16>
    %338 = arith.extf %337 : vector<68x4xbf16> to vector<68x4xf32>
    %cst_122 = arith.constant dense<0.000000e+00> : vector<2x4xf32>
    %339 = tpu.matmul %336, %338, %cst_122 {dimension_numbers = #tpu.dot_dimension_numbers<[1], [0], [0], [1], [0, 0, 1, 1], [], []>} : vector<2x68xf32>, vector<68x4xf32>, vector<2x4xf32> -> vector<2x4xf32>
    %c212_123 = arith.constant 212 : index
    %c104_124 = arith.constant 104 : index
    %340 = vector.load %arg1[%c212_123, %c104_124] : memref<240x128xbf16, #tpu.memory_space<vmem>>, vector<1x4xbf16>
    %341 = arith.extf %340 : vector<1x4xbf16> to vector<1x4xf32>
    %342 = vector.broadcast %341 : vector<1x4xf32> to vector<2x4xf32>
    %343 = arith.addf %339, %342 : vector<2x4xf32>
    %cst_125 = arith.constant 0.000000e+00 : f32
    %344 = vector.broadcast %cst_125 : f32 to vector<2x4xf32>
    %345 = arith.maximumf %343, %344 : vector<2x4xf32>
    %c0_126 = arith.constant 0 : index
    %c120 = arith.constant 120 : index
    %346 = vector.load %arg1[%c0_126, %c120] : memref<240x128xbf16, #tpu.memory_space<vmem>>, vector<4x4xbf16>
    %347 = arith.extf %346 : vector<4x4xbf16> to vector<4x4xf32>
    %cst_127 = arith.constant dense<0.000000e+00> : vector<2x4xf32>
    %348 = tpu.matmul %345, %347, %cst_127 {dimension_numbers = #tpu.dot_dimension_numbers<[1], [0], [0], [1], [0, 0, 1, 1], [], []>} : vector<2x4xf32>, vector<4x4xf32>, vector<2x4xf32> -> vector<2x4xf32>
    %c212_128 = arith.constant 212 : index
    %c112 = arith.constant 112 : index
    %349 = vector.load %arg1[%c212_128, %c112] : memref<240x128xbf16, #tpu.memory_space<vmem>>, vector<1x4xbf16>
    %350 = arith.extf %349 : vector<1x4xbf16> to vector<1x4xf32>
    %351 = vector.broadcast %350 : vector<1x4xf32> to vector<2x4xf32>
    %352 = arith.addf %348, %351 : vector<2x4xf32>
    %cst_129 = arith.constant dense<0xFF800000> : vector<2xf32>
    %353 = vector.multi_reduction <maximumf>, %352, %cst_129 [1] : vector<2x4xf32> to vector<2xf32>
    %354 = vector.shape_cast %353 : vector<2xf32> to vector<2x1xf32>
    %355 = vector.broadcast %354 : vector<2x1xf32> to vector<2x4xf32>
    %356 = arith.subf %352, %355 : vector<2x4xf32>
    %357 = math.exp %356 : vector<2x4xf32>
    %cst_130 = arith.constant dense<0.000000e+00> : vector<2xf32>
    %358 = vector.multi_reduction <add>, %357, %cst_130 [1] : vector<2x4xf32> to vector<2xf32>
    %359 = vector.shape_cast %358 : vector<2xf32> to vector<2x1xf32>
    %360 = tpu.reciprocal %359 {approx = true} : vector<2x1xf32> -> vector<2x1xf32>
    %361 = vector.broadcast %360 : vector<2x1xf32> to vector<2x4xf32>
    %362 = arith.mulf %357, %361 : vector<2x4xf32>
    %c212_131 = arith.constant 212 : index
    %c64_132 = arith.constant 64 : index
    %363 = vector.load %arg1[%c212_131, %c64_132] : memref<240x128xbf16, #tpu.memory_space<vmem>>, vector<4x32xbf16>
    %364 = arith.extf %363 : vector<4x32xbf16> to vector<4x32xf32>
    %cst_133 = arith.constant dense<0.000000e+00> : vector<2x32xf32>
    %365 = tpu.matmul %362, %364, %cst_133 {dimension_numbers = #tpu.dot_dimension_numbers<[1], [0], [0], [1], [0, 0, 1, 1], [], []>} : vector<2x4xf32>, vector<4x32xf32>, vector<2x32xf32> -> vector<2x32xf32>
    %366 = arith.mulf %293, %365 : vector<2x32xf32>
    %c0_134 = arith.constant 0 : index
    %c112_135 = arith.constant 112 : index
    %367 = vector.load %arg1[%c0_134, %c112_135] : memref<240x128xbf16, #tpu.memory_space<vmem>>, vector<32x8xbf16>
    %368 = arith.extf %367 : vector<32x8xbf16> to vector<32x8xf32>
    %cst_136 = arith.constant dense<0.000000e+00> : vector<2x8xf32>
    %369 = tpu.matmul %366, %368, %cst_136 {dimension_numbers = #tpu.dot_dimension_numbers<[1], [0], [0], [1], [0, 0, 1, 1], [], []>} : vector<2x32xf32>, vector<32x8xf32>, vector<2x8xf32> -> vector<2x8xf32>
    %c0_137 = arith.constant 0 : index
    %c0_138 = arith.constant 0 : index
    %370 = vector.load %arg2[%c0_137, %c0_138] : memref<2x8xf32, #tpu.memory_space<vmem>>, vector<2x8xf32>
    tpu.vector_store %arg2[%c0_137, %c0_138], %369 {strides = array<i32>} : memref<2x8xf32, #tpu.memory_space<vmem>>, vector<2x8xf32>,
    return
  }
}

</mosaic_0001>

<llo_original>
// kernel: model_forward.1
$region0: #{model_forward.1}
  #allocation0 [shape = 'u32[]', space=smem, size = 0x4, offset = 0x4, fixed_abs, tag = 'smem constant byte address 0x4 - core index']
  #allocation1 [shape = 'u32[144,128]{1,0:T(1,128)}', space=vmem, size = 0x12000, scoped, tag = 'internal scratch']
  %s0 = inlined_call_operand.vmem [shape: f32[8,128], index: 0, kind: input, shape index: {}]
  %s1 = inlined_call_operand.vmem [shape: bf16[240,128], index: 1, kind: input, shape index: {}]
  %s2 = inlined_call_operand.hbm [shape: f32[2,8], index: 2, kind: output, shape index: {}]
  %s3 = sld [smem:[#allocation0]]
  $region18: #{model_forward.1} parent=0
    _
  %s5 = ssub.s32 1, %s3
  %s6 = scalar_select 0, %s5, %s3
  $region1: #{model_forward.1} parent=0
    #allocation2 [shape = 'u8[1024]{0}', space=vmem, size = 0x400, scoped, tag = 'output window, operand 0, single buffered']
    #allocation3 [shape = 's32[1]{0}', space=sflag, size = 0x4, scoped, tag = 'scoped memory for model_forward.1']
    %7 = vsyncpa [#allocation3], 0
    // Predicated region
    $region2: #{model_forward.1} parent=1 // pred_check
      _
    $region3: #{model_forward.1} parent=1 // pred_check_branch
      %9 = sbr.rel (0) target = $region5
    $region4: #{model_forward.1} parent=1 // pred_region
      _
    $region5: #{model_forward.1} parent=1 // pred_fallthru
      _
    // Predicated region
    $region6: #{model_forward.1} parent=1 // pred_check
      _
    $region7: #{model_forward.1} parent=1 // pred_check_branch
      %11 = sbr.rel (0) target = $region9
    $region8: #{model_forward.1} parent=1 // pred_region
      _
    $region9: #{model_forward.1} parent=1 // pred_fallthru
      _
    %v12 = vld [vmem:[%s0 + $0x2] sm:$0x3f]
    %v13 = vld [vmem:[%s1 + $0x68] sm:$0xc]
    %v14 = vld [vmem:[%s1 + $0x6c] sm:$0x1]
    %v15 = vunpack.c.l.bf16 %v13
    %v16 = vunpack.c.l.bf16 %v14
    %18 = vset.pattern.permute.xlu0 0
    %19 = vperm.xlu0 %18, %v12
    %v20 = vpop.permute.xlu0 %19
    %vm24 = vcmask 1043456
    %v25 = vrot.slane %v15, 4
    %v26 = vrot.slane %v16, 4
    %v27 = vsel %vm24, %v25, %v26
    %v29 = vmul.f32 %v20, %v27
    %30 = vrot.lane.b32.xlu0 %v27, 96
    %v31 = vpop.permute.xlu0 %30
    %v33 = vadd.f32 %v29, %v31
    %v34 = vld [vmem:[%s1] sm:$0xf]
    %v35 = vld [vmem:[%s1 + $0x4] sm:$0xf]
    %v36 = vld [vmem:[%s1 + $0x8] sm:$0xf]
    %v37 = vld [vmem:[%s1 + $0xc] sm:$0xf]
    %v38 = vld [vmem:[%s1 + $0x10] sm:$0xf]
    %v39 = vld [vmem:[%s1 + $0x14] sm:$0xf]
    %v40 = vunpack.c.l.bf16 %v34
    %v41 = vunpack.c.l.bf16 %v35
    %v42 = vunpack.c.l.bf16 %v36
    %v43 = vunpack.c.l.bf16 %v37
    %v44 = vunpack.c.l.bf16 %v38
    %v45 = vunpack.c.l.bf16 %v39
    %v46 = vld [vmem:[%s1 + $0x6c] sm:$0x2]
    %v47 = vunpack.c.l.bf16 %v46
    %v48 = vld [vmem:[%s1 + $0x6c] sm:$0x4]
    %v49 = vunpack.c.l.bf16 %v48
    %vm50 = vcmask 259072
    %v51 = vsel %vm50, %v33, 0.0
    %52 = vadd.xlane.f32.xlu0 %v51
    %v53 = vpop.xlane.xlu0 %52
    %v54 = vrcp.pop 32.0
    %v55 = vmul.f32 %v53, %v54
    %v56 = vsub.f32 %v33, %v55
    %v57 = vmul.f32 %v56, %v56
    %v58 = vsel %vm50, %v57, 0.0
    %59 = vadd.xlane.f32.xlu0 %v58
    %v60 = vpop.xlane.xlu0 %59
    %v61 = vmul.f32 %v60, %v54
    %v62 = vadd.f32 %v61, 1e-05
    %v63 = vrsqrt.pop %v62
    %v64 = vmul.f32 %v56, %v63
    %v65 = vlaneseq
    %v66 = vshrl.u32 %v65, 7
    %v67 = vsub.s32 3, %v66
    %v68 = vrot.slane %v47, %v67
    %70 = vrot.lane.b32.xlu0 %v68, 32
    %v71 = vpop.permute.xlu0 %70
    %v73 = vmul.f32 %v64, %v71
    %v74 = vlaneseq
    %v75 = vshrl.u32 %v74, 7
    %v76 = vsub.s32 5, %v75
    %v77 = vrot.slane %v49, %v76
    %v78 = vadd.f32 %v73, %v77
    %v79 = vld [vmem:[%s1 + $0x20] sm:$0xc]
    %v80 = vld [vmem:[%s1 + $0x24] sm:$0xf]
    %v81 = vld [vmem:[%s1 + $0x28] sm:$0xf]
    %v82 = vld [vmem:[%s1 + $0x2c] sm:$0xf]
    %v83 = vld [vmem:[%s1 + $0x30] sm:$0x3]
    %v84 = vunpack.c.l.bf16 %v79
    %v85 = vunpack.c.l.bf16 %v80
    %v86 = vunpack.c.l.bf16 %v81
    %v87 = vunpack.c.l.bf16 %v82
    %v88 = vunpack.c.l.bf16 %v83
    %v89 = vlaneseq
    %v90 = vshrl.u32 %v89, 7
    %v91 = vsub.s32 2, %v90
    %v92 = vrot.slane %v47, %v91
    %v98 = vrot.slane %v84, 4
    %v99 = vrot.slane %v85, 4
    %v100 = vsel %vm24, %v98, %v99
    %v101 = vrot.slane %v86, 4
    %v102 = vsel %vm24, %v99, %v101
    %v103 = vrot.slane %v87, 4
    %v104 = vsel %vm24, %v101, %v103
    %v105 = vrot.slane %v88, 4
    %v106 = vsel %vm24, %v103, %v105
    %107 = vrot.lane.b32.xlu0 %v100, 96
    %v108 = vpop.permute.xlu0 %107
    %109 = vrot.lane.b32.xlu0 %v102, 96
    %v110 = vpop.permute.xlu0 %109
    %111 = vrot.lane.b32.xlu0 %v104, 96
    %v112 = vpop.permute.xlu0 %111
    %113 = vrot.lane.b32.xlu0 %v106, 96
    %v114 = vpop.permute.xlu0 %113
    %vm119 = vcmask 261120
    %v121 = vsel %vm119, %v78, 0
    %123 = vmatprep.subr.mxu0 0.0
    %124 = vmatpush1.msra.mxu0 %v108
    %125 = vmatprep.subr.mxu0 0.0
    %126 = vmatpush1.msra.mxu0 %v110
    %127 = vmatprep.subr.mxu0 0.0
    %128 = vmatpush1.msra.mxu0 %v112
    %129 = vmatprep.subr.mxu0 0.0
    %130 = vmatpush1.msra.mxu0 %v114
    %131 = vmatprep.subr.mxu0 0.0
    %132 = vmatpush1.msra.mxu0 0.0
    %133 = vmatprep.subr.mxu0 0.0
    %134 = vmatpush1.msra.mxu0 0.0
    %135 = vmatprep.subr.mxu0 0.0
    %136 = vmatpush1.msra.mxu0 0.0
    %137 = vmatprep.subr.mxu0 0.0
    %138 = vmatpush1.msra.mxu0 0.0
    %139 = vmatprep.subr.mxu0 0.0
    %140 = vmatpush1.msra.mxu0 0.0
    %141 = vmatprep.subr.mxu0 0.0
    %142 = vmatpush1.msra.mxu0 0.0
    %143 = vmatprep.subr.mxu0 0.0
    %144 = vmatpush1.msra.mxu0 0.0
    %145 = vmatprep.subr.mxu0 0.0
    %146 = vmatpush1.msra.mxu0 0.0
    %147 = vmatprep.subr.mxu0 0.0
    %148 = vmatpush1.msra.mxu0 0.0
    %149 = vmatprep.subr.mxu0 0.0
    %150 = vmatpush1.msra.mxu0 0.0
    %151 = vmatprep.subr.mxu0 0.0
    %152 = vmatpush1.msra.mxu0 0.0
    %153 = vmatprep.subr.mxu0 0.0
    %154 = vmatpush1.msra.mxu0 0.0
    %155 = vmatprep.subr.mxu0 0.0
    %156 = vmatpush1.msra.mxu0 0.0
    %157 = vmatprep.subr.mxu0 0.0
    %158 = vmatpush1.msra.mxu0 0.0
    %159 = vmatprep.subr.mxu0 0.0
    %160 = vmatpush1.msra.mxu0 0.0
    %161 = vmatprep.subr.mxu0 0.0
    %162 = vmatpush1.msra.mxu0 0.0
    %163 = vmatprep.subr.mxu0 0.0
    %164 = vmatpush1.msra.mxu0 0.0
    %165 = vmatprep.subr.mxu0 0.0
    %166 = vmatpush1.msra.mxu0 0.0
    %167 = vmatprep.subr.mxu0 0.0
    %168 = vmatpush1.msra.mxu0 0.0
    %169 = vmatprep.subr.mxu0 0.0
    %170 = vmatpush1.msra.mxu0 0.0
    %171 = vmatprep.subr.mxu0 0.0
    %172 = vmatpush1.msra.mxu0 0.0
    %173 = vmatprep.subr.mxu0 0.0
    %174 = vmatpush1.msra.mxu0 0.0
    %175 = vmatprep.subr.mxu0 0.0
    %176 = vmatpush1.msra.mxu0 0.0
    %177 = vmatprep.subr.mxu0 0.0
    %178 = vmatpush1.msra.mxu0 0.0
    %179 = vmatprep.subr.mxu0 0.0
    %180 = vmatpush1.msra.mxu0 0.0
    %181 = vmatprep.subr.mxu0 0.0
    %182 = vmatpush1.msra.mxu0 0.0
    %183 = vmatprep.subr.mxu0 0.0
    %184 = vmatpush1.msra.mxu0 0.0
    %185 = vmatprep.subr.mxu0 0.0
    %186 = vmatpush1.msra.mxu0 0.0
    %187 = vmatprep.mubr.f32.mxu0 0.0
    %188 = vmatmul.mubr.f32.gmra.mrb[0].mxu0 %v121
    %v189 = vpop.f32.mrb[0].mxu0
    %v190 = vadd.f32 %v92, %v189
    %v191 = vpop.f32.mrb[0].mxu0
    %192 = vdwg.mxu0
    %v194 = vrot.slane %v190, 2
    %v196 = vrot.slane %v190, 4
    %v198 = vrot.slane %v190, 6
    %vm200 = vcmask 1045504
    %v201 = vsel %vm200, %v190, %v194
    %v202 = vsel %vm24, %v194, %v196
    %vm203 = vcmask 1041408
    %v204 = vsel %vm203, %v196, %v198
    %211 = vrot.lane.b32.xlu0 %v40, 56
    %v212 = vpop.permute.xlu0 %211
    %213 = vrot.lane.b32.xlu0 %v41, 56
    %v214 = vpop.permute.xlu0 %213
    %215 = vrot.lane.b32.xlu0 %v42, 56
    %v216 = vpop.permute.xlu0 %215
    %217 = vrot.lane.b32.xlu0 %v43, 56
    %v218 = vpop.permute.xlu0 %217
    %219 = vrot.lane.b32.xlu0 %v44, 56
    %v220 = vpop.permute.xlu0 %219
    %221 = vrot.lane.b32.xlu0 %v45, 56
    %v222 = vpop.permute.xlu0 %221
    %v229 = vmul.f32 %v201, %v212
    %v230 = vmul.f32 %v202, %v214
    %v231 = vmul.f32 %v204, %v216
    %v232 = vmul.f32 %v201, %v218
    %v233 = vmul.f32 %v202, %v220
    %v234 = vmul.f32 %v204, %v222
    %235 = vrot.lane.b32.xlu0 %v190, 96
    %v236 = vpop.permute.xlu0 %235
    %v238 = vsel %vm119, %v229, 0
    %v241 = vsel %vm119, %v230, 0
    %v244 = vsel %vm119, %v231, 0
    %v247 = vsel %vm119, %v232, 0
    %v250 = vsel %vm119, %v233, 0
    %v253 = vsel %vm119, %v234, 0
    %v255 = vsel %vm119, %v236, 0
    %257 = vmatprep.subr.mxu0 0.0
    %258 = vmatpush1.xpose.msra.mxu0 %v255
    %259 = vmatprep.subr.mxu0 0.0
    %260 = vmatpush1.xpose.msra.mxu0 0.0
    %261 = vmatprep.subr.mxu0 0.0
    %262 = vmatpush1.xpose.msra.mxu0 0.0
    %263 = vmatprep.subr.mxu0 0.0
    %264 = vmatpush1.xpose.msra.mxu0 0.0
    %265 = vmatprep.subr.mxu0 0.0
    %266 = vmatpush1.xpose.msra.mxu0 0.0
    %267 = vmatprep.subr.mxu0 0.0
    %268 = vmatpush1.xpose.msra.mxu0 0.0
    %269 = vmatprep.subr.mxu0 0.0
    %270 = vmatpush1.xpose.msra.mxu0 0.0
    %271 = vmatprep.subr.mxu0 0.0
    %272 = vmatpush1.xpose.msra.mxu0 0.0
    %273 = vmatprep.subr.mxu0 0.0
    %274 = vmatpush1.xpose.msra.mxu0 0.0
    %275 = vmatprep.subr.mxu0 0.0
    %276 = vmatpush1.xpose.msra.mxu0 0.0
    %277 = vmatprep.subr.mxu0 0.0
    %278 = vmatpush1.xpose.msra.mxu0 0.0
    %279 = vmatprep.subr.mxu0 0.0
    %280 = vmatpush1.xpose.msra.mxu0 0.0
    %281 = vmatprep.subr.mxu0 0.0
    %282 = vmatpush1.xpose.msra.mxu0 0.0
    %283 = vmatprep.subr.mxu0 0.0
    %284 = vmatpush1.xpose.msra.mxu0 0.0
    %285 = vmatprep.subr.mxu0 0.0
    %286 = vmatpush1.xpose.msra.mxu0 0.0
    %287 = vmatprep.subr.mxu0 0.0
    %288 = vmatpush1.xpose.msra.mxu0 0.0
    %289 = vmatprep.subr.mxu0 0.0
    %290 = vmatpush1.xpose.msra.mxu0 0.0
    %291 = vmatprep.subr.mxu0 0.0
    %292 = vmatpush1.xpose.msra.mxu0 0.0
    %293 = vmatprep.subr.mxu0 0.0
    %294 = vmatpush1.xpose.msra.mxu0 0.0
    %295 = vmatprep.subr.mxu0 0.0
    %296 = vmatpush1.xpose.msra.mxu0 0.0
    %297 = vmatprep.subr.mxu0 0.0
    %298 = vmatpush1.xpose.msra.mxu0 0.0
    %299 = vmatprep.subr.mxu0 0.0
    %300 = vmatpush1.xpose.msra.mxu0 0.0
    %301 = vmatprep.subr.mxu0 0.0
    %302 = vmatpush1.xpose.msra.mxu0 0.0
    %303 = vmatprep.subr.mxu0 0.0
    %304 = vmatpush1.xpose.msra.mxu0 0.0
    %305 = vmatprep.subr.mxu0 0.0
    %306 = vmatpush1.xpose.msra.mxu0 0.0
    %307 = vmatprep.subr.mxu0 0.0
    %308 = vmatpush1.xpose.msra.mxu0 0.0
    %309 = vmatprep.subr.mxu0 0.0
    %310 = vmatpush1.xpose.msra.mxu0 0.0
    %311 = vmatprep.subr.mxu0 0.0
    %312 = vmatpush1.xpose.msra.mxu0 0.0
    %313 = vmatprep.subr.mxu0 0.0
    %314 = vmatpush1.xpose.msra.mxu0 0.0
    %315 = vmatprep.subr.mxu0 0.0
    %316 = vmatpush1.xpose.msra.mxu0 0.0
    %317 = vmatprep.subr.mxu0 0.0
    %318 = vmatpush1.xpose.msra.mxu0 0.0
    %319 = vmatprep.subr.mxu0 0.0
    %320 = vmatpush1.xpose.msra.mxu0 0.0
    %321 = vmatprep.mubr.f32.mxu0 0.0
    %322 = vmatmul.mubr.f32.gmra.mrb[0].mxu0 %v238
    %v323 = vpop.f32.mrb[0].mxu0
    %v324 = vadd.f32 0.0, %v323
    %v325 = vpop.f32.mrb[0].mxu0
    %326 = vmatprep.mubr.f32.mxu0 0.0
    %327 = vmatmul.mubr.f32.gmra.mrb[0].mxu0 %v241
    %v328 = vpop.f32.mrb[0].mxu0
    %v329 = vadd.f32 0.0, %v328
    %v330 = vpop.f32.mrb[0].mxu0
    %331 = vmatprep.mubr.f32.mxu0 0.0
    %332 = vmatmul.mubr.f32.gmra.mrb[0].mxu0 %v244
    %v333 = vpop.f32.mrb[0].mxu0
    %v334 = vadd.f32 0.0, %v333
    %v335 = vpop.f32.mrb[0].mxu0
    %336 = vmatprep.mubr.f32.mxu0 0.0
    %337 = vmatmul.mubr.f32.gmra.mrb[0].mxu0 %v247
    %v338 = vpop.f32.mrb[0].mxu0
    %v339 = vadd.f32 0.0, %v338
    %v340 = vpop.f32.mrb[0].mxu0
    %341 = vmatprep.mubr.f32.mxu0 0.0
    %342 = vmatmul.mubr.f32.gmra.mrb[0].mxu0 %v250
    %v343 = vpop.f32.mrb[0].mxu0
    %v344 = vadd.f32 0.0, %v343
    %v345 = vpop.f32.mrb[0].mxu0
    %346 = vmatprep.mubr.f32.mxu0 0.0
    %347 = vmatmul.mubr.f32.gmra.mrb[0].mxu0 %v253
    %v348 = vpop.f32.mrb[0].mxu0
    %v349 = vadd.f32 0.0, %v348
    %v350 = vpop.f32.mrb[0].mxu0
    %351 = vdwg.mxu0
    %v352 = vmul.f32 %v324, 0.5
    %v353 = vmul.f32 %v329, 0.5
    %v354 = vmul.f32 %v334, 0.5
    %v355 = vmul.f32 %v339, 0.5
    %v356 = vmul.f32 %v344, 0.5
    %v357 = vmul.f32 %v349, 0.5
    %358 = vrot.lane.b32.xlu0 %v40, 24
    %v359 = vpop.permute.xlu0 %358
    %360 = vrot.lane.b32.xlu0 %v41, 24
    %v361 = vpop.permute.xlu0 %360
    %362 = vrot.lane.b32.xlu0 %v42, 24
    %v363 = vpop.permute.xlu0 %362
    %364 = vrot.lane.b32.xlu0 %v43, 24
    %v365 = vpop.permute.xlu0 %364
    %366 = vrot.lane.b32.xlu0 %v44, 24
    %v367 = vpop.permute.xlu0 %366
    %368 = vrot.lane.b32.xlu0 %v45, 24
    %v369 = vpop.permute.xlu0 %368
    %v376 = vadd.f32 %v352, %v359
    %v377 = vadd.f32 %v353, %v361
    %v378 = vadd.f32 %v354, %v363
    %v379 = vadd.f32 %v355, %v365
    %v380 = vadd.f32 %v356, %v367
    %v381 = vadd.f32 %v357, %v369
    %vm382 = vcmask 48128
    %v383 = vsel %vm382, %v376, -inf
    %384 = vmax.xlane.f32.xlu0 %v383
    %v385 = vpop.xlane.xlu0 %384
    %v386 = vsel %vm382, %v377, -inf
    %387 = vmax.xlane.f32.xlu0 %v386
    %v388 = vpop.xlane.xlu0 %387
    %v389 = vsel %vm382, %v378, -inf
    %390 = vmax.xlane.f32.xlu0 %v389
    %v391 = vpop.xlane.xlu0 %390
    %v392 = vsel %vm382, %v379, -inf
    %393 = vmax.xlane.f32.xlu0 %v392
    %v394 = vpop.xlane.xlu0 %393
    %v395 = vsel %vm382, %v380, -inf
    %396 = vmax.xlane.f32.xlu0 %v395
    %v397 = vpop.xlane.xlu0 %396
    %v398 = vsel %vm382, %v381, -inf
    %399 = vmax.xlane.f32.xlu0 %v398
    %v400 = vpop.xlane.xlu0 %399
    %v401 = vsub.f32 %v376, %v385
    %v402 = vsub.f32 %v377, %v388
    %v403 = vsub.f32 %v378, %v391
    %v404 = vsub.f32 %v379, %v394
    %v405 = vsub.f32 %v380, %v397
    %v406 = vsub.f32 %v381, %v400
    %v407 = vmul.f32 %v401, 1.442695
    %v408 = vpow.pop %v407
    %v409 = vmul.f32 %v402, 1.442695
    %v410 = vpow.pop %v409
    %v411 = vmul.f32 %v403, 1.442695
    %v412 = vpow.pop %v411
    %v413 = vmul.f32 %v404, 1.442695
    %v414 = vpow.pop %v413
    %v415 = vmul.f32 %v405, 1.442695
    %v416 = vpow.pop %v415
    %v417 = vmul.f32 %v406, 1.442695
    %v418 = vpow.pop %v417
    %v419 = vsel %vm382, %v408, 0.0
    %420 = vadd.xlane.f32.xlu0 %v419
    %v421 = vpop.xlane.xlu0 %420
    %v422 = vsel %vm382, %v410, 0.0
    %423 = vadd.xlane.f32.xlu0 %v422
    %v424 = vpop.xlane.xlu0 %423
    %v425 = vsel %vm382, %v412, 0.0
    %426 = vadd.xlane.f32.xlu0 %v425
    %v427 = vpop.xlane.xlu0 %426
    %v428 = vsel %vm382, %v414, 0.0
    %429 = vadd.xlane.f32.xlu0 %v428
    %v430 = vpop.xlane.xlu0 %429
    %v431 = vsel %vm382, %v416, 0.0
    %432 = vadd.xlane.f32.xlu0 %v431
    %v433 = vpop.xlane.xlu0 %432
    %v434 = vsel %vm382, %v418, 0.0
    %435 = vadd.xlane.f32.xlu0 %v434
    %v436 = vpop.xlane.xlu0 %435
    %v437 = vrcp.pop %v421
    %v438 = vrcp.pop %v424
    %v439 = vrcp.pop %v427
    %v440 = vrcp.pop %v430
    %v441 = vrcp.pop %v433
    %v442 = vrcp.pop %v436
    %v443 = vmul.f32 %v408, %v437
    %v444 = vmul.f32 %v410, %v438
    %v445 = vmul.f32 %v412, %v439
    %v446 = vmul.f32 %v414, %v440
    %v447 = vmul.f32 %v416, %v441
    %v448 = vmul.f32 %v418, %v442
    %449 = vrot.lane.b32.xlu0 %v190, 64
    %v450 = vpop.permute.xlu0 %449
    %v452 = vsel %vm382, %v443, 0
    %v455 = vsel %vm382, %v444, 0
    %v458 = vsel %vm382, %v445, 0
    %v461 = vsel %vm382, %v446, 0
    %v464 = vsel %vm382, %v447, 0
    %v467 = vsel %vm382, %v448, 0
    %v469 = vsel %vm200, %v450, 0
    %471 = vmatprep.subr.mxu0 0.0
    %472 = vmatpush1.msra.mxu0 %v469
    %473 = vmatprep.subr.mxu0 0.0
    %474 = vmatpush1.msra.mxu0 0.0
    %475 = vmatprep.subr.mxu0 0.0
    %476 = vmatpush1.msra.mxu0 0.0
    %477 = vmatprep.subr.mxu0 0.0
    %478 = vmatpush1.msra.mxu0 0.0
    %479 = vmatprep.subr.mxu0 0.0
    %480 = vmatpush1.msra.mxu0 0.0
    %481 = vmatprep.subr.mxu0 0.0
    %482 = vmatpush1.msra.mxu0 0.0
    %483 = vmatprep.subr.mxu0 0.0
    %484 = vmatpush1.msra.mxu0 0.0
    %485 = vmatprep.subr.mxu0 0.0
    %486 = vmatpush1.msra.mxu0 0.0
    %487 = vmatprep.subr.mxu0 0.0
    %488 = vmatpush1.msra.mxu0 0.0
    %489 = vmatprep.subr.mxu0 0.0
    %490 = vmatpush1.msra.mxu0 0.0
    %491 = vmatprep.subr.mxu0 0.0
    %492 = vmatpush1.msra.mxu0 0.0
    %493 = vmatprep.subr.mxu0 0.0
    %494 = vmatpush1.msra.mxu0 0.0
    %495 = vmatprep.subr.mxu0 0.0
    %496 = vmatpush1.msra.mxu0 0.0
    %497 = vmatprep.subr.mxu0 0.0
    %498 = vmatpush1.msra.mxu0 0.0
    %499 = vmatprep.subr.mxu0 0.0
    %500 = vmatpush1.msra.mxu0 0.0
    %501 = vmatprep.subr.mxu0 0.0
    %502 = vmatpush1.msra.mxu0 0.0
    %503 = vmatprep.subr.mxu0 0.0
    %504 = vmatpush1.msra.mxu0 0.0
    %505 = vmatprep.subr.mxu0 0.0
    %506 = vmatpush1.msra.mxu0 0.0
    %507 = vmatprep.subr.mxu0 0.0
    %508 = vmatpush1.msra.mxu0 0.0
    %509 = vmatprep.subr.mxu0 0.0
    %510 = vmatpush1.msra.mxu0 0.0
    %511 = vmatprep.subr.mxu0 0.0
    %512 = vmatpush1.msra.mxu0 0.0
    %513 = vmatprep.subr.mxu0 0.0
    %514 = vmatpush1.msra.mxu0 0.0
    %515 = vmatprep.subr.mxu0 0.0
    %516 = vmatpush1.msra.mxu0 0.0
    %517 = vmatprep.subr.mxu0 0.0
    %518 = vmatpush1.msra.mxu0 0.0
    %519 = vmatprep.subr.mxu0 0.0
    %520 = vmatpush1.msra.mxu0 0.0
    %521 = vmatprep.subr.mxu0 0.0
    %522 = vmatpush1.msra.mxu0 0.0
    %523 = vmatprep.subr.mxu0 0.0
    %524 = vmatpush1.msra.mxu0 0.0
    %525 = vmatprep.subr.mxu0 0.0
    %526 = vmatpush1.msra.mxu0 0.0
    %527 = vmatprep.subr.mxu0 0.0
    %528 = vmatpush1.msra.mxu0 0.0
    %529 = vmatprep.subr.mxu0 0.0
    %530 = vmatpush1.msra.mxu0 0.0
    %531 = vmatprep.subr.mxu0 0.0
    %532 = vmatpush1.msra.mxu0 0.0
    %533 = vmatprep.subr.mxu0 0.0
    %534 = vmatpush1.msra.mxu0 0.0
    %535 = vmatprep.mubr.f32.mxu0 0.0
    %536 = vmatmul.mubr.f32.gmra.mrb[0].mxu0 %v452
    %v537 = vpop.f32.mrb[0].mxu0
    %v538 = vadd.f32 0.0, %v537
    %v539 = vpop.f32.mrb[0].mxu0
    %540 = vmatprep.mubr.f32.mxu0 0.0
    %541 = vmatmul.mubr.f32.gmra.mrb[0].mxu0 %v455
    %v542 = vpop.f32.mrb[0].mxu0
    %v543 = vadd.f32 0.0, %v542
    %v544 = vpop.f32.mrb[0].mxu0
    %545 = vmatprep.mubr.f32.mxu0 0.0
    %546 = vmatmul.mubr.f32.gmra.mrb[0].mxu0 %v458
    %v547 = vpop.f32.mrb[0].mxu0
    %v548 = vadd.f32 0.0, %v547
    %v549 = vpop.f32.mrb[0].mxu0
    %550 = vmatprep.mubr.f32.mxu0 0.0
    %551 = vmatmul.mubr.f32.gmra.mrb[0].mxu0 %v461
    %v552 = vpop.f32.mrb[0].mxu0
    %v553 = vadd.f32 0.0, %v552
    %v554 = vpop.f32.mrb[0].mxu0
    %555 = vmatprep.mubr.f32.mxu0 0.0
    %556 = vmatmul.mubr.f32.gmra.mrb[0].mxu0 %v464
    %v557 = vpop.f32.mrb[0].mxu0
    %v558 = vadd.f32 0.0, %v557
    %v559 = vpop.f32.mrb[0].mxu0
    %560 = vmatprep.mubr.f32.mxu0 0.0
    %561 = vmatmul.mubr.f32.gmra.mrb[0].mxu0 %v467
    %v562 = vpop.f32.mrb[0].mxu0
    %v563 = vadd.f32 0.0, %v562
    %v564 = vpop.f32.mrb[0].mxu0
    %565 = vdwg.mxu0
    %v566 = vmul.f32 %v538, %v212
    %v567 = vmul.f32 %v543, %v214
    %v568 = vmul.f32 %v548, %v216
    %v569 = vmul.f32 %v553, %v218
    %v570 = vmul.f32 %v558, %v220
    %v571 = vmul.f32 %v563, %v222
    %v574 = vrot.slane %v566, 6
    %v575 = vrot.slane %v567, 6
    %v576 = vsel %vm203, %v574, %v575
    %v578 = vadd.f32 %v566, %v576
    %v580 = vrot.slane %v567, 4
    %v581 = vrot.slane %v568, 4
    %v582 = vsel %vm24, %v580, %v581
    %v584 = vadd.f32 %v578, %v582
    %v585 = vrot.slane %v568, 2
    %v587 = vadd.f32 %v584, %v585
    %v588 = vadd.f32 %v587, %v569
    %v591 = vrot.slane %v569, 6
    %v592 = vrot.slane %v570, 6
    %v593 = vsel %vm203, %v591, %v592
    %v595 = vadd.f32 %v588, %v593
    %v597 = vrot.slane %v570, 4
    %v598 = vrot.slane %v571, 4
    %v599 = vsel %vm24, %v597, %v598
    %v601 = vadd.f32 %v595, %v599
    %v602 = vrot.slane %v571, 2
    %v604 = vadd.f32 %v601, %v602
    %v605 = vld [vmem:[%s1 + $0x38] sm:$0xc]
    %v606 = vld [vmem:[%s1 + $0x3c] sm:$0xf]
    %v607 = vld [vmem:[%s1 + $0x40] sm:$0xf]
    %v608 = vld [vmem:[%s1 + $0x44] sm:$0xf]
    %v609 = vld [vmem:[%s1 + $0x48] sm:$0x3]
    %v610 = vunpack.c.l.bf16 %v605
    %v611 = vunpack.c.l.bf16 %v606
    %v612 = vunpack.c.l.bf16 %v607
    %v613 = vunpack.c.l.bf16 %v608
    %v614 = vunpack.c.l.bf16 %v609
    %v620 = vrot.slane %v610, 4
    %v621 = vrot.slane %v611, 4
    %v622 = vsel %vm24, %v620, %v621
    %v623 = vrot.slane %v612, 4
    %v624 = vsel %vm24, %v621, %v623
    %v625 = vrot.slane %v613, 4
    %v626 = vsel %vm24, %v623, %v625
    %v627 = vrot.slane %v614, 4
    %v628 = vsel %vm24, %v625, %v627
    %629 = vrot.lane.b32.xlu0 %v622, 32
    %v630 = vpop.permute.xlu0 %629
    %631 = vrot.lane.b32.xlu0 %v624, 32
    %v632 = vpop.permute.xlu0 %631
    %633 = vrot.lane.b32.xlu0 %v626, 32
    %v634 = vpop.permute.xlu0 %633
    %635 = vrot.lane.b32.xlu0 %v628, 32
    %v636 = vpop.permute.xlu0 %635
    %v642 = vsel %vm119, %v604, 0
    %644 = vmatprep.subr.mxu0 0.0
    %645 = vmatpush1.msra.mxu0 %v630
    %646 = vmatprep.subr.mxu0 0.0
    %647 = vmatpush1.msra.mxu0 %v632
    %648 = vmatprep.subr.mxu0 0.0
    %649 = vmatpush1.msra.mxu0 %v634
    %650 = vmatprep.subr.mxu0 0.0
    %651 = vmatpush1.msra.mxu0 %v636
    %652 = vmatprep.subr.mxu0 0.0
    %653 = vmatpush1.msra.mxu0 0.0
    %654 = vmatprep.subr.mxu0 0.0
    %655 = vmatpush1.msra.mxu0 0.0
    %656 = vmatprep.subr.mxu0 0.0
    %657 = vmatpush1.msra.mxu0 0.0
    %658 = vmatprep.subr.mxu0 0.0
    %659 = vmatpush1.msra.mxu0 0.0
    %660 = vmatprep.subr.mxu0 0.0
    %661 = vmatpush1.msra.mxu0 0.0
    %662 = vmatprep.subr.mxu0 0.0
    %663 = vmatpush1.msra.mxu0 0.0
    %664 = vmatprep.subr.mxu0 0.0
    %665 = vmatpush1.msra.mxu0 0.0
    %666 = vmatprep.subr.mxu0 0.0
    %667 = vmatpush1.msra.mxu0 0.0
    %668 = vmatprep.subr.mxu0 0.0
    %669 = vmatpush1.msra.mxu0 0.0
    %670 = vmatprep.subr.mxu0 0.0
    %671 = vmatpush1.msra.mxu0 0.0
    %672 = vmatprep.subr.mxu0 0.0
    %673 = vmatpush1.msra.mxu0 0.0
    %674 = vmatprep.subr.mxu0 0.0
    %675 = vmatpush1.msra.mxu0 0.0
    %676 = vmatprep.subr.mxu0 0.0
    %677 = vmatpush1.msra.mxu0 0.0
    %678 = vmatprep.subr.mxu0 0.0
    %679 = vmatpush1.msra.mxu0 0.0
    %680 = vmatprep.subr.mxu0 0.0
    %681 = vmatpush1.msra.mxu0 0.0
    %682 = vmatprep.subr.mxu0 0.0
    %683 = vmatpush1.msra.mxu0 0.0
    %684 = vmatprep.subr.mxu0 0.0
    %685 = vmatpush1.msra.mxu0 0.0
    %686 = vmatprep.subr.mxu0 0.0
    %687 = vmatpush1.msra.mxu0 0.0
    %688 = vmatprep.subr.mxu0 0.0
    %689 = vmatpush1.msra.mxu0 0.0
    %690 = vmatprep.subr.mxu0 0.0
    %691 = vmatpush1.msra.mxu0 0.0
    %692 = vmatprep.subr.mxu0 0.0
    %693 = vmatpush1.msra.mxu0 0.0
    %694 = vmatprep.subr.mxu0 0.0
    %695 = vmatpush1.msra.mxu0 0.0
    %696 = vmatprep.subr.mxu0 0.0
    %697 = vmatpush1.msra.mxu0 0.0
    %698 = vmatprep.subr.mxu0 0.0
    %699 = vmatpush1.msra.mxu0 0.0
    %700 = vmatprep.subr.mxu0 0.0
    %701 = vmatpush1.msra.mxu0 0.0
    %702 = vmatprep.subr.mxu0 0.0
    %703 = vmatpush1.msra.mxu0 0.0
    %704 = vmatprep.subr.mxu0 0.0
    %705 = vmatpush1.msra.mxu0 0.0
    %706 = vmatprep.subr.mxu0 0.0
    %707 = vmatpush1.msra.mxu0 0.0
    %708 = vmatprep.mubr.f32.mxu0 0.0
    %709 = vmatmul.mubr.f32.gmra.mrb[0].mxu0 %v642
    %v710 = vpop.f32.mrb[0].mxu0
    %v711 = vadd.f32 0.0, %v710
    %v712 = vpop.f32.mrb[0].mxu0
    %713 = vdwg.mxu0
    %v714 = vadd.f32 %v33, %v711
    %716 = vrot.lane.b32.xlu0 %v77, 96
    %v717 = vpop.permute.xlu0 %716
    %v719 = vadd.f32 %v714, %v717
    %v720 = vsel %vm50, %v719, 0.0
    %721 = vadd.xlane.f32.xlu0 %v720
    %v722 = vpop.xlane.xlu0 %721
    %v723 = vmul.f32 %v722, %v54
    %v724 = vsub.f32 %v719, %v723
    %v725 = vmul.f32 %v724, %v724
    %v726 = vsel %vm50, %v725, 0.0
    %727 = vadd.xlane.f32.xlu0 %v726
    %v728 = vpop.xlane.xlu0 %727
    %v729 = vmul.f32 %v728, %v54
    %v730 = vadd.f32 %v729, 1e-05
    %v731 = vrsqrt.pop %v730
    %v732 = vmul.f32 %v724, %v731
    %733 = vrot.lane.b32.xlu0 %v77, 64
    %v734 = vpop.permute.xlu0 %733
    %v736 = vmul.f32 %v732, %v734
    %737 = vrot.lane.b32.xlu0 %v77, 32
    %v738 = vpop.permute.xlu0 %737
    %v740 = vadd.f32 %v736, %v738
    %v741 = vld [vmem:[%s1 + $0x48] sm:$0xc]
    %v742 = vld [vmem:[%s1 + $0x4c] sm:$0xf]
    %v743 = vld [vmem:[%s1 + $0x50] sm:$0xf]
    %v744 = vld [vmem:[%s1 + $0x54] sm:$0xf]
    %v745 = vld [vmem:[%s1 + $0x58] sm:$0x3]
    %v746 = vunpack.c.l.bf16 %v741
    %v747 = vunpack.c.l.bf16 %v742
    %v748 = vunpack.c.l.bf16 %v743
    %v749 = vunpack.c.l.bf16 %v744
    %v750 = vunpack.c.l.bf16 %v745
    %v751 = vlaneseq
    %v752 = vshrl.u32 %v751, 7
    %v753 = vsub.s32 4, %v752
    %v754 = vrot.slane %v49, %v753
    %v760 = vrot.slane %v746, 4
    %v761 = vrot.slane %v747, 4
    %v762 = vsel %vm24, %v760, %v761
    %v763 = vrot.slane %v748, 4
    %v764 = vsel %vm24, %v761, %v763
    %v765 = vrot.slane %v749, 4
    %v766 = vsel %vm24, %v763, %v765
    %v767 = vrot.slane %v750, 4
    %v768 = vsel %vm24, %v765, %v767
    %v774 = vsel %vm119, %v740, 0
    %776 = vmatprep.subr.mxu0 0.0
    %777 = vmatpush1.msra.mxu0 %v762
    %778 = vmatprep.subr.mxu0 0.0
    %779 = vmatpush1.msra.mxu0 %v764
    %780 = vmatprep.subr.mxu0 0.0
    %781 = vmatpush1.msra.mxu0 %v766
    %782 = vmatprep.subr.mxu0 0.0
    %783 = vmatpush1.msra.mxu0 %v768
    %784 = vmatprep.subr.mxu0 0.0
    %785 = vmatpush1.msra.mxu0 0.0
    %786 = vmatprep.subr.mxu0 0.0
    %787 = vmatpush1.msra.mxu0 0.0
    %788 = vmatprep.subr.mxu0 0.0
    %789 = vmatpush1.msra.mxu0 0.0
    %790 = vmatprep.subr.mxu0 0.0
    %791 = vmatpush1.msra.mxu0 0.0
    %792 = vmatprep.subr.mxu0 0.0
    %793 = vmatpush1.msra.mxu0 0.0
    %794 = vmatprep.subr.mxu0 0.0
    %795 = vmatpush1.msra.mxu0 0.0
    %796 = vmatprep.subr.mxu0 0.0
    %797 = vmatpush1.msra.mxu0 0.0
    %798 = vmatprep.subr.mxu0 0.0
    %799 = vmatpush1.msra.mxu0 0.0
    %800 = vmatprep.subr.mxu0 0.0
    %801 = vmatpush1.msra.mxu0 0.0
    %802 = vmatprep.subr.mxu0 0.0
    %803 = vmatpush1.msra.mxu0 0.0
    %804 = vmatprep.subr.mxu0 0.0
    %805 = vmatpush1.msra.mxu0 0.0
    %806 = vmatprep.subr.mxu0 0.0
    %807 = vmatpush1.msra.mxu0 0.0
    %808 = vmatprep.subr.mxu0 0.0
    %809 = vmatpush1.msra.mxu0 0.0
    %810 = vmatprep.subr.mxu0 0.0
    %811 = vmatpush1.msra.mxu0 0.0
    %812 = vmatprep.subr.mxu0 0.0
    %813 = vmatpush1.msra.mxu0 0.0
    %814 = vmatprep.subr.mxu0 0.0
    %815 = vmatpush1.msra.mxu0 0.0
    %816 = vmatprep.subr.mxu0 0.0
    %817 = vmatpush1.msra.mxu0 0.0
    %818 = vmatprep.subr.mxu0 0.0
    %819 = vmatpush1.msra.mxu0 0.0
    %820 = vmatprep.subr.mxu0 0.0
    %821 = vmatpush1.msra.mxu0 0.0
    %822 = vmatprep.subr.mxu0 0.0
    %823 = vmatpush1.msra.mxu0 0.0
    %824 = vmatprep.subr.mxu0 0.0
    %825 = vmatpush1.msra.mxu0 0.0
    %826 = vmatprep.subr.mxu0 0.0
    %827 = vmatpush1.msra.mxu0 0.0
    %828 = vmatprep.subr.mxu0 0.0
    %829 = vmatpush1.msra.mxu0 0.0
    %830 = vmatprep.subr.mxu0 0.0
    %831 = vmatpush1.msra.mxu0 0.0
    %832 = vmatprep.subr.mxu0 0.0
    %833 = vmatpush1.msra.mxu0 0.0
    %834 = vmatprep.subr.mxu0 0.0
    %835 = vmatpush1.msra.mxu0 0.0
    %836 = vmatprep.subr.mxu0 0.0
    %837 = vmatpush1.msra.mxu0 0.0
    %838 = vmatprep.subr.mxu0 0.0
    %839 = vmatpush1.msra.mxu0 0.0
    %840 = vmatprep.mubr.f32.mxu0 0.0
    %841 = vmatmul.mubr.f32.gmra.mrb[0].mxu0 %v774
    %v842 = vpop.f32.mrb[0].mxu0
    %v843 = vadd.f32 %v754, %v842
    %v844 = vpop.f32.mrb[0].mxu0
    %845 = vdwg.mxu0
    %v846 = vmul.f32 %v843, %v843
    %v847 = vmul.f32 %v843, %v846
    %v848 = vmul.f32 %v847, 0.044715
    %v849 = vadd.f32 %v843, %v848
    %v850 = vmul.f32 %v849, 0.7978846
    %v851 = vtanh.pop %v850
    %v852 = vadd.f32 %v851, 1.0
    %v853 = vmul.f32 %v852, 0.5
    %v854 = vmul.f32 %v843, %v853
    %v855 = vld [vmem:[%s1] sm:$0xf]
    %v856 = vld [vmem:[%s1 + $0x4] sm:$0xf]
    %v857 = vld [vmem:[%s1 + $0x8] sm:$0xf]
    %v858 = vld [vmem:[%s1 + $0xc] sm:$0xf]
    %v859 = vld [vmem:[%s1 + $0x10] sm:$0xf]
    %v860 = vld [vmem:[%s1 + $0x14] sm:$0xf]
    %v861 = vld [vmem:[%s1 + $0x18] sm:$0xf]
    %v862 = vld [vmem:[%s1 + $0x1c] sm:$0xf]
    %v863 = vunpack.c.l.bf16 %v855
    %v864 = vunpack.c.l.bf16 %v856
    %v865 = vunpack.c.l.bf16 %v857
    %v866 = vunpack.c.l.bf16 %v858
    %v867 = vunpack.c.l.bf16 %v859
    %v868 = vunpack.c.l.bf16 %v860
    %v869 = vunpack.c.l.bf16 %v861
    %v870 = vunpack.c.l.bf16 %v862
    %v871 = vld [vmem:[%s1 + $0x6c] sm:$0x8]
    %v872 = vunpack.c.l.bf16 %v871
    %v873 = vlaneseq
    %v874 = vshrl.u32 %v873, 7
    %v875 = vsub.s32 6, %v874
    %v876 = vrot.slane %v872, %v875
    %885 = vrot.lane.b32.xlu0 %v863, 120
    %v886 = vpop.permute.xlu0 %885
    %887 = vrot.lane.b32.xlu0 %v864, 120
    %v888 = vpop.permute.xlu0 %887
    %889 = vrot.lane.b32.xlu0 %v865, 120
    %v890 = vpop.permute.xlu0 %889
    %891 = vrot.lane.b32.xlu0 %v866, 120
    %v892 = vpop.permute.xlu0 %891
    %893 = vrot.lane.b32.xlu0 %v867, 120
    %v894 = vpop.permute.xlu0 %893
    %895 = vrot.lane.b32.xlu0 %v868, 120
    %v896 = vpop.permute.xlu0 %895
    %897 = vrot.lane.b32.xlu0 %v869, 120
    %v898 = vpop.permute.xlu0 %897
    %899 = vrot.lane.b32.xlu0 %v870, 120
    %v900 = vpop.permute.xlu0 %899
    %vm909 = vcmask 523264
    %v911 = vsel %vm909, %v854, 0
    %913 = vmatprep.subr.mxu0 0.0
    %914 = vmatpush1.msra.mxu0 %v886
    %915 = vmatprep.subr.mxu0 0.0
    %916 = vmatpush1.msra.mxu0 %v888
    %917 = vmatprep.subr.mxu0 0.0
    %918 = vmatpush1.msra.mxu0 %v890
    %919 = vmatprep.subr.mxu0 0.0
    %920 = vmatpush1.msra.mxu0 %v892
    %921 = vmatprep.subr.mxu0 0.0
    %922 = vmatpush1.msra.mxu0 %v894
    %923 = vmatprep.subr.mxu0 0.0
    %924 = vmatpush1.msra.mxu0 %v896
    %925 = vmatprep.subr.mxu0 0.0
    %926 = vmatpush1.msra.mxu0 %v898
    %927 = vmatprep.subr.mxu0 0.0
    %928 = vmatpush1.msra.mxu0 %v900
    %929 = vmatprep.subr.mxu0 0.0
    %930 = vmatpush1.msra.mxu0 0.0
    %931 = vmatprep.subr.mxu0 0.0
    %932 = vmatpush1.msra.mxu0 0.0
    %933 = vmatprep.subr.mxu0 0.0
    %934 = vmatpush1.msra.mxu0 0.0
    %935 = vmatprep.subr.mxu0 0.0
    %936 = vmatpush1.msra.mxu0 0.0
    %937 = vmatprep.subr.mxu0 0.0
    %938 = vmatpush1.msra.mxu0 0.0
    %939 = vmatprep.subr.mxu0 0.0
    %940 = vmatpush1.msra.mxu0 0.0
    %941 = vmatprep.subr.mxu0 0.0
    %942 = vmatpush1.msra.mxu0 0.0
    %943 = vmatprep.subr.mxu0 0.0
    %944 = vmatpush1.msra.mxu0 0.0
    %945 = vmatprep.subr.mxu0 0.0
    %946 = vmatpush1.msra.mxu0 0.0
    %947 = vmatprep.subr.mxu0 0.0
    %948 = vmatpush1.msra.mxu0 0.0
    %949 = vmatprep.subr.mxu0 0.0
    %950 = vmatpush1.msra.mxu0 0.0
    %951 = vmatprep.subr.mxu0 0.0
    %952 = vmatpush1.msra.mxu0 0.0
    %953 = vmatprep.subr.mxu0 0.0
    %954 = vmatpush1.msra.mxu0 0.0
    %955 = vmatprep.subr.mxu0 0.0
    %956 = vmatpush1.msra.mxu0 0.0
    %957 = vmatprep.subr.mxu0 0.0
    %958 = vmatpush1.msra.mxu0 0.0
    %959 = vmatprep.subr.mxu0 0.0
    %960 = vmatpush1.msra.mxu0 0.0
    %961 = vmatprep.subr.mxu0 0.0
    %962 = vmatpush1.msra.mxu0 0.0
    %963 = vmatprep.subr.mxu0 0.0
    %964 = vmatpush1.msra.mxu0 0.0
    %965 = vmatprep.subr.mxu0 0.0
    %966 = vmatpush1.msra.mxu0 0.0
    %967 = vmatprep.subr.mxu0 0.0
    %968 = vmatpush1.msra.mxu0 0.0
    %969 = vmatprep.subr.mxu0 0.0
    %970 = vmatpush1.msra.mxu0 0.0
    %971 = vmatprep.subr.mxu0 0.0
    %972 = vmatpush1.msra.mxu0 0.0
    %973 = vmatprep.subr.mxu0 0.0
    %974 = vmatpush1.msra.mxu0 0.0
    %975 = vmatprep.subr.mxu0 0.0
    %976 = vmatpush1.msra.mxu0 0.0
    %977 = vmatprep.mubr.f32.mxu0 0.0
    %978 = vmatmul.mubr.f32.gmra.mrb[0].mxu0 %v911
    %v979 = vpop.f32.mrb[0].mxu0
    %v980 = vadd.f32 %v876, %v979
    %v981 = vpop.f32.mrb[0].mxu0
    %982 = vdwg.mxu0
    %v983 = vadd.f32 %v719, %v980
    %v984 = vsel %vm50, %v983, 0.0
    %985 = vadd.xlane.f32.xlu0 %v984
    %v986 = vpop.xlane.xlu0 %985
    %v987 = vmul.f32 %v986, %v54
    %v988 = vsub.f32 %v983, %v987
    %v989 = vmul.f32 %v988, %v988
    %v990 = vsel %vm50, %v989, 0.0
    %991 = vadd.xlane.f32.xlu0 %v990
    %v992 = vpop.xlane.xlu0 %991
    %v993 = vmul.f32 %v992, %v54
    %v994 = vadd.f32 %v993, 1e-05
    %v995 = vrsqrt.pop %v994
    %v996 = vmul.f32 %v988, %v995
    %998 = vrot.lane.b32.xlu0 %v876, 96
    %v999 = vpop.permute.xlu0 %998
    %v1001 = vmul.f32 %v996, %v999
    %1002 = vrot.lane.b32.xlu0 %v876, 64
    %v1003 = vpop.permute.xlu0 %1002
    %v1005 = vadd.f32 %v1001, %v1003
    %v1011 = vsel %vm119, %v1005, 0
    %1013 = vmatprep.subr.mxu0 0.0
    %1014 = vmatpush1.msra.mxu0 %v622
    %1015 = vmatprep.subr.mxu0 0.0
    %1016 = vmatpush1.msra.mxu0 %v624
    %1017 = vmatprep.subr.mxu0 0.0
    %1018 = vmatpush1.msra.mxu0 %v626
    %1019 = vmatprep.subr.mxu0 0.0
    %1020 = vmatpush1.msra.mxu0 %v628
    %1021 = vmatprep.subr.mxu0 0.0
    %1022 = vmatpush1.msra.mxu0 0.0
    %1023 = vmatprep.subr.mxu0 0.0
    %1024 = vmatpush1.msra.mxu0 0.0
    %1025 = vmatprep.subr.mxu0 0.0
    %1026 = vmatpush1.msra.mxu0 0.0
    %1027 = vmatprep.subr.mxu0 0.0
    %1028 = vmatpush1.msra.mxu0 0.0
    %1029 = vmatprep.subr.mxu0 0.0
    %1030 = vmatpush1.msra.mxu0 0.0
    %1031 = vmatprep.subr.mxu0 0.0
    %1032 = vmatpush1.msra.mxu0 0.0
    %1033 = vmatprep.subr.mxu0 0.0
    %1034 = vmatpush1.msra.mxu0 0.0
    %1035 = vmatprep.subr.mxu0 0.0
    %1036 = vmatpush1.msra.mxu0 0.0
    %1037 = vmatprep.subr.mxu0 0.0
    %1038 = vmatpush1.msra.mxu0 0.0
    %1039 = vmatprep.subr.mxu0 0.0
    %1040 = vmatpush1.msra.mxu0 0.0
    %1041 = vmatprep.subr.mxu0 0.0
    %1042 = vmatpush1.msra.mxu0 0.0
    %1043 = vmatprep.subr.mxu0 0.0
    %1044 = vmatpush1.msra.mxu0 0.0
    %1045 = vmatprep.subr.mxu0 0.0
    %1046 = vmatpush1.msra.mxu0 0.0
    %1047 = vmatprep.subr.mxu0 0.0
    %1048 = vmatpush1.msra.mxu0 0.0
    %1049 = vmatprep.subr.mxu0 0.0
    %1050 = vmatpush1.msra.mxu0 0.0
    %1051 = vmatprep.subr.mxu0 0.0
    %1052 = vmatpush1.msra.mxu0 0.0
    %1053 = vmatprep.subr.mxu0 0.0
    %1054 = vmatpush1.msra.mxu0 0.0
    %1055 = vmatprep.subr.mxu0 0.0
    %1056 = vmatpush1.msra.mxu0 0.0
    %1057 = vmatprep.subr.mxu0 0.0
    %1058 = vmatpush1.msra.mxu0 0.0
    %1059 = vmatprep.subr.mxu0 0.0
    %1060 = vmatpush1.msra.mxu0 0.0
    %1061 = vmatprep.subr.mxu0 0.0
    %1062 = vmatpush1.msra.mxu0 0.0
    %1063 = vmatprep.subr.mxu0 0.0
    %1064 = vmatpush1.msra.mxu0 0.0
    %1065 = vmatprep.subr.mxu0 0.0
    %1066 = vmatpush1.msra.mxu0 0.0
    %1067 = vmatprep.subr.mxu0 0.0
    %1068 = vmatpush1.msra.mxu0 0.0
    %1069 = vmatprep.subr.mxu0 0.0
    %1070 = vmatpush1.msra.mxu0 0.0
    %1071 = vmatprep.subr.mxu0 0.0
    %1072 = vmatpush1.msra.mxu0 0.0
    %1073 = vmatprep.subr.mxu0 0.0
    %1074 = vmatpush1.msra.mxu0 0.0
    %1075 = vmatprep.subr.mxu0 0.0
    %1076 = vmatpush1.msra.mxu0 0.0
    %1077 = vmatprep.mubr.f32.mxu0 0.0
    %1078 = vmatmul.mubr.f32.gmra.mrb[0].mxu0 %v1011
    %v1079 = vpop.f32.mrb[0].mxu0
    %v1080 = vadd.f32 %v68, %v1079
    %v1081 = vpop.f32.mrb[0].mxu0
    %1082 = vdwg.mxu0
    %v1084 = vrot.slane %v1080, 2
    %v1086 = vrot.slane %v1080, 4
    %v1088 = vrot.slane %v1080, 6
    %v1090 = vsel %vm200, %v1080, %v1084
    %v1091 = vsel %vm24, %v1084, %v1086
    %v1092 = vsel %vm203, %v1086, %v1088
    %v1093 = vmul.f32 %v1090, %v212
    %v1094 = vmul.f32 %v1091, %v214
    %v1095 = vmul.f32 %v1092, %v216
    %v1096 = vmul.f32 %v1090, %v218
    %v1097 = vmul.f32 %v1091, %v220
    %v1098 = vmul.f32 %v1092, %v222
    %1099 = vrot.lane.b32.xlu0 %v1080, 96
    %v1100 = vpop.permute.xlu0 %1099
    %v1102 = vsel %vm119, %v1093, 0
    %v1105 = vsel %vm119, %v1094, 0
    %v1108 = vsel %vm119, %v1095, 0
    %v1111 = vsel %vm119, %v1096, 0
    %v1114 = vsel %vm119, %v1097, 0
    %v1117 = vsel %vm119, %v1098, 0
    %v1119 = vsel %vm119, %v1100, 0
    %1121 = vmatprep.subr.mxu0 0.0
    %1122 = vmatpush1.xpose.msra.mxu0 %v1119
    %1123 = vmatprep.subr.mxu0 0.0
    %1124 = vmatpush1.xpose.msra.mxu0 0.0
    %1125 = vmatprep.subr.mxu0 0.0
    %1126 = vmatpush1.xpose.msra.mxu0 0.0
    %1127 = vmatprep.subr.mxu0 0.0
    %1128 = vmatpush1.xpose.msra.mxu0 0.0
    %1129 = vmatprep.subr.mxu0 0.0
    %1130 = vmatpush1.xpose.msra.mxu0 0.0
    %1131 = vmatprep.subr.mxu0 0.0
    %1132 = vmatpush1.xpose.msra.mxu0 0.0
    %1133 = vmatprep.subr.mxu0 0.0
    %1134 = vmatpush1.xpose.msra.mxu0 0.0
    %1135 = vmatprep.subr.mxu0 0.0
    %1136 = vmatpush1.xpose.msra.mxu0 0.0
    %1137 = vmatprep.subr.mxu0 0.0
    %1138 = vmatpush1.xpose.msra.mxu0 0.0
    %1139 = vmatprep.subr.mxu0 0.0
    %1140 = vmatpush1.xpose.msra.mxu0 0.0
    %1141 = vmatprep.subr.mxu0 0.0
    %1142 = vmatpush1.xpose.msra.mxu0 0.0
    %1143 = vmatprep.subr.mxu0 0.0
    %1144 = vmatpush1.xpose.msra.mxu0 0.0
    %1145 = vmatprep.subr.mxu0 0.0
    %1146 = vmatpush1.xpose.msra.mxu0 0.0
    %1147 = vmatprep.subr.mxu0 0.0
    %1148 = vmatpush1.xpose.msra.mxu0 0.0
    %1149 = vmatprep.subr.mxu0 0.0
    %1150 = vmatpush1.xpose.msra.mxu0 0.0
    %1151 = vmatprep.subr.mxu0 0.0
    %1152 = vmatpush1.xpose.msra.mxu0 0.0
    %1153 = vmatprep.subr.mxu0 0.0
    %1154 = vmatpush1.xpose.msra.mxu0 0.0
    %1155 = vmatprep.subr.mxu0 0.0
    %1156 = vmatpush1.xpose.msra.mxu0 0.0
    %1157 = vmatprep.subr.mxu0 0.0
    %1158 = vmatpush1.xpose.msra.mxu0 0.0
    %1159 = vmatprep.subr.mxu0 0.0
    %1160 = vmatpush1.xpose.msra.mxu0 0.0
    %1161 = vmatprep.subr.mxu0 0.0
    %1162 = vmatpush1.xpose.msra.mxu0 0.0
    %1163 = vmatprep.subr.mxu0 0.0
    %1164 = vmatpush1.xpose.msra.mxu0 0.0
    %1165 = vmatprep.subr.mxu0 0.0
    %1166 = vmatpush1.xpose.msra.mxu0 0.0
    %1167 = vmatprep.subr.mxu0 0.0
    %1168 = vmatpush1.xpose.msra.mxu0 0.0
    %1169 = vmatprep.subr.mxu0 0.0
    %1170 = vmatpush1.xpose.msra.mxu0 0.0
    %1171 = vmatprep.subr.mxu0 0.0
    %1172 = vmatpush1.xpose.msra.mxu0 0.0
    %1173 = vmatprep.subr.mxu0 0.0
    %1174 = vmatpush1.xpose.msra.mxu0 0.0
    %1175 = vmatprep.subr.mxu0 0.0
    %1176 = vmatpush1.xpose.msra.mxu0 0.0
    %1177 = vmatprep.subr.mxu0 0.0
    %1178 = vmatpush1.xpose.msra.mxu0 0.0
    %1179 = vmatprep.subr.mxu0 0.0
    %1180 = vmatpush1.xpose.msra.mxu0 0.0
    %1181 = vmatprep.subr.mxu0 0.0
    %1182 = vmatpush1.xpose.msra.mxu0 0.0
    %1183 = vmatprep.subr.mxu0 0.0
    %1184 = vmatpush1.xpose.msra.mxu0 0.0
    %1185 = vmatprep.mubr.f32.mxu0 0.0
    %1186 = vmatmul.mubr.f32.gmra.mrb[0].mxu0 %v1102
    %v1187 = vpop.f32.mrb[0].mxu0
    %v1188 = vadd.f32 0.0, %v1187
    %v1189 = vpop.f32.mrb[0].mxu0
    %1190 = vmatprep.mubr.f32.mxu0 0.0
    %1191 = vmatmul.mubr.f32.gmra.mrb[0].mxu0 %v1105
    %v1192 = vpop.f32.mrb[0].mxu0
    %v1193 = vadd.f32 0.0, %v1192
    %v1194 = vpop.f32.mrb[0].mxu0
    %1195 = vmatprep.mubr.f32.mxu0 0.0
    %1196 = vmatmul.mubr.f32.gmra.mrb[0].mxu0 %v1108
    %v1197 = vpop.f32.mrb[0].mxu0
    %v1198 = vadd.f32 0.0, %v1197
    %v1199 = vpop.f32.mrb[0].mxu0
    %1200 = vmatprep.mubr.f32.mxu0 0.0
    %1201 = vmatmul.mubr.f32.gmra.mrb[0].mxu0 %v1111
    %v1202 = vpop.f32.mrb[0].mxu0
    %v1203 = vadd.f32 0.0, %v1202
    %v1204 = vpop.f32.mrb[0].mxu0
    %1205 = vmatprep.mubr.f32.mxu0 0.0
    %1206 = vmatmul.mubr.f32.gmra.mrb[0].mxu0 %v1114
    %v1207 = vpop.f32.mrb[0].mxu0
    %v1208 = vadd.f32 0.0, %v1207
    %v1209 = vpop.f32.mrb[0].mxu0
    %1210 = vmatprep.mubr.f32.mxu0 0.0
    %1211 = vmatmul.mubr.f32.gmra.mrb[0].mxu0 %v1117
    %v1212 = vpop.f32.mrb[0].mxu0
    %v1213 = vadd.f32 0.0, %v1212
    %v1214 = vpop.f32.mrb[0].mxu0
    %1215 = vdwg.mxu0
    %v1216 = vmul.f32 %v1188, 0.5
    %v1217 = vmul.f32 %v1193, 0.5
    %v1218 = vmul.f32 %v1198, 0.5
    %v1219 = vmul.f32 %v1203, 0.5
    %v1220 = vmul.f32 %v1208, 0.5
    %v1221 = vmul.f32 %v1213, 0.5
    %v1222 = vadd.f32 %v1216, %v359
    %v1223 = vadd.f32 %v1217, %v361
    %v1224 = vadd.f32 %v1218, %v363
    %v1225 = vadd.f32 %v1219, %v365
    %v1226 = vadd.f32 %v1220, %v367
    %v1227 = vadd.f32 %v1221, %v369
    %v1228 = vsel %vm382, %v1222, -inf
    %1229 = vmax.xlane.f32.xlu0 %v1228
    %v1230 = vpop.xlane.xlu0 %1229
    %v1231 = vsel %vm382, %v1223, -inf
    %1232 = vmax.xlane.f32.xlu0 %v1231
    %v1233 = vpop.xlane.xlu0 %1232
    %v1234 = vsel %vm382, %v1224, -inf
    %1235 = vmax.xlane.f32.xlu0 %v1234
    %v1236 = vpop.xlane.xlu0 %1235
    %v1237 = vsel %vm382, %v1225, -inf
    %1238 = vmax.xlane.f32.xlu0 %v1237
    %v1239 = vpop.xlane.xlu0 %1238
    %v1240 = vsel %vm382, %v1226, -inf
    %1241 = vmax.xlane.f32.xlu0 %v1240
    %v1242 = vpop.xlane.xlu0 %1241
    %v1243 = vsel %vm382, %v1227, -inf
    %1244 = vmax.xlane.f32.xlu0 %v1243
    %v1245 = vpop.xlane.xlu0 %1244
    %v1246 = vsub.f32 %v1222, %v1230
    %v1247 = vsub.f32 %v1223, %v1233
    %v1248 = vsub.f32 %v1224, %v1236
    %v1249 = vsub.f32 %v1225, %v1239
    %v1250 = vsub.f32 %v1226, %v1242
    %v1251 = vsub.f32 %v1227, %v1245
    %v1252 = vmul.f32 %v1246, 1.442695
    %v1253 = vpow.pop %v1252
    %v1254 = vmul.f32 %v1247, 1.442695
    %v1255 = vpow.pop %v1254
    %v1256 = vmul.f32 %v1248, 1.442695
    %v1257 = vpow.pop %v1256
    %v1258 = vmul.f32 %v1249, 1.442695
    %v1259 = vpow.pop %v1258
    %v1260 = vmul.f32 %v1250, 1.442695
    %v1261 = vpow.pop %v1260
    %v1262 = vmul.f32 %v1251, 1.442695
    %v1263 = vpow.pop %v1262
    %v1264 = vsel %vm382, %v1253, 0.0
    %1265 = vadd.xlane.f32.xlu0 %v1264
    %v1266 = vpop.xlane.xlu0 %1265
    %v1267 = vsel %vm382, %v1255, 0.0
    %1268 = vadd.xlane.f32.xlu0 %v1267
    %v1269 = vpop.xlane.xlu0 %1268
    %v1270 = vsel %vm382, %v1257, 0.0
    %1271 = vadd.xlane.f32.xlu0 %v1270
    %v1272 = vpop.xlane.xlu0 %1271
    %v1273 = vsel %vm382, %v1259, 0.0
    %1274 = vadd.xlane.f32.xlu0 %v1273
    %v1275 = vpop.xlane.xlu0 %1274
    %v1276 = vsel %vm382, %v1261, 0.0
    %1277 = vadd.xlane.f32.xlu0 %v1276
    %v1278 = vpop.xlane.xlu0 %1277
    %v1279 = vsel %vm382, %v1263, 0.0
    %1280 = vadd.xlane.f32.xlu0 %v1279
    %v1281 = vpop.xlane.xlu0 %1280
    %v1282 = vrcp.pop %v1266
    %v1283 = vrcp.pop %v1269
    %v1284 = vrcp.pop %v1272
    %v1285 = vrcp.pop %v1275
    %v1286 = vrcp.pop %v1278
    %v1287 = vrcp.pop %v1281
    %v1288 = vmul.f32 %v1253, %v1282
    %v1289 = vmul.f32 %v1255, %v1283
    %v1290 = vmul.f32 %v1257, %v1284
    %v1291 = vmul.f32 %v1259, %v1285
    %v1292 = vmul.f32 %v1261, %v1286
    %v1293 = vmul.f32 %v1263, %v1287
    %1294 = vrot.lane.b32.xlu0 %v1080, 64
    %v1295 = vpop.permute.xlu0 %1294
    %v1297 = vsel %vm382, %v1288, 0
    %v1300 = vsel %vm382, %v1289, 0
    %v1303 = vsel %vm382, %v1290, 0
    %v1306 = vsel %vm382, %v1291, 0
    %v1309 = vsel %vm382, %v1292, 0
    %v1312 = vsel %vm382, %v1293, 0
    %v1314 = vsel %vm200, %v1295, 0
    %1316 = vmatprep.subr.mxu0 0.0
    %1317 = vmatpush1.msra.mxu0 %v1314
    %1318 = vmatprep.subr.mxu0 0.0
    %1319 = vmatpush1.msra.mxu0 0.0
    %1320 = vmatprep.subr.mxu0 0.0
    %1321 = vmatpush1.msra.mxu0 0.0
    %1322 = vmatprep.subr.mxu0 0.0
    %1323 = vmatpush1.msra.mxu0 0.0
    %1324 = vmatprep.subr.mxu0 0.0
    %1325 = vmatpush1.msra.mxu0 0.0
    %1326 = vmatprep.subr.mxu0 0.0
    %1327 = vmatpush1.msra.mxu0 0.0
    %1328 = vmatprep.subr.mxu0 0.0
    %1329 = vmatpush1.msra.mxu0 0.0
    %1330 = vmatprep.subr.mxu0 0.0
    %1331 = vmatpush1.msra.mxu0 0.0
    %1332 = vmatprep.subr.mxu0 0.0
    %1333 = vmatpush1.msra.mxu0 0.0
    %1334 = vmatprep.subr.mxu0 0.0
    %1335 = vmatpush1.msra.mxu0 0.0
    %1336 = vmatprep.subr.mxu0 0.0
    %1337 = vmatpush1.msra.mxu0 0.0
    %1338 = vmatprep.subr.mxu0 0.0
    %1339 = vmatpush1.msra.mxu0 0.0
    %1340 = vmatprep.subr.mxu0 0.0
    %1341 = vmatpush1.msra.mxu0 0.0
    %1342 = vmatprep.subr.mxu0 0.0
    %1343 = vmatpush1.msra.mxu0 0.0
    %1344 = vmatprep.subr.mxu0 0.0
    %1345 = vmatpush1.msra.mxu0 0.0
    %1346 = vmatprep.subr.mxu0 0.0
    %1347 = vmatpush1.msra.mxu0 0.0
    %1348 = vmatprep.subr.mxu0 0.0
    %1349 = vmatpush1.msra.mxu0 0.0
    %1350 = vmatprep.subr.mxu0 0.0
    %1351 = vmatpush1.msra.mxu0 0.0
    %1352 = vmatprep.subr.mxu0 0.0
    %1353 = vmatpush1.msra.mxu0 0.0
    %1354 = vmatprep.subr.mxu0 0.0
    %1355 = vmatpush1.msra.mxu0 0.0
    %1356 = vmatprep.subr.mxu0 0.0
    %1357 = vmatpush1.msra.mxu0 0.0
    %1358 = vmatprep.subr.mxu0 0.0
    %1359 = vmatpush1.msra.mxu0 0.0
    %1360 = vmatprep.subr.mxu0 0.0
    %1361 = vmatpush1.msra.mxu0 0.0
    %1362 = vmatprep.subr.mxu0 0.0
    %1363 = vmatpush1.msra.mxu0 0.0
    %1364 = vmatprep.subr.mxu0 0.0
    %1365 = vmatpush1.msra.mxu0 0.0
    %1366 = vmatprep.subr.mxu0 0.0
    %1367 = vmatpush1.msra.mxu0 0.0
    %1368 = vmatprep.subr.mxu0 0.0
    %1369 = vmatpush1.msra.mxu0 0.0
    %1370 = vmatprep.subr.mxu0 0.0
    %1371 = vmatpush1.msra.mxu0 0.0
    %1372 = vmatprep.subr.mxu0 0.0
    %1373 = vmatpush1.msra.mxu0 0.0
    %1374 = vmatprep.subr.mxu0 0.0
    %1375 = vmatpush1.msra.mxu0 0.0
    %1376 = vmatprep.subr.mxu0 0.0
    %1377 = vmatpush1.msra.mxu0 0.0
    %1378 = vmatprep.subr.mxu0 0.0
    %1379 = vmatpush1.msra.mxu0 0.0
    %1380 = vmatprep.mubr.f32.mxu0 0.0
    %1381 = vmatmul.mubr.f32.gmra.mrb[0].mxu0 %v1297
    %v1382 = vpop.f32.mrb[0].mxu0
    %v1383 = vadd.f32 0.0, %v1382
    %v1384 = vpop.f32.mrb[0].mxu0
    %1385 = vmatprep.mubr.f32.mxu0 0.0
    %1386 = vmatmul.mubr.f32.gmra.mrb[0].mxu0 %v1300
    %v1387 = vpop.f32.mrb[0].mxu0
    %v1388 = vadd.f32 0.0, %v1387
    %v1389 = vpop.f32.mrb[0].mxu0
    %1390 = vmatprep.mubr.f32.mxu0 0.0
    %1391 = vmatmul.mubr.f32.gmra.mrb[0].mxu0 %v1303
    %v1392 = vpop.f32.mrb[0].mxu0
    %v1393 = vadd.f32 0.0, %v1392
    %v1394 = vpop.f32.mrb[0].mxu0
    %1395 = vmatprep.mubr.f32.mxu0 0.0
    %1396 = vmatmul.mubr.f32.gmra.mrb[0].mxu0 %v1306
    %v1397 = vpop.f32.mrb[0].mxu0
    %v1398 = vadd.f32 0.0, %v1397
    %v1399 = vpop.f32.mrb[0].mxu0
    %1400 = vmatprep.mubr.f32.mxu0 0.0
    %1401 = vmatmul.mubr.f32.gmra.mrb[0].mxu0 %v1309
    %v1402 = vpop.f32.mrb[0].mxu0
    %v1403 = vadd.f32 0.0, %v1402
    %v1404 = vpop.f32.mrb[0].mxu0
    %1405 = vmatprep.mubr.f32.mxu0 0.0
    %1406 = vmatmul.mubr.f32.gmra.mrb[0].mxu0 %v1312
    %v1407 = vpop.f32.mrb[0].mxu0
    %v1408 = vadd.f32 0.0, %v1407
    %v1409 = vpop.f32.mrb[0].mxu0
    %1410 = vdwg.mxu0
    %v1411 = vmul.f32 %v1383, %v212
    %v1412 = vmul.f32 %v1388, %v214
    %v1413 = vmul.f32 %v1393, %v216
    %v1414 = vmul.f32 %v1398, %v218
    %v1415 = vmul.f32 %v1403, %v220
    %v1416 = vmul.f32 %v1408, %v222
    %v1419 = vrot.slane %v1411, 6
    %v1420 = vrot.slane %v1412, 6
    %v1421 = vsel %vm203, %v1419, %v1420
    %v1423 = vadd.f32 %v1411, %v1421
    %v1425 = vrot.slane %v1412, 4
    %v1426 = vrot.slane %v1413, 4
    %v1427 = vsel %vm24, %v1425, %v1426
    %v1429 = vadd.f32 %v1423, %v1427
    %v1430 = vrot.slane %v1413, 2
    %v1432 = vadd.f32 %v1429, %v1430
    %v1433 = vadd.f32 %v1432, %v1414
    %v1436 = vrot.slane %v1414, 6
    %v1437 = vrot.slane %v1415, 6
    %v1438 = vsel %vm203, %v1436, %v1437
    %v1440 = vadd.f32 %v1433, %v1438
    %v1442 = vrot.slane %v1415, 4
    %v1443 = vrot.slane %v1416, 4
    %v1444 = vsel %vm24, %v1442, %v1443
    %v1446 = vadd.f32 %v1440, %v1444
    %v1447 = vrot.slane %v1416, 2
    %v1449 = vadd.f32 %v1446, %v1447
    %v1450 = vld [vmem:[%s1 + $0x58] sm:$0xc]
    %v1451 = vld [vmem:[%s1 + $0x5c] sm:$0xf]
    %v1452 = vld [vmem:[%s1 + $0x60] sm:$0xf]
    %v1453 = vld [vmem:[%s1 + $0x64] sm:$0xf]
    %v1454 = vld [vmem:[%s1 + $0x68] sm:$0x3]
    %v1455 = vunpack.c.l.bf16 %v1450
    %v1456 = vunpack.c.l.bf16 %v1451
    %v1457 = vunpack.c.l.bf16 %v1452
    %v1458 = vunpack.c.l.bf16 %v1453
    %v1459 = vunpack.c.l.bf16 %v1454
    %v1465 = vrot.slane %v1455, 4
    %v1466 = vrot.slane %v1456, 4
    %v1467 = vsel %vm24, %v1465, %v1466
    %v1468 = vrot.slane %v1457, 4
    %v1469 = vsel %vm24, %v1466, %v1468
    %v1470 = vrot.slane %v1458, 4
    %v1471 = vsel %vm24, %v1468, %v1470
    %v1472 = vrot.slane %v1459, 4
    %v1473 = vsel %vm24, %v1470, %v1472
    %v1479 = vsel %vm119, %v1449, 0
    %1481 = vmatprep.subr.mxu0 0.0
    %1482 = vmatpush1.msra.mxu0 %v1467
    %1483 = vmatprep.subr.mxu0 0.0
    %1484 = vmatpush1.msra.mxu0 %v1469
    %1485 = vmatprep.subr.mxu0 0.0
    %1486 = vmatpush1.msra.mxu0 %v1471
    %1487 = vmatprep.subr.mxu0 0.0
    %1488 = vmatpush1.msra.mxu0 %v1473
    %1489 = vmatprep.subr.mxu0 0.0
    %1490 = vmatpush1.msra.mxu0 0.0
    %1491 = vmatprep.subr.mxu0 0.0
    %1492 = vmatpush1.msra.mxu0 0.0
    %1493 = vmatprep.subr.mxu0 0.0
    %1494 = vmatpush1.msra.mxu0 0.0
    %1495 = vmatprep.subr.mxu0 0.0
    %1496 = vmatpush1.msra.mxu0 0.0
    %1497 = vmatprep.subr.mxu0 0.0
    %1498 = vmatpush1.msra.mxu0 0.0
    %1499 = vmatprep.subr.mxu0 0.0
    %1500 = vmatpush1.msra.mxu0 0.0
    %1501 = vmatprep.subr.mxu0 0.0
    %1502 = vmatpush1.msra.mxu0 0.0
    %1503 = vmatprep.subr.mxu0 0.0
    %1504 = vmatpush1.msra.mxu0 0.0
    %1505 = vmatprep.subr.mxu0 0.0
    %1506 = vmatpush1.msra.mxu0 0.0
    %1507 = vmatprep.subr.mxu0 0.0
    %1508 = vmatpush1.msra.mxu0 0.0
    %1509 = vmatprep.subr.mxu0 0.0
    %1510 = vmatpush1.msra.mxu0 0.0
    %1511 = vmatprep.subr.mxu0 0.0
    %1512 = vmatpush1.msra.mxu0 0.0
    %1513 = vmatprep.subr.mxu0 0.0
    %1514 = vmatpush1.msra.mxu0 0.0
    %1515 = vmatprep.subr.mxu0 0.0
    %1516 = vmatpush1.msra.mxu0 0.0
    %1517 = vmatprep.subr.mxu0 0.0
    %1518 = vmatpush1.msra.mxu0 0.0
    %1519 = vmatprep.subr.mxu0 0.0
    %1520 = vmatpush1.msra.mxu0 0.0
    %1521 = vmatprep.subr.mxu0 0.0
    %1522 = vmatpush1.msra.mxu0 0.0
    %1523 = vmatprep.subr.mxu0 0.0
    %1524 = vmatpush1.msra.mxu0 0.0
    %1525 = vmatprep.subr.mxu0 0.0
    %1526 = vmatpush1.msra.mxu0 0.0
    %1527 = vmatprep.subr.mxu0 0.0
    %1528 = vmatpush1.msra.mxu0 0.0
    %1529 = vmatprep.subr.mxu0 0.0
    %1530 = vmatpush1.msra.mxu0 0.0
    %1531 = vmatprep.subr.mxu0 0.0
    %1532 = vmatpush1.msra.mxu0 0.0
    %1533 = vmatprep.subr.mxu0 0.0
    %1534 = vmatpush1.msra.mxu0 0.0
    %1535 = vmatprep.subr.mxu0 0.0
    %1536 = vmatpush1.msra.mxu0 0.0
    %1537 = vmatprep.subr.mxu0 0.0
    %1538 = vmatpush1.msra.mxu0 0.0
    %1539 = vmatprep.subr.mxu0 0.0
    %1540 = vmatpush1.msra.mxu0 0.0
    %1541 = vmatprep.subr.mxu0 0.0
    %1542 = vmatpush1.msra.mxu0 0.0
    %1543 = vmatprep.subr.mxu0 0.0
    %1544 = vmatpush1.msra.mxu0 0.0
    %1545 = vmatprep.mubr.f32.mxu0 0.0
    %1546 = vmatmul.mubr.f32.gmra.mrb[0].mxu0 %v1479
    %v1547 = vpop.f32.mrb[0].mxu0
    %v1548 = vadd.f32 0.0, %v1547
    %v1549 = vpop.f32.mrb[0].mxu0
    %1550 = vdwg.mxu0
    %v1551 = vadd.f32 %v983, %v1548
    %1552 = vrot.lane.b32.xlu0 %v876, 32
    %v1553 = vpop.permute.xlu0 %1552
    %v1555 = vadd.f32 %v1551, %v1553
    %v1556 = vsel %vm50, %v1555, 0.0
    %1557 = vadd.xlane.f32.xlu0 %v1556
    %v1558 = vpop.xlane.xlu0 %1557
    %v1559 = vmul.f32 %v1558, %v54
    %v1560 = vsub.f32 %v1555, %v1559
    %v1561 = vmul.f32 %v1560, %v1560
    %v1562 = vsel %vm50, %v1561, 0.0
    %1563 = vadd.xlane.f32.xlu0 %v1562
    %v1564 = vpop.xlane.xlu0 %1563
    %v1565 = vmul.f32 %v1564, %v54
    %v1566 = vadd.f32 %v1565, 1e-05
    %v1567 = vrsqrt.pop %v1566
    %v1568 = vmul.f32 %v1560, %v1567
    %v1569 = vlaneseq
    %v1570 = vshrl.u32 %v1569, 7
    %v1571 = vsub.s32 7, %v1570
    %v1572 = vrot.slane %v872, %v1571
    %v1573 = vmul.f32 %v1568, %v1572
    %1575 = vrot.lane.b32.xlu0 %v1572, 96
    %v1576 = vpop.permute.xlu0 %1575
    %v1578 = vadd.f32 %v1573, %v1576
    %1579 = vrot.lane.b32.xlu0 %v762, 64
    %v1580 = vpop.permute.xlu0 %1579
    %1581 = vrot.lane.b32.xlu0 %v764, 64
    %v1582 = vpop.permute.xlu0 %1581
    %1583 = vrot.lane.b32.xlu0 %v766, 64
    %v1584 = vpop.permute.xlu0 %1583
    %1585 = vrot.lane.b32.xlu0 %v768, 64
    %v1586 = vpop.permute.xlu0 %1585
    %1592 = vrot.lane.b32.xlu0 %v754, 64
    %v1593 = vpop.permute.xlu0 %1592
    %v1596 = vsel %vm119, %v1578, 0
    %1598 = vmatprep.subr.mxu0 0.0
    %1599 = vmatpush1.msra.mxu0 %v1580
    %1600 = vmatprep.subr.mxu0 0.0
    %1601 = vmatpush1.msra.mxu0 %v1582
    %1602 = vmatprep.subr.mxu0 0.0
    %1603 = vmatpush1.msra.mxu0 %v1584
    %1604 = vmatprep.subr.mxu0 0.0
    %1605 = vmatpush1.msra.mxu0 %v1586
    %1606 = vmatprep.subr.mxu0 0.0
    %1607 = vmatpush1.msra.mxu0 0.0
    %1608 = vmatprep.subr.mxu0 0.0
    %1609 = vmatpush1.msra.mxu0 0.0
    %1610 = vmatprep.subr.mxu0 0.0
    %1611 = vmatpush1.msra.mxu0 0.0
    %1612 = vmatprep.subr.mxu0 0.0
    %1613 = vmatpush1.msra.mxu0 0.0
    %1614 = vmatprep.subr.mxu0 0.0
    %1615 = vmatpush1.msra.mxu0 0.0
    %1616 = vmatprep.subr.mxu0 0.0
    %1617 = vmatpush1.msra.mxu0 0.0
    %1618 = vmatprep.subr.mxu0 0.0
    %1619 = vmatpush1.msra.mxu0 0.0
    %1620 = vmatprep.subr.mxu0 0.0
    %1621 = vmatpush1.msra.mxu0 0.0
    %1622 = vmatprep.subr.mxu0 0.0
    %1623 = vmatpush1.msra.mxu0 0.0
    %1624 = vmatprep.subr.mxu0 0.0
    %1625 = vmatpush1.msra.mxu0 0.0
    %1626 = vmatprep.subr.mxu0 0.0
    %1627 = vmatpush1.msra.mxu0 0.0
    %1628 = vmatprep.subr.mxu0 0.0
    %1629 = vmatpush1.msra.mxu0 0.0
    %1630 = vmatprep.subr.mxu0 0.0
    %1631 = vmatpush1.msra.mxu0 0.0
    %1632 = vmatprep.subr.mxu0 0.0
    %1633 = vmatpush1.msra.mxu0 0.0
    %1634 = vmatprep.subr.mxu0 0.0
    %1635 = vmatpush1.msra.mxu0 0.0
    %1636 = vmatprep.subr.mxu0 0.0
    %1637 = vmatpush1.msra.mxu0 0.0
    %1638 = vmatprep.subr.mxu0 0.0
    %1639 = vmatpush1.msra.mxu0 0.0
    %1640 = vmatprep.subr.mxu0 0.0
    %1641 = vmatpush1.msra.mxu0 0.0
    %1642 = vmatprep.subr.mxu0 0.0
    %1643 = vmatpush1.msra.mxu0 0.0
    %1644 = vmatprep.subr.mxu0 0.0
    %1645 = vmatpush1.msra.mxu0 0.0
    %1646 = vmatprep.subr.mxu0 0.0
    %1647 = vmatpush1.msra.mxu0 0.0
    %1648 = vmatprep.subr.mxu0 0.0
    %1649 = vmatpush1.msra.mxu0 0.0
    %1650 = vmatprep.subr.mxu0 0.0
    %1651 = vmatpush1.msra.mxu0 0.0
    %1652 = vmatprep.subr.mxu0 0.0
    %1653 = vmatpush1.msra.mxu0 0.0
    %1654 = vmatprep.subr.mxu0 0.0
    %1655 = vmatpush1.msra.mxu0 0.0
    %1656 = vmatprep.subr.mxu0 0.0
    %1657 = vmatpush1.msra.mxu0 0.0
    %1658 = vmatprep.subr.mxu0 0.0
    %1659 = vmatpush1.msra.mxu0 0.0
    %1660 = vmatprep.subr.mxu0 0.0
    %1661 = vmatpush1.msra.mxu0 0.0
    %1662 = vmatprep.mubr.f32.mxu0 0.0
    %1663 = vmatmul.mubr.f32.gmra.mrb[0].mxu0 %v1596
    %v1664 = vpop.f32.mrb[0].mxu0
    %v1665 = vadd.f32 %v1593, %v1664
    %v1666 = vpop.f32.mrb[0].mxu0
    %1667 = vdwg.mxu0
    %v1668 = vmul.f32 %v1665, %v1665
    %v1669 = vmul.f32 %v1665, %v1668
    %v1670 = vmul.f32 %v1669, 0.044715
    %v1671 = vadd.f32 %v1665, %v1670
    %v1672 = vmul.f32 %v1671, 0.7978846
    %v1673 = vtanh.pop %v1672
    %v1674 = vadd.f32 %v1673, 1.0
    %v1675 = vmul.f32 %v1674, 0.5
    %v1676 = vmul.f32 %v1665, %v1675
    %1677 = vrot.lane.b32.xlu0 %v863, 88
    %v1678 = vpop.permute.xlu0 %1677
    %1679 = vrot.lane.b32.xlu0 %v864, 88
    %v1680 = vpop.permute.xlu0 %1679
    %1681 = vrot.lane.b32.xlu0 %v865, 88
    %v1682 = vpop.permute.xlu0 %1681
    %1683 = vrot.lane.b32.xlu0 %v866, 88
    %v1684 = vpop.permute.xlu0 %1683
    %1685 = vrot.lane.b32.xlu0 %v867, 88
    %v1686 = vpop.permute.xlu0 %1685
    %1687 = vrot.lane.b32.xlu0 %v868, 88
    %v1688 = vpop.permute.xlu0 %1687
    %1689 = vrot.lane.b32.xlu0 %v869, 88
    %v1690 = vpop.permute.xlu0 %1689
    %1691 = vrot.lane.b32.xlu0 %v870, 88
    %v1692 = vpop.permute.xlu0 %1691
    %1701 = vrot.lane.b32.xlu0 %v1572, 64
    %v1702 = vpop.permute.xlu0 %1701
    %v1705 = vsel %vm909, %v1676, 0
    %1707 = vmatprep.subr.mxu0 0.0
    %1708 = vmatpush1.msra.mxu0 %v1678
    %1709 = vmatprep.subr.mxu0 0.0
    %1710 = vmatpush1.msra.mxu0 %v1680
    %1711 = vmatprep.subr.mxu0 0.0
    %1712 = vmatpush1.msra.mxu0 %v1682
    %1713 = vmatprep.subr.mxu0 0.0
    %1714 = vmatpush1.msra.mxu0 %v1684
    %1715 = vmatprep.subr.mxu0 0.0
    %1716 = vmatpush1.msra.mxu0 %v1686
    %1717 = vmatprep.subr.mxu0 0.0
    %1718 = vmatpush1.msra.mxu0 %v1688
    %1719 = vmatprep.subr.mxu0 0.0
    %1720 = vmatpush1.msra.mxu0 %v1690
    %1721 = vmatprep.subr.mxu0 0.0
    %1722 = vmatpush1.msra.mxu0 %v1692
    %1723 = vmatprep.subr.mxu0 0.0
    %1724 = vmatpush1.msra.mxu0 0.0
    %1725 = vmatprep.subr.mxu0 0.0
    %1726 = vmatpush1.msra.mxu0 0.0
    %1727 = vmatprep.subr.mxu0 0.0
    %1728 = vmatpush1.msra.mxu0 0.0
    %1729 = vmatprep.subr.mxu0 0.0
    %1730 = vmatpush1.msra.mxu0 0.0
    %1731 = vmatprep.subr.mxu0 0.0
    %1732 = vmatpush1.msra.mxu0 0.0
    %1733 = vmatprep.subr.mxu0 0.0
    %1734 = vmatpush1.msra.mxu0 0.0
    %1735 = vmatprep.subr.mxu0 0.0
    %1736 = vmatpush1.msra.mxu0 0.0
    %1737 = vmatprep.subr.mxu0 0.0
    %1738 = vmatpush1.msra.mxu0 0.0
    %1739 = vmatprep.subr.mxu0 0.0
    %1740 = vmatpush1.msra.mxu0 0.0
    %1741 = vmatprep.subr.mxu0 0.0
    %1742 = vmatpush1.msra.mxu0 0.0
    %1743 = vmatprep.subr.mxu0 0.0
    %1744 = vmatpush1.msra.mxu0 0.0
    %1745 = vmatprep.subr.mxu0 0.0
    %1746 = vmatpush1.msra.mxu0 0.0
    %1747 = vmatprep.subr.mxu0 0.0
    %1748 = vmatpush1.msra.mxu0 0.0
    %1749 = vmatprep.subr.mxu0 0.0
    %1750 = vmatpush1.msra.mxu0 0.0
    %1751 = vmatprep.subr.mxu0 0.0
    %1752 = vmatpush1.msra.mxu0 0.0
    %1753 = vmatprep.subr.mxu0 0.0
    %1754 = vmatpush1.msra.mxu0 0.0
    %1755 = vmatprep.subr.mxu0 0.0
    %1756 = vmatpush1.msra.mxu0 0.0
    %1757 = vmatprep.subr.mxu0 0.0
    %1758 = vmatpush1.msra.mxu0 0.0
    %1759 = vmatprep.subr.mxu0 0.0
    %1760 = vmatpush1.msra.mxu0 0.0
    %1761 = vmatprep.subr.mxu0 0.0
    %1762 = vmatpush1.msra.mxu0 0.0
    %1763 = vmatprep.subr.mxu0 0.0
    %1764 = vmatpush1.msra.mxu0 0.0
    %1765 = vmatprep.subr.mxu0 0.0
    %1766 = vmatpush1.msra.mxu0 0.0
    %1767 = vmatprep.subr.mxu0 0.0
    %1768 = vmatpush1.msra.mxu0 0.0
    %1769 = vmatprep.subr.mxu0 0.0
    %1770 = vmatpush1.msra.mxu0 0.0
    %1771 = vmatprep.mubr.f32.mxu0 0.0
    %1772 = vmatmul.mubr.f32.gmra.mrb[0].mxu0 %v1705
    %v1773 = vpop.f32.mrb[0].mxu0
    %v1774 = vadd.f32 %v1702, %v1773
    %v1775 = vpop.f32.mrb[0].mxu0
    %1776 = vdwg.mxu0
    %v1777 = vadd.f32 %v1555, %v1774
    %v1778 = vld [vmem:[%s1 + $0x68] sm:$0x4]
    %v1779 = vunpack.c.l.bf16 %v1778
    %v1781 = vrot.slane %v1779, 4
    %1782 = vrot.lane.b32.xlu0 %v1781, 32
    %v1783 = vpop.permute.xlu0 %1782
    %v1784 = vsel %vm382, %v1783, 0
    %v1787 = vsel %vm200, %v1777, 0
    %1789 = vmatprep.subr.mxu0 0.0
    %1790 = vmatpush1.msra.mxu0 %v1787
    %1791 = vmatprep.subr.mxu0 0.0
    %1792 = vmatpush1.msra.mxu0 0.0
    %1793 = vmatprep.subr.mxu0 0.0
    %1794 = vmatpush1.msra.mxu0 0.0
    %1795 = vmatprep.subr.mxu0 0.0
    %1796 = vmatpush1.msra.mxu0 0.0
    %1797 = vmatprep.subr.mxu0 0.0
    %1798 = vmatpush1.msra.mxu0 0.0
    %1799 = vmatprep.subr.mxu0 0.0
    %1800 = vmatpush1.msra.mxu0 0.0
    %1801 = vmatprep.subr.mxu0 0.0
    %1802 = vmatpush1.msra.mxu0 0.0
    %1803 = vmatprep.subr.mxu0 0.0
    %1804 = vmatpush1.msra.mxu0 0.0
    %1805 = vmatprep.subr.mxu0 0.0
    %1806 = vmatpush1.msra.mxu0 0.0
    %1807 = vmatprep.subr.mxu0 0.0
    %1808 = vmatpush1.msra.mxu0 0.0
    %1809 = vmatprep.subr.mxu0 0.0
    %1810 = vmatpush1.msra.mxu0 0.0
    %1811 = vmatprep.subr.mxu0 0.0
    %1812 = vmatpush1.msra.mxu0 0.0
    %1813 = vmatprep.subr.mxu0 0.0
    %1814 = vmatpush1.msra.mxu0 0.0
    %1815 = vmatprep.subr.mxu0 0.0
    %1816 = vmatpush1.msra.mxu0 0.0
    %1817 = vmatprep.subr.mxu0 0.0
    %1818 = vmatpush1.msra.mxu0 0.0
    %1819 = vmatprep.subr.mxu0 0.0
    %1820 = vmatpush1.msra.mxu0 0.0
    %1821 = vmatprep.subr.mxu0 0.0
    %1822 = vmatpush1.msra.mxu0 0.0
    %1823 = vmatprep.subr.mxu0 0.0
    %1824 = vmatpush1.msra.mxu0 0.0
    %1825 = vmatprep.subr.mxu0 0.0
    %1826 = vmatpush1.msra.mxu0 0.0
    %1827 = vmatprep.subr.mxu0 0.0
    %1828 = vmatpush1.msra.mxu0 0.0
    %1829 = vmatprep.subr.mxu0 0.0
    %1830 = vmatpush1.msra.mxu0 0.0
    %1831 = vmatprep.subr.mxu0 0.0
    %1832 = vmatpush1.msra.mxu0 0.0
    %1833 = vmatprep.subr.mxu0 0.0
    %1834 = vmatpush1.msra.mxu0 0.0
    %1835 = vmatprep.subr.mxu0 0.0
    %1836 = vmatpush1.msra.mxu0 0.0
    %1837 = vmatprep.subr.mxu0 0.0
    %1838 = vmatpush1.msra.mxu0 0.0
    %1839 = vmatprep.subr.mxu0 0.0
    %1840 = vmatpush1.msra.mxu0 0.0
    %1841 = vmatprep.subr.mxu0 0.0
    %1842 = vmatpush1.msra.mxu0 0.0
    %1843 = vmatprep.subr.mxu0 0.0
    %1844 = vmatpush1.msra.mxu0 0.0
    %1845 = vmatprep.subr.mxu0 0.0
    %1846 = vmatpush1.msra.mxu0 0.0
    %1847 = vmatprep.subr.mxu0 0.0
    %1848 = vmatpush1.msra.mxu0 0.0
    %1849 = vmatprep.subr.mxu0 0.0
    %1850 = vmatpush1.msra.mxu0 0.0
    %1851 = vmatprep.subr.mxu0 0.0
    %1852 = vmatpush1.msra.mxu0 0.0
    %1853 = vmatprep.mubr.f32.mxu0 0.0
    %1854 = vmatmul.mubr.f32.gmra.mrb[0].mxu0 %v1784
    %v1855 = vpop.f32.mrb[0].mxu0
    %v1856 = vadd.f32 0.0, %v1855
    %v1857 = vpop.f32.mrb[0].mxu0
    %1858 = vdwg.mxu0
    %1859 = vrot.lane.b32.xlu0 %v1467, 96
    %v1860 = vpop.permute.xlu0 %1859
    %1861 = vrot.lane.b32.xlu0 %v1469, 96
    %v1862 = vpop.permute.xlu0 %1861
    %1863 = vrot.lane.b32.xlu0 %v1471, 96
    %v1864 = vpop.permute.xlu0 %1863
    %1865 = vrot.lane.b32.xlu0 %v1473, 96
    %v1866 = vpop.permute.xlu0 %1865
    %1871 = vrot.lane.b32.xlu0 %v1572, 32
    %v1872 = vpop.permute.xlu0 %1871
    %v1875 = vsel %vm119, %v1856, 0
    %1877 = vmatprep.subr.mxu0 0.0
    %1878 = vmatpush1.msra.mxu0 %v1860
    %1879 = vmatprep.subr.mxu0 0.0
    %1880 = vmatpush1.msra.mxu0 %v1862
    %1881 = vmatprep.subr.mxu0 0.0
    %1882 = vmatpush1.msra.mxu0 %v1864
    %1883 = vmatprep.subr.mxu0 0.0
    %1884 = vmatpush1.msra.mxu0 %v1866
    %1885 = vmatprep.subr.mxu0 0.0
    %1886 = vmatpush1.msra.mxu0 0.0
    %1887 = vmatprep.subr.mxu0 0.0
    %1888 = vmatpush1.msra.mxu0 0.0
    %1889 = vmatprep.subr.mxu0 0.0
    %1890 = vmatpush1.msra.mxu0 0.0
    %1891 = vmatprep.subr.mxu0 0.0
    %1892 = vmatpush1.msra.mxu0 0.0
    %1893 = vmatprep.subr.mxu0 0.0
    %1894 = vmatpush1.msra.mxu0 0.0
    %1895 = vmatprep.subr.mxu0 0.0
    %1896 = vmatpush1.msra.mxu0 0.0
    %1897 = vmatprep.subr.mxu0 0.0
    %1898 = vmatpush1.msra.mxu0 0.0
    %1899 = vmatprep.subr.mxu0 0.0
    %1900 = vmatpush1.msra.mxu0 0.0
    %1901 = vmatprep.subr.mxu0 0.0
    %1902 = vmatpush1.msra.mxu0 0.0
    %1903 = vmatprep.subr.mxu0 0.0
    %1904 = vmatpush1.msra.mxu0 0.0
    %1905 = vmatprep.subr.mxu0 0.0
    %1906 = vmatpush1.msra.mxu0 0.0
    %1907 = vmatprep.subr.mxu0 0.0
    %1908 = vmatpush1.msra.mxu0 0.0
    %1909 = vmatprep.subr.mxu0 0.0
    %1910 = vmatpush1.msra.mxu0 0.0
    %1911 = vmatprep.subr.mxu0 0.0
    %1912 = vmatpush1.msra.mxu0 0.0
    %1913 = vmatprep.subr.mxu0 0.0
    %1914 = vmatpush1.msra.mxu0 0.0
    %1915 = vmatprep.subr.mxu0 0.0
    %1916 = vmatpush1.msra.mxu0 0.0
    %1917 = vmatprep.subr.mxu0 0.0
    %1918 = vmatpush1.msra.mxu0 0.0
    %1919 = vmatprep.subr.mxu0 0.0
    %1920 = vmatpush1.msra.mxu0 0.0
    %1921 = vmatprep.subr.mxu0 0.0
    %1922 = vmatpush1.msra.mxu0 0.0
    %1923 = vmatprep.subr.mxu0 0.0
    %1924 = vmatpush1.msra.mxu0 0.0
    %1925 = vmatprep.subr.mxu0 0.0
    %1926 = vmatpush1.msra.mxu0 0.0
    %1927 = vmatprep.subr.mxu0 0.0
    %1928 = vmatpush1.msra.mxu0 0.0
    %1929 = vmatprep.subr.mxu0 0.0
    %1930 = vmatpush1.msra.mxu0 0.0
    %1931 = vmatprep.subr.mxu0 0.0
    %1932 = vmatpush1.msra.mxu0 0.0
    %1933 = vmatprep.subr.mxu0 0.0
    %1934 = vmatpush1.msra.mxu0 0.0
    %1935 = vmatprep.subr.mxu0 0.0
    %1936 = vmatpush1.msra.mxu0 0.0
    %1937 = vmatprep.subr.mxu0 0.0
    %1938 = vmatpush1.msra.mxu0 0.0
    %1939 = vmatprep.subr.mxu0 0.0
    %1940 = vmatpush1.msra.mxu0 0.0
    %1941 = vmatprep.mubr.f32.mxu0 0.0
    %1942 = vmatmul.mubr.f32.gmra.mrb[0].mxu0 %v1875
    %v1943 = vpop.f32.mrb[0].mxu0
    %v1944 = vadd.f32 %v1872, %v1943
    %v1945 = vpop.f32.mrb[0].mxu0
    %1946 = vdwg.mxu0
    %v1947 = vld [vmem:[%s0] sm:$0x3]
    %v1948 = vld [vmem:[%s1 + $0x58] sm:$0xc]
    %v1949 = vld [vmem:[%s1 + $0x5c] sm:$0xf]
    %v1950 = vld [vmem:[%s1 + $0x60] sm:$0x3]
    %v1951 = vunpack.c.l.bf16 %v1948
    %v1952 = vunpack.c.l.bf16 %v1949
    %v1953 = vunpack.c.l.bf16 %v1950
    %v1957 = vrot.slane %v1951, 4
    %v1958 = vrot.slane %v1952, 4
    %v1959 = vsel %vm24, %v1957, %v1958
    %v1960 = vrot.slane %v1953, 4
    %v1961 = vsel %vm24, %v1958, %v1960
    %1962 = vrot.lane.b32.xlu0 %v1959, 32
    %v1963 = vpop.permute.xlu0 %1962
    %1964 = vrot.lane.b32.xlu0 %v1961, 32
    %v1965 = vpop.permute.xlu0 %1964
    %1969 = vrot.lane.b32.xlu0 %v92, 32
    %v1970 = vpop.permute.xlu0 %1969
    %vm1972 = vcmask 130048
    %v1974 = vsel %vm1972, %v1947, 0
    %1976 = vmatprep.subr.mxu0 0.0
    %1977 = vmatpush1.msra.mxu0 %v1963
    %1978 = vmatprep.subr.mxu0 0.0
    %1979 = vmatpush1.msra.mxu0 %v1965
    %1980 = vmatprep.subr.mxu0 0.0
    %1981 = vmatpush1.msra.mxu0 0.0
    %1982 = vmatprep.subr.mxu0 0.0
    %1983 = vmatpush1.msra.mxu0 0.0
    %1984 = vmatprep.subr.mxu0 0.0
    %1985 = vmatpush1.msra.mxu0 0.0
    %1986 = vmatprep.subr.mxu0 0.0
    %1987 = vmatpush1.msra.mxu0 0.0
    %1988 = vmatprep.subr.mxu0 0.0
    %1989 = vmatpush1.msra.mxu0 0.0
    %1990 = vmatprep.subr.mxu0 0.0
    %1991 = vmatpush1.msra.mxu0 0.0
    %1992 = vmatprep.subr.mxu0 0.0
    %1993 = vmatpush1.msra.mxu0 0.0
    %1994 = vmatprep.subr.mxu0 0.0
    %1995 = vmatpush1.msra.mxu0 0.0
    %1996 = vmatprep.subr.mxu0 0.0
    %1997 = vmatpush1.msra.mxu0 0.0
    %1998 = vmatprep.subr.mxu0 0.0
    %1999 = vmatpush1.msra.mxu0 0.0
    %2000 = vmatprep.subr.mxu0 0.0
    %2001 = vmatpush1.msra.mxu0 0.0
    %2002 = vmatprep.subr.mxu0 0.0
    %2003 = vmatpush1.msra.mxu0 0.0
    %2004 = vmatprep.subr.mxu0 0.0
    %2005 = vmatpush1.msra.mxu0 0.0
    %2006 = vmatprep.subr.mxu0 0.0
    %2007 = vmatpush1.msra.mxu0 0.0
    %2008 = vmatprep.subr.mxu0 0.0
    %2009 = vmatpush1.msra.mxu0 0.0
    %2010 = vmatprep.subr.mxu0 0.0
    %2011 = vmatpush1.msra.mxu0 0.0
    %2012 = vmatprep.subr.mxu0 0.0
    %2013 = vmatpush1.msra.mxu0 0.0
    %2014 = vmatprep.subr.mxu0 0.0
    %2015 = vmatpush1.msra.mxu0 0.0
    %2016 = vmatprep.subr.mxu0 0.0
    %2017 = vmatpush1.msra.mxu0 0.0
    %2018 = vmatprep.subr.mxu0 0.0
    %2019 = vmatpush1.msra.mxu0 0.0
    %2020 = vmatprep.subr.mxu0 0.0
    %2021 = vmatpush1.msra.mxu0 0.0
    %2022 = vmatprep.subr.mxu0 0.0
    %2023 = vmatpush1.msra.mxu0 0.0
    %2024 = vmatprep.subr.mxu0 0.0
    %2025 = vmatpush1.msra.mxu0 0.0
    %2026 = vmatprep.subr.mxu0 0.0
    %2027 = vmatpush1.msra.mxu0 0.0
    %2028 = vmatprep.subr.mxu0 0.0
    %2029 = vmatpush1.msra.mxu0 0.0
    %2030 = vmatprep.subr.mxu0 0.0
    %2031 = vmatpush1.msra.mxu0 0.0
    %2032 = vmatprep.subr.mxu0 0.0
    %2033 = vmatpush1.msra.mxu0 0.0
    %2034 = vmatprep.subr.mxu0 0.0
    %2035 = vmatpush1.msra.mxu0 0.0
    %2036 = vmatprep.subr.mxu0 0.0
    %2037 = vmatpush1.msra.mxu0 0.0
    %2038 = vmatprep.subr.mxu0 0.0
    %2039 = vmatpush1.msra.mxu0 0.0
    %2040 = vmatprep.mubr.f32.mxu0 0.0
    %2041 = vmatmul.mubr.f32.gmra.mrb[0].mxu0 %v1974
    %v2042 = vpop.f32.mrb[0].mxu0
    %v2043 = vadd.f32 %v1970, %v2042
    %v2044 = vpop.f32.mrb[0].mxu0
    %2045 = vdwg.mxu0
    %v2046 = vld [vmem:[%s1 + $0x20] sm:$0xc]
    %v2047 = vld [vmem:[%s1 + $0x24] sm:$0xf]
    %v2048 = vld [vmem:[%s1 + $0x28] sm:$0xf]
    %v2049 = vld [vmem:[%s1 + $0x2c] sm:$0xf]
    %v2050 = vld [vmem:[%s1 + $0x30] sm:$0xf]
    %v2051 = vld [vmem:[%s1 + $0x34] sm:$0xf]
    %v2052 = vld [vmem:[%s1 + $0x38] sm:$0x3]
    %v2053 = vunpack.c.l.bf16 %v2046
    %v2054 = vunpack.c.l.bf16 %v2047
    %v2055 = vunpack.c.l.bf16 %v2048
    %v2056 = vunpack.c.l.bf16 %v2049
    %v2057 = vunpack.c.l.bf16 %v2050
    %v2058 = vunpack.c.l.bf16 %v2051
    %v2059 = vunpack.c.l.bf16 %v2052
    %v2060 = vld [vmem:[%s1 + $0x70] sm:$0x1]
    %v2061 = vunpack.c.l.bf16 %v2060
    %v2062 = vlaneseq
    %v2063 = vshrl.u32 %v2062, 7
    %v2064 = vsub.s32 0, %v2063
    %v2065 = vrot.slane %v2061, %v2064
    %2066 = vrot.lane.b32.xlu0 %v1947, 112
    %v2067 = vpop.permute.xlu0 %2066
    %v2075 = vrot.slane %v2053, 4
    %v2076 = vrot.slane %v2054, 4
    %v2077 = vsel %vm24, %v2075, %v2076
    %v2078 = vrot.slane %v2055, 4
    %v2079 = vsel %vm24, %v2076, %v2078
    %v2080 = vrot.slane %v2056, 4
    %v2081 = vsel %vm24, %v2078, %v2080
    %v2082 = vrot.slane %v2057, 4
    %v2083 = vsel %vm24, %v2080, %v2082
    %v2084 = vrot.slane %v2058, 4
    %v2085 = vsel %vm24, %v2082, %v2084
    %v2086 = vrot.slane %v2059, 4
    %v2087 = vsel %vm24, %v2084, %v2086
    %vm2094 = vcmask 392192
    %v2095 = vsel %vm2094, %v2067, 0
    %2097 = vmatprep.subr.mxu0 0.0
    %2098 = vmatpush1.msra.mxu0 %v2077
    %2099 = vmatprep.subr.mxu0 0.0
    %2100 = vmatpush1.msra.mxu0 %v2079
    %2101 = vmatprep.subr.mxu0 0.0
    %2102 = vmatpush1.msra.mxu0 %v2081
    %2103 = vmatprep.subr.mxu0 0.0
    %2104 = vmatpush1.msra.mxu0 %v2083
    %2105 = vmatprep.subr.mxu0 0.0
    %2106 = vmatpush1.msra.mxu0 %v2085
    %2107 = vmatprep.subr.mxu0 0.0
    %2108 = vmatpush1.msra.mxu0 %v2087
    %2109 = vmatprep.subr.mxu0 0.0
    %2110 = vmatpush1.msra.mxu0 0.0
    %2111 = vmatprep.subr.mxu0 0.0
    %2112 = vmatpush1.msra.mxu0 0.0
    %2113 = vmatprep.subr.mxu0 0.0
    %2114 = vmatpush1.msra.mxu0 0.0
    %2115 = vmatprep.subr.mxu0 0.0
    %2116 = vmatpush1.msra.mxu0 0.0
    %2117 = vmatprep.subr.mxu0 0.0
    %2118 = vmatpush1.msra.mxu0 0.0
    %2119 = vmatprep.subr.mxu0 0.0
    %2120 = vmatpush1.msra.mxu0 0.0
    %2121 = vmatprep.subr.mxu0 0.0
    %2122 = vmatpush1.msra.mxu0 0.0
    %2123 = vmatprep.subr.mxu0 0.0
    %2124 = vmatpush1.msra.mxu0 0.0
    %2125 = vmatprep.subr.mxu0 0.0
    %2126 = vmatpush1.msra.mxu0 0.0
    %2127 = vmatprep.subr.mxu0 0.0
    %2128 = vmatpush1.msra.mxu0 0.0
    %2129 = vmatprep.subr.mxu0 0.0
    %2130 = vmatpush1.msra.mxu0 0.0
    %2131 = vmatprep.subr.mxu0 0.0
    %2132 = vmatpush1.msra.mxu0 0.0
    %2133 = vmatprep.subr.mxu0 0.0
    %2134 = vmatpush1.msra.mxu0 0.0
    %2135 = vmatprep.subr.mxu0 0.0
    %2136 = vmatpush1.msra.mxu0 0.0
    %2137 = vmatprep.subr.mxu0 0.0
    %2138 = vmatpush1.msra.mxu0 0.0
    %2139 = vmatprep.subr.mxu0 0.0
    %2140 = vmatpush1.msra.mxu0 0.0
    %2141 = vmatprep.subr.mxu0 0.0
    %2142 = vmatpush1.msra.mxu0 0.0
    %2143 = vmatprep.subr.mxu0 0.0
    %2144 = vmatpush1.msra.mxu0 0.0
    %2145 = vmatprep.subr.mxu0 0.0
    %2146 = vmatpush1.msra.mxu0 0.0
    %2147 = vmatprep.subr.mxu0 0.0
    %2148 = vmatpush1.msra.mxu0 0.0
    %2149 = vmatprep.subr.mxu0 0.0
    %2150 = vmatpush1.msra.mxu0 0.0
    %2151 = vmatprep.subr.mxu0 0.0
    %2152 = vmatpush1.msra.mxu0 0.0
    %2153 = vmatprep.subr.mxu0 0.0
    %2154 = vmatpush1.msra.mxu0 0.0
    %2155 = vmatprep.subr.mxu0 0.0
    %2156 = vmatpush1.msra.mxu0 0.0
    %2157 = vmatprep.subr.mxu0 0.0
    %2158 = vmatpush1.msra.mxu0 0.0
    %2159 = vmatprep.subr.mxu0 0.0
    %2160 = vmatpush1.msra.mxu0 0.0
    %2161 = vmatprep.mubr.f32.mxu0 0.0
    %2162 = vmatmul.mubr.f32.gmra.mrb[0].mxu0 %v2095
    %v2163 = vpop.f32.mrb[0].mxu0
    %v2164 = vadd.f32 %v2065, %v2163
    %v2165 = vpop.f32.mrb[0].mxu0
    %2166 = vdwg.mxu0
    %v2167 = vmax.f32 %v2164, 0.0
    %vm2168 = vcmask 254976
    %v2169 = vsel %vm2168, %v2167, 0.0
    %2170 = vadd.xlane.f32.xlu0 %v2169
    %v2171 = vpop.xlane.xlu0 %2170
    %v2172 = vmul.f32 %v2171, %v54
    %v2173 = vsub.f32 %v2167, %v2172
    %v2174 = vmul.f32 %v2173, %v2173
    %v2175 = vsel %vm2168, %v2174, 0.0
    %2176 = vadd.xlane.f32.xlu0 %v2175
    %v2177 = vpop.xlane.xlu0 %2176
    %v2178 = vmul.f32 %v2177, %v54
    %v2179 = vadd.f32 %v2178, 1e-05
    %v2180 = vrsqrt.pop %v2179
    %v2181 = vmul.f32 %v2173, %v2180
    %2183 = vrot.lane.b32.xlu0 %v2065, 96
    %v2184 = vpop.permute.xlu0 %2183
    %v2186 = vmul.f32 %v2181, %v2184
    %2187 = vrot.lane.b32.xlu0 %v2065, 64
    %v2188 = vpop.permute.xlu0 %2187
    %v2190 = vadd.f32 %v2186, %v2188
    %2191 = vrot.lane.b32.xlu0 %v1467, 64
    %v2192 = vpop.permute.xlu0 %2191
    %2193 = vrot.lane.b32.xlu0 %v1469, 64
    %v2194 = vpop.permute.xlu0 %2193
    %2195 = vrot.lane.b32.xlu0 %v1471, 64
    %v2196 = vpop.permute.xlu0 %2195
    %2197 = vrot.lane.b32.xlu0 %v1473, 64
    %v2198 = vpop.permute.xlu0 %2197
    %2203 = vrot.lane.b32.xlu0 %v2065, 32
    %v2204 = vpop.permute.xlu0 %2203
    %v2207 = vsel %vm119, %v2190, 0
    %2209 = vmatprep.subr.mxu0 0.0
    %2210 = vmatpush1.msra.mxu0 %v2192
    %2211 = vmatprep.subr.mxu0 0.0
    %2212 = vmatpush1.msra.mxu0 %v2194
    %2213 = vmatprep.subr.mxu0 0.0
    %2214 = vmatpush1.msra.mxu0 %v2196
    %2215 = vmatprep.subr.mxu0 0.0
    %2216 = vmatpush1.msra.mxu0 %v2198
    %2217 = vmatprep.subr.mxu0 0.0
    %2218 = vmatpush1.msra.mxu0 0.0
    %2219 = vmatprep.subr.mxu0 0.0
    %2220 = vmatpush1.msra.mxu0 0.0
    %2221 = vmatprep.subr.mxu0 0.0
    %2222 = vmatpush1.msra.mxu0 0.0
    %2223 = vmatprep.subr.mxu0 0.0
    %2224 = vmatpush1.msra.mxu0 0.0
    %2225 = vmatprep.subr.mxu0 0.0
    %2226 = vmatpush1.msra.mxu0 0.0
    %2227 = vmatprep.subr.mxu0 0.0
    %2228 = vmatpush1.msra.mxu0 0.0
    %2229 = vmatprep.subr.mxu0 0.0
    %2230 = vmatpush1.msra.mxu0 0.0
    %2231 = vmatprep.subr.mxu0 0.0
    %2232 = vmatpush1.msra.mxu0 0.0
    %2233 = vmatprep.subr.mxu0 0.0
    %2234 = vmatpush1.msra.mxu0 0.0
    %2235 = vmatprep.subr.mxu0 0.0
    %2236 = vmatpush1.msra.mxu0 0.0
    %2237 = vmatprep.subr.mxu0 0.0
    %2238 = vmatpush1.msra.mxu0 0.0
    %2239 = vmatprep.subr.mxu0 0.0
    %2240 = vmatpush1.msra.mxu0 0.0
    %2241 = vmatprep.subr.mxu0 0.0
    %2242 = vmatpush1.msra.mxu0 0.0
    %2243 = vmatprep.subr.mxu0 0.0
    %2244 = vmatpush1.msra.mxu0 0.0
    %2245 = vmatprep.subr.mxu0 0.0
    %2246 = vmatpush1.msra.mxu0 0.0
    %2247 = vmatprep.subr.mxu0 0.0
    %2248 = vmatpush1.msra.mxu0 0.0
    %2249 = vmatprep.subr.mxu0 0.0
    %2250 = vmatpush1.msra.mxu0 0.0
    %2251 = vmatprep.subr.mxu0 0.0
    %2252 = vmatpush1.msra.mxu0 0.0
    %2253 = vmatprep.subr.mxu0 0.0
    %2254 = vmatpush1.msra.mxu0 0.0
    %2255 = vmatprep.subr.mxu0 0.0
    %2256 = vmatpush1.msra.mxu0 0.0
    %2257 = vmatprep.subr.mxu0 0.0
    %2258 = vmatpush1.msra.mxu0 0.0
    %2259 = vmatprep.subr.mxu0 0.0
    %2260 = vmatpush1.msra.mxu0 0.0
    %2261 = vmatprep.subr.mxu0 0.0
    %2262 = vmatpush1.msra.mxu0 0.0
    %2263 = vmatprep.subr.mxu0 0.0
    %2264 = vmatpush1.msra.mxu0 0.0
    %2265 = vmatprep.subr.mxu0 0.0
    %2266 = vmatpush1.msra.mxu0 0.0
    %2267 = vmatprep.subr.mxu0 0.0
    %2268 = vmatpush1.msra.mxu0 0.0
    %2269 = vmatprep.subr.mxu0 0.0
    %2270 = vmatpush1.msra.mxu0 0.0
    %2271 = vmatprep.subr.mxu0 0.0
    %2272 = vmatpush1.msra.mxu0 0.0
    %2273 = vmatprep.mubr.f32.mxu0 0.0
    %2274 = vmatmul.mubr.f32.gmra.mrb[0].mxu0 %v2207
    %v2275 = vpop.f32.mrb[0].mxu0
    %v2276 = vadd.f32 %v2204, %v2275
    %v2277 = vpop.f32.mrb[0].mxu0
    %2278 = vdwg.mxu0
    %2279 = vrot.lane.b32.xlu0 %v1947, 64
    %v2280 = vpop.permute.xlu0 %2279
    %2283 = vrot.lane.b32.xlu0 %v2276, 4
    %v2284 = vpop.permute.xlu0 %2283
    %2287 = vrot.lane.b32.xlu0 %v1944, 36
    %v2288 = vpop.permute.xlu0 %2287
    %vm2290 = vcmask 31744
    %v2291 = vsel %vm2290, %v2280, %v2284
    %vm2292 = vcmask 293888
    %v2293 = vsel %vm2292, %v2291, %v2288
    %v2294 = vld [vmem:[%s1] sm:$0xf]
    %v2295 = vld [vmem:[%s1 + $0x4] sm:$0xf]
    %v2296 = vld [vmem:[%s1 + $0x8] sm:$0xf]
    %v2297 = vld [vmem:[%s1 + $0xc] sm:$0xf]
    %v2298 = vld [vmem:[%s1 + $0x10] sm:$0xf]
    %v2299 = vld [vmem:[%s1 + $0x14] sm:$0xf]
    %v2300 = vld [vmem:[%s1 + $0x18] sm:$0xf]
    %v2301 = vld [vmem:[%s1 + $0x1c] sm:$0xf]
    %v2302 = vld [vmem:[%s1 + $0x20] sm:$0x3]
    %v2303 = vunpack.c.l.bf16 %v2294
    %v2304 = vunpack.c.l.bf16 %v2295
    %v2305 = vunpack.c.l.bf16 %v2296
    %v2306 = vunpack.c.l.bf16 %v2297
    %v2307 = vunpack.c.l.bf16 %v2298
    %v2308 = vunpack.c.l.bf16 %v2299
    %v2309 = vunpack.c.l.bf16 %v2300
    %v2310 = vunpack.c.l.bf16 %v2301
    %v2311 = vunpack.c.l.bf16 %v2302
    %v2312 = vlaneseq
    %v2313 = vshrl.u32 %v2312, 7
    %v2314 = vsub.s32 4, %v2313
    %v2315 = vrot.slane %v1779, %v2314
    %2317 = vrot.lane.b32.xlu0 %v2315, 24
    %v2318 = vpop.permute.xlu0 %2317
    %vm2320 = vcmask 556032
    %v2322 = vsel %vm2320, %v2293, 0
    %v2325 = vsel %vm24, %v2311, 0
    %2327 = vmatprep.subr.mxu0 0.0
    %2328 = vmatpush1.msra.mxu0 %v2303
    %2329 = vmatprep.subr.mxu0 0.0
    %2330 = vmatpush1.msra.mxu0 %v2304
    %2331 = vmatprep.subr.mxu0 0.0
    %2332 = vmatpush1.msra.mxu0 %v2305
    %2333 = vmatprep.subr.mxu0 0.0
    %2334 = vmatpush1.msra.mxu0 %v2306
    %2335 = vmatprep.subr.mxu0 0.0
    %2336 = vmatpush1.msra.mxu0 %v2307
    %2337 = vmatprep.subr.mxu0 0.0
    %2338 = vmatpush1.msra.mxu0 %v2308
    %2339 = vmatprep.subr.mxu0 0.0
    %2340 = vmatpush1.msra.mxu0 %v2309
    %2341 = vmatprep.subr.mxu0 0.0
    %2342 = vmatpush1.msra.mxu0 %v2310
    %2343 = vmatprep.subr.mxu0 0.0
    %2344 = vmatpush1.msra.mxu0 %v2325
    %2345 = vmatprep.subr.mxu0 0.0
    %2346 = vmatpush1.msra.mxu0 0.0
    %2347 = vmatprep.subr.mxu0 0.0
    %2348 = vmatpush1.msra.mxu0 0.0
    %2349 = vmatprep.subr.mxu0 0.0
    %2350 = vmatpush1.msra.mxu0 0.0
    %2351 = vmatprep.subr.mxu0 0.0
    %2352 = vmatpush1.msra.mxu0 0.0
    %2353 = vmatprep.subr.mxu0 0.0
    %2354 = vmatpush1.msra.mxu0 0.0
    %2355 = vmatprep.subr.mxu0 0.0
    %2356 = vmatpush1.msra.mxu0 0.0
    %2357 = vmatprep.subr.mxu0 0.0
    %2358 = vmatpush1.msra.mxu0 0.0
    %2359 = vmatprep.subr.mxu0 0.0
    %2360 = vmatpush1.msra.mxu0 0.0
    %2361 = vmatprep.subr.mxu0 0.0
    %2362 = vmatpush1.msra.mxu0 0.0
    %2363 = vmatprep.subr.mxu0 0.0
    %2364 = vmatpush1.msra.mxu0 0.0
    %2365 = vmatprep.subr.mxu0 0.0
    %2366 = vmatpush1.msra.mxu0 0.0
    %2367 = vmatprep.subr.mxu0 0.0
    %2368 = vmatpush1.msra.mxu0 0.0
    %2369 = vmatprep.subr.mxu0 0.0
    %2370 = vmatpush1.msra.mxu0 0.0
    %2371 = vmatprep.subr.mxu0 0.0
    %2372 = vmatpush1.msra.mxu0 0.0
    %2373 = vmatprep.subr.mxu0 0.0
    %2374 = vmatpush1.msra.mxu0 0.0
    %2375 = vmatprep.subr.mxu0 0.0
    %2376 = vmatpush1.msra.mxu0 0.0
    %2377 = vmatprep.subr.mxu0 0.0
    %2378 = vmatpush1.msra.mxu0 0.0
    %2379 = vmatprep.subr.mxu0 0.0
    %2380 = vmatpush1.msra.mxu0 0.0
    %2381 = vmatprep.subr.mxu0 0.0
    %2382 = vmatpush1.msra.mxu0 0.0
    %2383 = vmatprep.subr.mxu0 0.0
    %2384 = vmatpush1.msra.mxu0 0.0
    %2385 = vmatprep.subr.mxu0 0.0
    %2386 = vmatpush1.msra.mxu0 0.0
    %2387 = vmatprep.subr.mxu0 0.0
    %2388 = vmatpush1.msra.mxu0 0.0
    %2389 = vmatprep.subr.mxu0 0.0
    %2390 = vmatpush1.msra.mxu0 0.0
    %2391 = vmatprep.mubr.f32.mxu0 0.0
    %2392 = vmatmul.mubr.f32.gmra.mrb[0].mxu0 %v2322
    %v2393 = vpop.f32.mrb[0].mxu0
    %v2394 = vadd.f32 %v2318, %v2393
    %v2395 = vpop.f32.mrb[0].mxu0
    %2396 = vdwg.mxu0
    %v2397 = vmax.f32 %v2394, 0.0
    %v2398 = vld [vmem:[%s1] sm:$0x3]
    %v2399 = vunpack.c.l.bf16 %v2398
    %2401 = vrot.lane.b32.xlu0 %v2399, 8
    %v2402 = vpop.permute.xlu0 %2401
    %2403 = vrot.lane.b32.xlu0 %v2315, 16
    %v2404 = vpop.permute.xlu0 %2403
    %v2407 = vsel %vm2290, %v2397, 0
    %v2409 = vsel %vm24, %v2402, 0
    %2411 = vmatprep.subr.mxu0 0.0
    %2412 = vmatpush1.msra.mxu0 %v2409
    %2413 = vmatprep.subr.mxu0 0.0
    %2414 = vmatpush1.msra.mxu0 0.0
    %2415 = vmatprep.subr.mxu0 0.0
    %2416 = vmatpush1.msra.mxu0 0.0
    %2417 = vmatprep.subr.mxu0 0.0
    %2418 = vmatpush1.msra.mxu0 0.0
    %2419 = vmatprep.subr.mxu0 0.0
    %2420 = vmatpush1.msra.mxu0 0.0
    %2421 = vmatprep.subr.mxu0 0.0
    %2422 = vmatpush1.msra.mxu0 0.0
    %2423 = vmatprep.subr.mxu0 0.0
    %2424 = vmatpush1.msra.mxu0 0.0
    %2425 = vmatprep.subr.mxu0 0.0
    %2426 = vmatpush1.msra.mxu0 0.0
    %2427 = vmatprep.subr.mxu0 0.0
    %2428 = vmatpush1.msra.mxu0 0.0
    %2429 = vmatprep.subr.mxu0 0.0
    %2430 = vmatpush1.msra.mxu0 0.0
    %2431 = vmatprep.subr.mxu0 0.0
    %2432 = vmatpush1.msra.mxu0 0.0
    %2433 = vmatprep.subr.mxu0 0.0
    %2434 = vmatpush1.msra.mxu0 0.0
    %2435 = vmatprep.subr.mxu0 0.0
    %2436 = vmatpush1.msra.mxu0 0.0
    %2437 = vmatprep.subr.mxu0 0.0
    %2438 = vmatpush1.msra.mxu0 0.0
    %2439 = vmatprep.subr.mxu0 0.0
    %2440 = vmatpush1.msra.mxu0 0.0
    %2441 = vmatprep.subr.mxu0 0.0
    %2442 = vmatpush1.msra.mxu0 0.0
    %2443 = vmatprep.subr.mxu0 0.0
    %2444 = vmatpush1.msra.mxu0 0.0
    %2445 = vmatprep.subr.mxu0 0.0
    %2446 = vmatpush1.msra.mxu0 0.0
    %2447 = vmatprep.subr.mxu0 0.0
    %2448 = vmatpush1.msra.mxu0 0.0
    %2449 = vmatprep.subr.mxu0 0.0
    %2450 = vmatpush1.msra.mxu0 0.0
    %2451 = vmatprep.subr.mxu0 0.0
    %2452 = vmatpush1.msra.mxu0 0.0
    %2453 = vmatprep.subr.mxu0 0.0
    %2454 = vmatpush1.msra.mxu0 0.0
    %2455 = vmatprep.subr.mxu0 0.0
    %2456 = vmatpush1.msra.mxu0 0.0
    %2457 = vmatprep.subr.mxu0 0.0
    %2458 = vmatpush1.msra.mxu0 0.0
    %2459 = vmatprep.subr.mxu0 0.0
    %2460 = vmatpush1.msra.mxu0 0.0
    %2461 = vmatprep.subr.mxu0 0.0
    %2462 = vmatpush1.msra.mxu0 0.0
    %2463 = vmatprep.subr.mxu0 0.0
    %2464 = vmatpush1.msra.mxu0 0.0
    %2465 = vmatprep.subr.mxu0 0.0
    %2466 = vmatpush1.msra.mxu0 0.0
    %2467 = vmatprep.subr.mxu0 0.0
    %2468 = vmatpush1.msra.mxu0 0.0
    %2469 = vmatprep.subr.mxu0 0.0
    %2470 = vmatpush1.msra.mxu0 0.0
    %2471 = vmatprep.subr.mxu0 0.0
    %2472 = vmatpush1.msra.mxu0 0.0
    %2473 = vmatprep.subr.mxu0 0.0
    %2474 = vmatpush1.msra.mxu0 0.0
    %2475 = vmatprep.mubr.f32.mxu0 0.0
    %2476 = vmatmul.mubr.f32.gmra.mrb[0].mxu0 %v2407
    %v2477 = vpop.f32.mrb[0].mxu0
    %v2478 = vadd.f32 %v2404, %v2477
    %v2479 = vpop.f32.mrb[0].mxu0
    %2480 = vdwg.mxu0
    %vm2481 = vcmask 25600
    %v2482 = vsel %vm2481, %v2478, -inf
    %2483 = vmax.xlane.f32.xlu0 %v2482
    %v2484 = vpop.xlane.xlu0 %2483
    %v2485 = vsub.f32 %v2478, %v2484
    %v2486 = vmul.f32 %v2485, 1.442695
    %v2487 = vpow.pop %v2486
    %v2488 = vsel %vm2481, %v2487, 0.0
    %2489 = vadd.xlane.f32.xlu0 %v2488
    %v2490 = vpop.xlane.xlu0 %2489
    %v2491 = vrcp.pop %v2490
    %v2492 = vmul.f32 %v2487, %v2491
    %v2493 = vld [vmem:[%s1 + $0x68] sm:$0xc]
    %v2494 = vunpack.c.l.bf16 %v2493
    %v2496 = vrot.slane %v2494, 4
    %2497 = vrot.lane.b32.xlu0 %v2496, 64
    %v2498 = vpop.permute.xlu0 %2497
    %v2500 = vsel %vm2290, %v2492, 0
    %v2502 = vsel %vm24, %v2498, 0
    %2504 = vmatprep.subr.mxu0 0.0
    %2505 = vmatpush1.msra.mxu0 %v2502
    %2506 = vmatprep.subr.mxu0 0.0
    %2507 = vmatpush1.msra.mxu0 0.0
    %2508 = vmatprep.subr.mxu0 0.0
    %2509 = vmatpush1.msra.mxu0 0.0
    %2510 = vmatprep.subr.mxu0 0.0
    %2511 = vmatpush1.msra.mxu0 0.0
    %2512 = vmatprep.subr.mxu0 0.0
    %2513 = vmatpush1.msra.mxu0 0.0
    %2514 = vmatprep.subr.mxu0 0.0
    %2515 = vmatpush1.msra.mxu0 0.0
    %2516 = vmatprep.subr.mxu0 0.0
    %2517 = vmatpush1.msra.mxu0 0.0
    %2518 = vmatprep.subr.mxu0 0.0
    %2519 = vmatpush1.msra.mxu0 0.0
    %2520 = vmatprep.subr.mxu0 0.0
    %2521 = vmatpush1.msra.mxu0 0.0
    %2522 = vmatprep.subr.mxu0 0.0
    %2523 = vmatpush1.msra.mxu0 0.0
    %2524 = vmatprep.subr.mxu0 0.0
    %2525 = vmatpush1.msra.mxu0 0.0
    %2526 = vmatprep.subr.mxu0 0.0
    %2527 = vmatpush1.msra.mxu0 0.0
    %2528 = vmatprep.subr.mxu0 0.0
    %2529 = vmatpush1.msra.mxu0 0.0
    %2530 = vmatprep.subr.mxu0 0.0
    %2531 = vmatpush1.msra.mxu0 0.0
    %2532 = vmatprep.subr.mxu0 0.0
    %2533 = vmatpush1.msra.mxu0 0.0
    %2534 = vmatprep.subr.mxu0 0.0
    %2535 = vmatpush1.msra.mxu0 0.0
    %2536 = vmatprep.subr.mxu0 0.0
    %2537 = vmatpush1.msra.mxu0 0.0
    %2538 = vmatprep.subr.mxu0 0.0
    %2539 = vmatpush1.msra.mxu0 0.0
    %2540 = vmatprep.subr.mxu0 0.0
    %2541 = vmatpush1.msra.mxu0 0.0
    %2542 = vmatprep.subr.mxu0 0.0
    %2543 = vmatpush1.msra.mxu0 0.0
    %2544 = vmatprep.subr.mxu0 0.0
    %2545 = vmatpush1.msra.mxu0 0.0
    %2546 = vmatprep.subr.mxu0 0.0
    %2547 = vmatpush1.msra.mxu0 0.0
    %2548 = vmatprep.subr.mxu0 0.0
    %2549 = vmatpush1.msra.mxu0 0.0
    %2550 = vmatprep.subr.mxu0 0.0
    %2551 = vmatpush1.msra.mxu0 0.0
    %2552 = vmatprep.subr.mxu0 0.0
    %2553 = vmatpush1.msra.mxu0 0.0
    %2554 = vmatprep.subr.mxu0 0.0
    %2555 = vmatpush1.msra.mxu0 0.0
    %2556 = vmatprep.subr.mxu0 0.0
    %2557 = vmatpush1.msra.mxu0 0.0
    %2558 = vmatprep.subr.mxu0 0.0
    %2559 = vmatpush1.msra.mxu0 0.0
    %2560 = vmatprep.subr.mxu0 0.0
    %2561 = vmatpush1.msra.mxu0 0.0
    %2562 = vmatprep.subr.mxu0 0.0
    %2563 = vmatpush1.msra.mxu0 0.0
    %2564 = vmatprep.subr.mxu0 0.0
    %2565 = vmatpush1.msra.mxu0 0.0
    %2566 = vmatprep.subr.mxu0 0.0
    %2567 = vmatpush1.msra.mxu0 0.0
    %2568 = vmatprep.mubr.f32.mxu0 0.0
    %2569 = vmatmul.mubr.f32.gmra.mrb[0].mxu0 %v2500
    %v2570 = vpop.f32.mrb[0].mxu0
    %v2571 = vadd.f32 0.0, %v2570
    %v2572 = vpop.f32.mrb[0].mxu0
    %2573 = vdwg.mxu0
    %v2574 = vmul.f32 %v2043, %v2571
    %v2575 = vld [vmem:[%s1] sm:$0xf]
    %v2576 = vld [vmem:[%s1 + $0x4] sm:$0xf]
    %v2577 = vld [vmem:[%s1 + $0x8] sm:$0xf]
    %v2578 = vld [vmem:[%s1 + $0xc] sm:$0xf]
    %v2579 = vunpack.c.l.bf16 %v2575
    %v2580 = vunpack.c.l.bf16 %v2576
    %v2581 = vunpack.c.l.bf16 %v2577
    %v2582 = vunpack.c.l.bf16 %v2578
    %2587 = vrot.lane.b32.xlu0 %v2579, 16
    %v2588 = vpop.permute.xlu0 %2587
    %2589 = vrot.lane.b32.xlu0 %v2580, 16
    %v2590 = vpop.permute.xlu0 %2589
    %2591 = vrot.lane.b32.xlu0 %v2581, 16
    %v2592 = vpop.permute.xlu0 %2591
    %2593 = vrot.lane.b32.xlu0 %v2582, 16
    %v2594 = vpop.permute.xlu0 %2593
    %v2600 = vsel %vm119, %v2574, 0
    %2602 = vmatprep.subr.mxu0 0.0
    %2603 = vmatpush1.msra.mxu0 %v2588
    %2604 = vmatprep.subr.mxu0 0.0
    %2605 = vmatpush1.msra.mxu0 %v2590
    %2606 = vmatprep.subr.mxu0 0.0
    %2607 = vmatpush1.msra.mxu0 %v2592
    %2608 = vmatprep.subr.mxu0 0.0
    %2609 = vmatpush1.msra.mxu0 %v2594
    %2610 = vmatprep.subr.mxu0 0.0
    %2611 = vmatpush1.msra.mxu0 0.0
    %2612 = vmatprep.subr.mxu0 0.0
    %2613 = vmatpush1.msra.mxu0 0.0
    %2614 = vmatprep.subr.mxu0 0.0
    %2615 = vmatpush1.msra.mxu0 0.0
    %2616 = vmatprep.subr.mxu0 0.0
    %2617 = vmatpush1.msra.mxu0 0.0
    %2618 = vmatprep.subr.mxu0 0.0
    %2619 = vmatpush1.msra.mxu0 0.0
    %2620 = vmatprep.subr.mxu0 0.0
    %2621 = vmatpush1.msra.mxu0 0.0
    %2622 = vmatprep.subr.mxu0 0.0
    %2623 = vmatpush1.msra.mxu0 0.0
    %2624 = vmatprep.subr.mxu0 0.0
    %2625 = vmatpush1.msra.mxu0 0.0
    %2626 = vmatprep.subr.mxu0 0.0
    %2627 = vmatpush1.msra.mxu0 0.0
    %2628 = vmatprep.subr.mxu0 0.0
    %2629 = vmatpush1.msra.mxu0 0.0
    %2630 = vmatprep.subr.mxu0 0.0
    %2631 = vmatpush1.msra.mxu0 0.0
    %2632 = vmatprep.subr.mxu0 0.0
    %2633 = vmatpush1.msra.mxu0 0.0
    %2634 = vmatprep.subr.mxu0 0.0
    %2635 = vmatpush1.msra.mxu0 0.0
    %2636 = vmatprep.subr.mxu0 0.0
    %2637 = vmatpush1.msra.mxu0 0.0
    %2638 = vmatprep.subr.mxu0 0.0
    %2639 = vmatpush1.msra.mxu0 0.0
    %2640 = vmatprep.subr.mxu0 0.0
    %2641 = vmatpush1.msra.mxu0 0.0
    %2642 = vmatprep.subr.mxu0 0.0
    %2643 = vmatpush1.msra.mxu0 0.0
    %2644 = vmatprep.subr.mxu0 0.0
    %2645 = vmatpush1.msra.mxu0 0.0
    %2646 = vmatprep.subr.mxu0 0.0
    %2647 = vmatpush1.msra.mxu0 0.0
    %2648 = vmatprep.subr.mxu0 0.0
    %2649 = vmatpush1.msra.mxu0 0.0
    %2650 = vmatprep.subr.mxu0 0.0
    %2651 = vmatpush1.msra.mxu0 0.0
    %2652 = vmatprep.subr.mxu0 0.0
    %2653 = vmatpush1.msra.mxu0 0.0
    %2654 = vmatprep.subr.mxu0 0.0
    %2655 = vmatpush1.msra.mxu0 0.0
    %2656 = vmatprep.subr.mxu0 0.0
    %2657 = vmatpush1.msra.mxu0 0.0
    %2658 = vmatprep.subr.mxu0 0.0
    %2659 = vmatpush1.msra.mxu0 0.0
    %2660 = vmatprep.subr.mxu0 0.0
    %2661 = vmatpush1.msra.mxu0 0.0
    %2662 = vmatprep.subr.mxu0 0.0
    %2663 = vmatpush1.msra.mxu0 0.0
    %2664 = vmatprep.subr.mxu0 0.0
    %2665 = vmatpush1.msra.mxu0 0.0
    %2666 = vmatprep.mubr.f32.mxu0 0.0
    %2667 = vmatmul.mubr.f32.gmra.mrb[0].mxu0 %v2600
    %v2668 = vpop.f32.mrb[0].mxu0
    %v2669 = vadd.f32 0.0, %v2668
    %v2670 = vpop.f32.mrb[0].mxu0
    %2671 = vdwg.mxu0
    %vm2672 = vcmask 58368
    %2673 = vst.msk [vmem:[#allocation2] sm:$0x3] %vm2672, %v2669
    // Predicated region
    $region10: #{model_forward.1} parent=1 // pred_check
      _
    $region11: #{model_forward.1} parent=1 // pred_check_branch
      %2675 = sbr.rel (0) target = $region13
    $region12: #{model_forward.1} parent=1 // pred_region
      %s2677 = ssub.s32 32, 32
      %2678 = vsyncadd [#allocation3], %s2677
      %s2680 = sshll.u32 [#allocation2], 4
      %s2681 = int_to_ptr.vmem [resolvable:$true] %s2680
      %2683 = dma.vmem_to_hbm [thread:$0]  %s2681, 32, %s2, [#allocation3]
    $region13: #{model_forward.1} parent=1 // pred_fallthru
      _
    // Predicated region
    $region14: #{model_forward.1} parent=1 // pred_check
      _
    $region15: #{model_forward.1} parent=1 // pred_check_branch
      %2685 = sbr.rel (0) target = $region17
    $region16: #{model_forward.1} parent=1 // pred_region
      %2686 = dma.done [#allocation3], 32
    $region17: #{model_forward.1} parent=1 // pred_fallthru
      _
    %2687 = vsyncpa [#allocation3], 1

</llo_original>
